<compile_context>
chip_gen: v6e
topology: v6e:2x2x1
jax: 0.10.0
libtpu: 0.0.40
codegen_flags: <defaults>
</compile_context>

<pallas_src>
import math

import numpy as np
import jax
import jax.numpy as jnp
from jax.experimental import pallas as pl
from jax.experimental.pallas import tpu as pltpu  # noqa: F401  (TPU backend)

# ----------------------------- model config ---------------------------------
DIM = 8                      # (PyTorch default is 64; kept small per task hint)
DIM_MULTS = (1, 2, 4, 8)
POOL = 2                     # (PyTorch default is 5; kept small / consistent)
CHANNELS = 3
C_IN_PAD = 4                 # pad image channels 3 -> 4 so W*C is lane dense
ACTION_DIM = 11
TIME_EMB_DIM = 8
BN_EPS = 1e-5
NUM_LAYERS = len(DIM_MULTS)


def _conv_out(n):
    # Conv2d(kernel=3, stride=2, padding=1) output size.
    return (n + 1) // 2


# ----------------------------- the fused Pallas kernel -----------------------
def fused_forward_kernel(*refs):
    """Entire ActionGeneratorCNN forward on VMEM-resident values.

    Inputs (in order):
      x0    : (N*H0, W0*Cpad) bf16   image, lane-dense layout
      ta    : (N, TIME_EMB_DIM + ACTION_DIM) f32
      per layer l:
        r_l      (3, N*Ho, N*Hin)        bf16  block-diag row-selection
        b_l      (3*Win*Cin, Wo*Cout)    bf16  kh-stacked folded conv weight
        fold_l   (Wo*Cout, Cout)         f32   lane -> channel 0/1 fold
        unfold_l (Cout, Wo*Cout)         f32   channel -> lane 0/1 broadcast
        gamma_l  (1, Cout) f32,  beta_l (1, Cout) f32
      prbd  : (POOL, N, N*H_last)  bf16  block-diag pool-row matrices
      m     : (POOL, W_last*C, A)  bf16  pc @ wimg[i] folded offline
      wta   : (TIME_EMB_DIM+ACTION_DIM, A) bf16
      bfc   : (1, A) f32
    Output: (N, A) f32
    """
    x0_ref, ta_ref = refs[0], refs[1]
    layer_refs = refs[2:2 + 6 * NUM_LAYERS]
    prbd_ref, m_ref, wta_ref, bfc_ref = refs[2 + 6 * NUM_LAYERS:-1]
    out_ref = refs[-1]

    n_batch = ta_ref.shape[0]
    x = x0_ref[...]                                    # (N*H0, W0*Cpad) bf16

    for l in range(NUM_LAYERS):
        r_ref, b_ref, fold_ref, unfold_ref, g_ref, be_ref = \
            layer_refs[6 * l:6 * (l + 1)]
        rows_out = r_ref.shape[1]                      # N*Ho
        l_out = b_ref.shape[1]                         # Wo*Cout
        c_out = g_ref.shape[1]
        w_out = l_out // c_out
        h_out = rows_out // n_batch

        # ---- conv(k=3,s=2,p=1) as matmuls, whole batch at once --------------
        # vertical taps via block-diag 0/1 selection matrices; the three taps
        # are lane-concatenated into the K dim and contracted in ONE long-K
        # matmul against the kh-stacked folded weight matrix.
        sels = [jnp.dot(r_ref[kh], x, preferred_element_type=jnp.float32)
                .astype(jnp.bfloat16) for kh in range(3)]
        sel_cat = jnp.concatenate(sels, axis=1)        # (N*Ho, 3*Win*Cin) bf16
        y = jnp.dot(sel_cat, b_ref[...],
                    preferred_element_type=jnp.float32)  # (N*Ho, Wo*Cout) f32

        # ---- BatchNorm (training-mode batch stats, biased var) + ReLU -------
        # one reduction pass (sum + sum-of-squares); lane -> channel fold and
        # channel -> lane broadcast are tiny 0/1 matmuls (no lane slicing or
        # concats); conv bias skipped (cancelled by the mean subtraction).
        cnt = float(n_batch * h_out * w_out)
        s1 = jnp.sum(y, axis=0, keepdims=True)         # (1, Wo*Cout)
        s2 = jnp.sum(y * y, axis=0, keepdims=True)
        ch1 = jnp.dot(s1, fold_ref[...], preferred_element_type=jnp.float32)
        ch2 = jnp.dot(s2, fold_ref[...], preferred_element_type=jnp.float32)
        mean = ch1 * (1.0 / cnt)                       # (1, Cout)
        var = jnp.maximum(ch2 * (1.0 / cnt) - mean * mean, 0.0)
        scale = g_ref[...] * jax.lax.rsqrt(var + BN_EPS)
        shift = be_ref[...] - mean * scale
        scale_b = jnp.dot(scale, unfold_ref[...],
                          preferred_element_type=jnp.float32)  # (1, Wo*Cout)
        shift_b = jnp.dot(shift, unfold_ref[...],
                          preferred_element_type=jnp.float32)
        # cast to bf16 exactly once per layer (next conv's MXU input)
        x = jnp.maximum(y * scale_b + shift_b, 0.0).astype(jnp.bfloat16)

    # ---- adaptive avg pool + flatten(NCHW) + Linear, batched ----------------
    pool = prbd_ref.shape[0]
    img_part = jnp.zeros((n_batch, out_ref.shape[1]), jnp.float32)
    for i in range(pool):
        zr = jnp.dot(prbd_ref[i], x,
                     preferred_element_type=jnp.float32)       # (N, W_last*C)
        img_part = img_part + jnp.dot(zr.astype(jnp.bfloat16), m_ref[i],
                                      preferred_element_type=jnp.float32)
    ta_part = jnp.dot(ta_ref[...].astype(jnp.bfloat16), wta_ref[...],
                      preferred_element_type=jnp.float32)       # (N, A)
    out_ref[...] = img_part + ta_part + bfc_ref[...]


# ----------------------------- parameter preprocessing -----------------------
def _row_select_bd(h_in, n):
    """Block-diagonal R_kh (3, N*Ho, N*Hin): stride-2 vertical taps + padding."""
    h_out = _conv_out(h_in)
    r = np.zeros((3, n * h_out, n * h_in), np.float32)
    for kh in range(3):
        for b in range(n):
            for oh in range(h_out):
                h = 2 * oh + kh - 1
                if 0 <= h < h_in:
                    r[kh, b * h_out + oh, b * h_in + h] = 1.0
    return r


def _conv_col_stacked(w_t, w_in, c_in_eff):
    """Fold horizontal taps + padding + conv weights, kh-stacked along K:
    (3*Win*Cin_eff, Wo*Cout).  w_t is the PyTorch-layout weight (Cout,Cin,3,3).
    Only the first Cin of each Cin_eff block is filled (pad channels -> 0)."""
    c_out, c_in = w_t.shape[0], w_t.shape[1]
    w_out = _conv_out(w_in)
    b = np.zeros((3, w_in * c_in_eff, w_out * c_out), np.float32)
    for kh in range(3):
        for ow in range(w_out):
            for kw in range(3):
                w = 2 * ow + kw - 1
                if 0 <= w < w_in:
                    b[kh, w * c_in_eff:w * c_in_eff + c_in,
                      ow * c_out:(ow + 1) * c_out] = w_t[:, :, kh, kw].T
    return b.reshape(3 * w_in * c_in_eff, w_out * c_out)


def _fold_mats(w_out, c_out):
    """0/1 fold (Wo*Cout, Cout) summing lanes per channel, and its transpose
    (Cout, Wo*Cout) used to broadcast per-channel scale/shift back to lanes."""
    fold = np.zeros((w_out * c_out, c_out), np.float32)
    eye = np.eye(c_out, dtype=np.float32)
    for w in range(w_out):
        fold[w * c_out:(w + 1) * c_out, :] = eye
    return fold, np.ascontiguousarray(fold.T)


def _pool_mats(h_in, w_in, c, pool):
    """Exact nn.AdaptiveAvgPool2d((pool, pool)) as two matmul matrices."""
    pr = np.zeros((pool, h_in), np.float32)
    for i in range(pool):
        hs, he = (i * h_in) // pool, -((-(i + 1) * h_in) // pool)
        pr[i, hs:he] = 1.0 / (he - hs)
    pc = np.zeros((w_in * c, pool * c), np.float32)
    eye = np.eye(c, dtype=np.float32)
    for j in range(pool):
        ws, we = (j * w_in) // pool, -((-(j + 1) * w_in) // pool)
        for w in range(ws, we):
            pc[w * c:(w + 1) * c, j * c:(j + 1) * c] = eye / (we - ws)
    return pr, pc


def _fc_mats(fc_w, c, pool):
    """Split/permute the Linear weight so torch.flatten(NCHW) ordering is
    folded into the matmul: wimg[i, j*C+c, a] == fc_w.T[c*P*P + i*P + j, a]."""
    fct = np.asarray(fc_w).T                       # (F, A)
    a = fct.shape[1]
    wimg = np.zeros((pool, pool * c, a), np.float32)
    for i in range(pool):
        for j in range(pool):
            for ch in range(c):
                wimg[i, j * c + ch, :] = fct[ch * pool * pool + i * pool + j, :]
    wta = fct[c * pool * pool:, :]                 # time-emb + action rows
    return wimg, wta


def init_params(key, img_hw=(32, 32), batch=2):
    h, w = img_hw
    dims = [CHANNELS] + [DIM * m for m in DIM_MULTS]
    keys = jax.random.split(key, 2 * (len(dims) - 1) + 2)
    layers = []
    for i in range(len(dims) - 1):
        cin, cout = dims[i], dims[i + 1]
        cin_eff = C_IN_PAD if i == 0 else cin
        w_t = np.asarray(jax.random.normal(keys[2 * i], (cout, cin, 3, 3),
                                           jnp.float32)) * 0.1
        # Conv bias exists in the PyTorch module, but training-mode BatchNorm
        # subtracts the batch mean right after it, so the bias cancels exactly
        # -> the kernel skips it (dead compute, identical result).
        _conv_bias_unused = jax.random.normal(keys[2 * i + 1], (cout,),
                                              jnp.float32) * 0.1  # noqa: F841
        fold, unfold = _fold_mats(_conv_out(w), cout)
        layers.append({
            "r": jnp.asarray(_row_select_bd(h, batch), jnp.bfloat16),
            "b": jnp.asarray(_conv_col_stacked(w_t, w, cin_eff), jnp.bfloat16),
            "fold": jnp.asarray(fold, jnp.float32),
            "unfold": jnp.asarray(unfold, jnp.float32),
            "gamma": jnp.ones((1, cout), jnp.float32),
            "beta": jnp.zeros((1, cout), jnp.float32),
        })
        h, w = _conv_out(h), _conv_out(w)

    c_last = dims[-1]
    pr, pc = _pool_mats(h, w, c_last, POOL)
    feat_dim = c_last * POOL * POOL + TIME_EMB_DIM + ACTION_DIM
    fc_w = np.asarray(jax.random.normal(keys[-2], (ACTION_DIM, feat_dim),
                                        jnp.float32)) * 0.05
    fc_b = jax.random.normal(keys[-1], (1, ACTION_DIM), jnp.float32) * 0.05
    wimg, wta = _fc_mats(fc_w, c_last, POOL)

    # Block-diagonalize the pool-row matrices over the batch and fold
    # pc @ wimg[i] offline -> the tail becomes 2*POOL batched matmuls.
    prbd = np.zeros((POOL, batch, batch * h), np.float32)
    for i in range(POOL):
        for b in range(batch):
            prbd[i, b, b * h:(b + 1) * h] = pr[i]
    m = np.einsum('fk,pka->pfa', pc, wimg)          # (POOL, W_last*C, A)

    return {
        "layers": layers,
        "prbd": jnp.asarray(prbd, jnp.bfloat16),
        "m": jnp.asarray(m, jnp.bfloat16),
        "wta": jnp.asarray(wta, jnp.bfloat16),
        "fc_b": fc_b.astype(jnp.float32),
    }


# ----------------------------- plain-JAX glue (tiny) --------------------------
def time_embedding(t):
    half = TIME_EMB_DIM // 2
    scale = math.log(10000.0) / (half - 1)
    freq = jnp.exp(jnp.arange(half, dtype=jnp.float32) * -scale)
    args = t.astype(jnp.float32)[:, None] * freq[None, :]
    return jnp.concatenate([jnp.sin(args), jnp.cos(args)], axis=-1)


# ----------------------------- forward ----------------------------------------
def forward(params, img_nchw, action, timesteps):
    # NOTE: params were built for a fixed resolution (32x32) and batch size.
    n, c, h, w = img_nchw.shape
    # NCHW -> lane-dense (N*H, W*Cpad) bf16 layout; channel zero-padded 3 -> 4.
    x = jnp.transpose(img_nchw.astype(jnp.float32), (0, 2, 3, 1))
    x = jnp.pad(x, ((0, 0), (0, 0), (0, 0), (0, C_IN_PAD - c)))
    x0 = x.reshape(n * h, w * C_IN_PAD).astype(jnp.bfloat16)
    temb = time_embedding(timesteps.astype(jnp.int32))
    ta = jnp.concatenate([temb, action.astype(jnp.float32)], axis=1)

    args = [x0, ta]
    for layer in params["layers"]:
        args += [layer["r"], layer["b"], layer["fold"], layer["unfold"],
                 layer["gamma"], layer["beta"]]
    args += [params["prbd"], params["m"], params["wta"], params["fc_b"]]

    def full_spec(shape):
        nd = len(shape)
        return pl.BlockSpec(shape, lambda i, _nd=nd: (0,) * _nd)

    # Total footprint < 1 MB -> single grid step, no tiling; training-mode BN
    # needs full-batch statistics so the batch is intentionally not split.
    return pl.pallas_call(
        fused_forward_kernel,
        grid=(1,),
        in_specs=[full_spec(a.shape) for a in args],
        out_specs=full_spec((n, ACTION_DIM)),
        out_shape=jax.ShapeDtypeStruct((n, ACTION_DIM), jnp.float32),
    )(*args)


# ----------------------------- main -------------------------------------------
if __name__ == "__main__":
    N, H, W = 2, 32, 32
    params = init_params(jax.random.PRNGKey(42), img_hw=(H, W), batch=N)

    key = jax.random.PRNGKey(0)
    k_img, k_act, k_t = jax.random.split(key, 3)
    img = jax.random.normal(k_img, (N, CHANNELS, H, W), jnp.float32)   # NCHW
    action = jax.random.normal(k_act, (N, ACTION_DIM), jnp.float32)
    timesteps = jax.random.randint(k_t, (N,), 0, 1000)

    fwd = jax.jit(forward)
    out = jax.block_until_ready(fwd(params, img, action, timesteps))
    assert out.shape == (N, ACTION_DIM)
    assert bool(jnp.all(jnp.isfinite(out)))
    print("KERNEL_OK")
</pallas_src>

<mosaic_0001>
module attributes {stable_mosaic.version = 11 : i64} {
  func.func @fused_forward_kernel(%arg0: i32, %arg1: memref<64x128xbf16, #tpu.memory_space<vmem>>, %arg2: memref<2x19xf32, #tpu.memory_space<vmem>>, %arg3: memref<3x32x64xbf16, #tpu.memory_space<vmem>>, %arg4: memref<384x128xbf16, #tpu.memory_space<vmem>>, %arg5: memref<128x8xf32, #tpu.memory_space<vmem>>, %arg6: memref<8x128xf32, #tpu.memory_space<vmem>>, %arg7: memref<1x8xf32, #tpu.memory_space<vmem>>, %arg8: memref<1x8xf32, #tpu.memory_space<vmem>>, %arg9: memref<3x16x32xbf16, #tpu.memory_space<vmem>>, %arg10: memref<384x128xbf16, #tpu.memory_space<vmem>>, %arg11: memref<128x16xf32, #tpu.memory_space<vmem>>, %arg12: memref<16x128xf32, #tpu.memory_space<vmem>>, %arg13: memref<1x16xf32, #tpu.memory_space<vmem>>, %arg14: memref<1x16xf32, #tpu.memory_space<vmem>>, %arg15: memref<3x8x16xbf16, #tpu.memory_space<vmem>>, %arg16: memref<384x128xbf16, #tpu.memory_space<vmem>>, %arg17: memref<128x32xf32, #tpu.memory_space<vmem>>, %arg18: memref<32x128xf32, #tpu.memory_space<vmem>>, %arg19: memref<1x32xf32, #tpu.memory_space<vmem>>, %arg20: memref<1x32xf32, #tpu.memory_space<vmem>>, %arg21: memref<3x4x8xbf16, #tpu.memory_space<vmem>>, %arg22: memref<384x128xbf16, #tpu.memory_space<vmem>>, %arg23: memref<128x64xf32, #tpu.memory_space<vmem>>, %arg24: memref<64x128xf32, #tpu.memory_space<vmem>>, %arg25: memref<1x64xf32, #tpu.memory_space<vmem>>, %arg26: memref<1x64xf32, #tpu.memory_space<vmem>>, %arg27: memref<2x2x4xbf16, #tpu.memory_space<vmem>>, %arg28: memref<2x128x11xbf16, #tpu.memory_space<vmem>>, %arg29: memref<19x11xbf16, #tpu.memory_space<vmem>>, %arg30: memref<1x11xf32, #tpu.memory_space<vmem>>, %arg31: memref<2x11xf32, #tpu.memory_space<vmem>>) attributes {dimension_semantics = [#tpu.dimension_semantics<arbitrary>], iteration_bounds = array<i64: 1>, scalar_prefetch = 0 : i64, scratch_operands = 0 : i64, tpu.core_type = #tpu.core_type<tc>, window_params = [{pipeline_mode = #tpu.pipeline_mode<synchronous>, transform_indices = @transform_0, window_bounds = array<i64: 64, 128>}, {pipeline_mode = #tpu.pipeline_mode<synchronous>, transform_indices = @transform_1, window_bounds = array<i64: 2, 19>}, {pipeline_mode = #tpu.pipeline_mode<synchronous>, transform_indices = @transform_2, window_bounds = array<i64: 3, 32, 64>}, {pipeline_mode = #tpu.pipeline_mode<synchronous>, transform_indices = @transform_3, window_bounds = array<i64: 384, 128>}, {pipeline_mode = #tpu.pipeline_mode<synchronous>, transform_indices = @transform_4, window_bounds = array<i64: 128, 8>}, {pipeline_mode = #tpu.pipeline_mode<synchronous>, transform_indices = @transform_5, window_bounds = array<i64: 8, 128>}, {pipeline_mode = #tpu.pipeline_mode<synchronous>, transform_indices = @transform_6, window_bounds = array<i64: 1, 8>}, {pipeline_mode = #tpu.pipeline_mode<synchronous>, transform_indices = @transform_7, window_bounds = array<i64: 1, 8>}, {pipeline_mode = #tpu.pipeline_mode<synchronous>, transform_indices = @transform_8, window_bounds = array<i64: 3, 16, 32>}, {pipeline_mode = #tpu.pipeline_mode<synchronous>, transform_indices = @transform_9, window_bounds = array<i64: 384, 128>}, {pipeline_mode = #tpu.pipeline_mode<synchronous>, transform_indices = @transform_10, window_bounds = array<i64: 128, 16>}, {pipeline_mode = #tpu.pipeline_mode<synchronous>, transform_indices = @transform_11, window_bounds = array<i64: 16, 128>}, {pipeline_mode = #tpu.pipeline_mode<synchronous>, transform_indices = @transform_12, window_bounds = array<i64: 1, 16>}, {pipeline_mode = #tpu.pipeline_mode<synchronous>, transform_indices = @transform_13, window_bounds = array<i64: 1, 16>}, {pipeline_mode = #tpu.pipeline_mode<synchronous>, transform_indices = @transform_14, window_bounds = array<i64: 3, 8, 16>}, {pipeline_mode = #tpu.pipeline_mode<synchronous>, transform_indices = @transform_15, window_bounds = array<i64: 384, 128>}, {pipeline_mode = #tpu.pipeline_mode<synchronous>, transform_indices = @transform_16, window_bounds = array<i64: 128, 32>}, {pipeline_mode = #tpu.pipeline_mode<synchronous>, transform_indices = @transform_17, window_bounds = array<i64: 32, 128>}, {pipeline_mode = #tpu.pipeline_mode<synchronous>, transform_indices = @transform_18, window_bounds = array<i64: 1, 32>}, {pipeline_mode = #tpu.pipeline_mode<synchronous>, transform_indices = @transform_19, window_bounds = array<i64: 1, 32>}, {pipeline_mode = #tpu.pipeline_mode<synchronous>, transform_indices = @transform_20, window_bounds = array<i64: 3, 4, 8>}, {pipeline_mode = #tpu.pipeline_mode<synchronous>, transform_indices = @transform_21, window_bounds = array<i64: 384, 128>}, {pipeline_mode = #tpu.pipeline_mode<synchronous>, transform_indices = @transform_22, window_bounds = array<i64: 128, 64>}, {pipeline_mode = #tpu.pipeline_mode<synchronous>, transform_indices = @transform_23, window_bounds = array<i64: 64, 128>}, {pipeline_mode = #tpu.pipeline_mode<synchronous>, transform_indices = @transform_24, window_bounds = array<i64: 1, 64>}, {pipeline_mode = #tpu.pipeline_mode<synchronous>, transform_indices = @transform_25, window_bounds = array<i64: 1, 64>}, {pipeline_mode = #tpu.pipeline_mode<synchronous>, transform_indices = @transform_26, window_bounds = array<i64: 2, 2, 4>}, {pipeline_mode = #tpu.pipeline_mode<synchronous>, transform_indices = @transform_27, window_bounds = array<i64: 2, 128, 11>}, {pipeline_mode = #tpu.pipeline_mode<synchronous>, transform_indices = @transform_28, window_bounds = array<i64: 19, 11>}, {pipeline_mode = #tpu.pipeline_mode<synchronous>, transform_indices = @transform_29, window_bounds = array<i64: 1, 11>}, {pipeline_mode = #tpu.pipeline_mode<synchronous>, transform_indices = @transform_30, window_bounds = array<i64: 2, 11>}]} {
    %c0 = arith.constant 0 : index
    %c0_0 = arith.constant 0 : index
    %0 = vector.load %arg1[%c0, %c0_0] : memref<64x128xbf16, #tpu.memory_space<vmem>>, vector<64x128xbf16>
    %c0_1 = arith.constant 0 : index
    %c0_2 = arith.constant 0 : index
    %c0_3 = arith.constant 0 : index
    %1 = vector.load %arg3[%c0_1, %c0_2, %c0_3] : memref<3x32x64xbf16, #tpu.memory_space<vmem>>, vector<1x32x64xbf16>
    %2 = vector.shape_cast %1 : vector<1x32x64xbf16> to vector<32x64xbf16>
    %cst = arith.constant dense<0.000000e+00> : vector<32x128xf32>
    %3 = tpu.matmul %2, %0, %cst {dimension_numbers = #tpu.dot_dimension_numbers<[1], [0], [0], [1], [0, 0, 1, 1], [], []>} : vector<32x64xbf16>, vector<64x128xbf16>, vector<32x128xf32> -> vector<32x128xf32>
    %4 = arith.truncf %3 : vector<32x128xf32> to vector<32x128xbf16>
    %c1 = arith.constant 1 : index
    %c0_4 = arith.constant 0 : index
    %c0_5 = arith.constant 0 : index
    %5 = vector.load %arg3[%c1, %c0_4, %c0_5] : memref<3x32x64xbf16, #tpu.memory_space<vmem>>, vector<1x32x64xbf16>
    %6 = vector.shape_cast %5 : vector<1x32x64xbf16> to vector<32x64xbf16>
    %cst_6 = arith.constant dense<0.000000e+00> : vector<32x128xf32>
    %7 = tpu.matmul %6, %0, %cst_6 {dimension_numbers = #tpu.dot_dimension_numbers<[1], [0], [0], [1], [0, 0, 1, 1], [], []>} : vector<32x64xbf16>, vector<64x128xbf16>, vector<32x128xf32> -> vector<32x128xf32>
    %8 = arith.truncf %7 : vector<32x128xf32> to vector<32x128xbf16>
    %c2 = arith.constant 2 : index
    %c0_7 = arith.constant 0 : index
    %c0_8 = arith.constant 0 : index
    %9 = vector.load %arg3[%c2, %c0_7, %c0_8] : memref<3x32x64xbf16, #tpu.memory_space<vmem>>, vector<1x32x64xbf16>
    %10 = vector.shape_cast %9 : vector<1x32x64xbf16> to vector<32x64xbf16>
    %cst_9 = arith.constant dense<0.000000e+00> : vector<32x128xf32>
    %11 = tpu.matmul %10, %0, %cst_9 {dimension_numbers = #tpu.dot_dimension_numbers<[1], [0], [0], [1], [0, 0, 1, 1], [], []>} : vector<32x64xbf16>, vector<64x128xbf16>, vector<32x128xf32> -> vector<32x128xf32>
    %12 = arith.truncf %11 : vector<32x128xf32> to vector<32x128xbf16>
    %13 = tpu.concatenate %4, %8, %12 in 1 : vector<32x128xbf16>, vector<32x128xbf16>, vector<32x128xbf16> -> vector<32x384xbf16>
    %c0_10 = arith.constant 0 : index
    %c0_11 = arith.constant 0 : index
    %14 = vector.load %arg4[%c0_10, %c0_11] : memref<384x128xbf16, #tpu.memory_space<vmem>>, vector<384x128xbf16>
    %cst_12 = arith.constant dense<0.000000e+00> : vector<32x128xf32>
    %15 = tpu.matmul %13, %14, %cst_12 {dimension_numbers = #tpu.dot_dimension_numbers<[1], [0], [0], [1], [0, 0, 1, 1], [], []>} : vector<32x384xbf16>, vector<384x128xbf16>, vector<32x128xf32> -> vector<32x128xf32>
    %cst_13 = arith.constant dense<0.000000e+00> : vector<128xf32>
    %16 = vector.multi_reduction <add>, %15, %cst_13 [0] : vector<32x128xf32> to vector<128xf32>
    %17 = vector.shape_cast %16 : vector<128xf32> to vector<1x128xf32>
    %18 = arith.mulf %15, %15 : vector<32x128xf32>
    %cst_14 = arith.constant dense<0.000000e+00> : vector<128xf32>
    %19 = vector.multi_reduction <add>, %18, %cst_14 [0] : vector<32x128xf32> to vector<128xf32>
    %20 = vector.shape_cast %19 : vector<128xf32> to vector<1x128xf32>
    %c0_15 = arith.constant 0 : index
    %c0_16 = arith.constant 0 : index
    %21 = vector.load %arg5[%c0_15, %c0_16] : memref<128x8xf32, #tpu.memory_space<vmem>>, vector<128x8xf32>
    %cst_17 = arith.constant dense<0.000000e+00> : vector<1x8xf32>
    %22 = tpu.matmul %17, %21, %cst_17 {dimension_numbers = #tpu.dot_dimension_numbers<[1], [0], [0], [1], [0, 0, 1, 1], [], []>} : vector<1x128xf32>, vector<128x8xf32>, vector<1x8xf32> -> vector<1x8xf32>
    %c0_18 = arith.constant 0 : index
    %c0_19 = arith.constant 0 : index
    %23 = vector.load %arg5[%c0_18, %c0_19] : memref<128x8xf32, #tpu.memory_space<vmem>>, vector<128x8xf32>
    %cst_20 = arith.constant dense<0.000000e+00> : vector<1x8xf32>
    %24 = tpu.matmul %20, %23, %cst_20 {dimension_numbers = #tpu.dot_dimension_numbers<[1], [0], [0], [1], [0, 0, 1, 1], [], []>} : vector<1x128xf32>, vector<128x8xf32>, vector<1x8xf32> -> vector<1x8xf32>
    %cst_21 = arith.constant 0.001953125 : f32
    %25 = vector.broadcast %cst_21 : f32 to vector<1x8xf32>
    %26 = arith.mulf %22, %25 : vector<1x8xf32>
    %cst_22 = arith.constant 0.001953125 : f32
    %27 = vector.broadcast %cst_22 : f32 to vector<1x8xf32>
    %28 = arith.mulf %24, %27 : vector<1x8xf32>
    %29 = arith.mulf %26, %26 : vector<1x8xf32>
    %30 = arith.subf %28, %29 : vector<1x8xf32>
    %cst_23 = arith.constant 0.000000e+00 : f32
    %31 = vector.broadcast %cst_23 : f32 to vector<1x8xf32>
    %32 = arith.maximumf %30, %31 : vector<1x8xf32>
    %c0_24 = arith.constant 0 : index
    %c0_25 = arith.constant 0 : index
    %33 = vector.load %arg7[%c0_24, %c0_25] : memref<1x8xf32, #tpu.memory_space<vmem>>, vector<1x8xf32>
    %cst_26 = arith.constant 9.99999974E-6 : f32
    %34 = vector.broadcast %cst_26 : f32 to vector<1x8xf32>
    %35 = arith.addf %32, %34 : vector<1x8xf32>
    %36 = math.rsqrt %35 : vector<1x8xf32>
    %37 = arith.mulf %33, %36 : vector<1x8xf32>
    %c0_27 = arith.constant 0 : index
    %c0_28 = arith.constant 0 : index
    %38 = vector.load %arg8[%c0_27, %c0_28] : memref<1x8xf32, #tpu.memory_space<vmem>>, vector<1x8xf32>
    %39 = arith.mulf %26, %37 : vector<1x8xf32>
    %40 = arith.subf %38, %39 : vector<1x8xf32>
    %c0_29 = arith.constant 0 : index
    %c0_30 = arith.constant 0 : index
    %41 = vector.load %arg6[%c0_29, %c0_30] : memref<8x128xf32, #tpu.memory_space<vmem>>, vector<8x128xf32>
    %cst_31 = arith.constant dense<0.000000e+00> : vector<1x128xf32>
    %42 = tpu.matmul %37, %41, %cst_31 {dimension_numbers = #tpu.dot_dimension_numbers<[1], [0], [0], [1], [0, 0, 1, 1], [], []>} : vector<1x8xf32>, vector<8x128xf32>, vector<1x128xf32> -> vector<1x128xf32>
    %c0_32 = arith.constant 0 : index
    %c0_33 = arith.constant 0 : index
    %43 = vector.load %arg6[%c0_32, %c0_33] : memref<8x128xf32, #tpu.memory_space<vmem>>, vector<8x128xf32>
    %cst_34 = arith.constant dense<0.000000e+00> : vector<1x128xf32>
    %44 = tpu.matmul %40, %43, %cst_34 {dimension_numbers = #tpu.dot_dimension_numbers<[1], [0], [0], [1], [0, 0, 1, 1], [], []>} : vector<1x8xf32>, vector<8x128xf32>, vector<1x128xf32> -> vector<1x128xf32>
    %45 = vector.broadcast %42 : vector<1x128xf32> to vector<32x128xf32>
    %46 = arith.mulf %15, %45 : vector<32x128xf32>
    %47 = vector.broadcast %44 : vector<1x128xf32> to vector<32x128xf32>
    %48 = arith.addf %46, %47 : vector<32x128xf32>
    %cst_35 = arith.constant 0.000000e+00 : f32
    %49 = vector.broadcast %cst_35 : f32 to vector<32x128xf32>
    %50 = arith.maximumf %48, %49 : vector<32x128xf32>
    %51 = arith.truncf %50 : vector<32x128xf32> to vector<32x128xbf16>
    %c0_36 = arith.constant 0 : index
    %c0_37 = arith.constant 0 : index
    %c0_38 = arith.constant 0 : index
    %52 = vector.load %arg9[%c0_36, %c0_37, %c0_38] : memref<3x16x32xbf16, #tpu.memory_space<vmem>>, vector<1x16x32xbf16>
    %53 = vector.shape_cast %52 : vector<1x16x32xbf16> to vector<16x32xbf16>
    %cst_39 = arith.constant dense<0.000000e+00> : vector<16x128xf32>
    %54 = tpu.matmul %53, %51, %cst_39 {dimension_numbers = #tpu.dot_dimension_numbers<[1], [0], [0], [1], [0, 0, 1, 1], [], []>} : vector<16x32xbf16>, vector<32x128xbf16>, vector<16x128xf32> -> vector<16x128xf32>
    %55 = arith.truncf %54 : vector<16x128xf32> to vector<16x128xbf16>
    %c1_40 = arith.constant 1 : index
    %c0_41 = arith.constant 0 : index
    %c0_42 = arith.constant 0 : index
    %56 = vector.load %arg9[%c1_40, %c0_41, %c0_42] : memref<3x16x32xbf16, #tpu.memory_space<vmem>>, vector<1x16x32xbf16>
    %57 = vector.shape_cast %56 : vector<1x16x32xbf16> to vector<16x32xbf16>
    %cst_43 = arith.constant dense<0.000000e+00> : vector<16x128xf32>
    %58 = tpu.matmul %57, %51, %cst_43 {dimension_numbers = #tpu.dot_dimension_numbers<[1], [0], [0], [1], [0, 0, 1, 1], [], []>} : vector<16x32xbf16>, vector<32x128xbf16>, vector<16x128xf32> -> vector<16x128xf32>
    %59 = arith.truncf %58 : vector<16x128xf32> to vector<16x128xbf16>
    %c2_44 = arith.constant 2 : index
    %c0_45 = arith.constant 0 : index
    %c0_46 = arith.constant 0 : index
    %60 = vector.load %arg9[%c2_44, %c0_45, %c0_46] : memref<3x16x32xbf16, #tpu.memory_space<vmem>>, vector<1x16x32xbf16>
    %61 = vector.shape_cast %60 : vector<1x16x32xbf16> to vector<16x32xbf16>
    %cst_47 = arith.constant dense<0.000000e+00> : vector<16x128xf32>
    %62 = tpu.matmul %61, %51, %cst_47 {dimension_numbers = #tpu.dot_dimension_numbers<[1], [0], [0], [1], [0, 0, 1, 1], [], []>} : vector<16x32xbf16>, vector<32x128xbf16>, vector<16x128xf32> -> vector<16x128xf32>
    %63 = arith.truncf %62 : vector<16x128xf32> to vector<16x128xbf16>
    %64 = tpu.concatenate %55, %59, %63 in 1 : vector<16x128xbf16>, vector<16x128xbf16>, vector<16x128xbf16> -> vector<16x384xbf16>
    %c0_48 = arith.constant 0 : index
    %c0_49 = arith.constant 0 : index
    %65 = vector.load %arg10[%c0_48, %c0_49] : memref<384x128xbf16, #tpu.memory_space<vmem>>, vector<384x128xbf16>
    %cst_50 = arith.constant dense<0.000000e+00> : vector<16x128xf32>
    %66 = tpu.matmul %64, %65, %cst_50 {dimension_numbers = #tpu.dot_dimension_numbers<[1], [0], [0], [1], [0, 0, 1, 1], [], []>} : vector<16x384xbf16>, vector<384x128xbf16>, vector<16x128xf32> -> vector<16x128xf32>
    %cst_51 = arith.constant dense<0.000000e+00> : vector<128xf32>
    %67 = vector.multi_reduction <add>, %66, %cst_51 [0] : vector<16x128xf32> to vector<128xf32>
    %68 = vector.shape_cast %67 : vector<128xf32> to vector<1x128xf32>
    %69 = arith.mulf %66, %66 : vector<16x128xf32>
    %cst_52 = arith.constant dense<0.000000e+00> : vector<128xf32>
    %70 = vector.multi_reduction <add>, %69, %cst_52 [0] : vector<16x128xf32> to vector<128xf32>
    %71 = vector.shape_cast %70 : vector<128xf32> to vector<1x128xf32>
    %c0_53 = arith.constant 0 : index
    %c0_54 = arith.constant 0 : index
    %72 = vector.load %arg11[%c0_53, %c0_54] : memref<128x16xf32, #tpu.memory_space<vmem>>, vector<128x16xf32>
    %cst_55 = arith.constant dense<0.000000e+00> : vector<1x16xf32>
    %73 = tpu.matmul %68, %72, %cst_55 {dimension_numbers = #tpu.dot_dimension_numbers<[1], [0], [0], [1], [0, 0, 1, 1], [], []>} : vector<1x128xf32>, vector<128x16xf32>, vector<1x16xf32> -> vector<1x16xf32>
    %c0_56 = arith.constant 0 : index
    %c0_57 = arith.constant 0 : index
    %74 = vector.load %arg11[%c0_56, %c0_57] : memref<128x16xf32, #tpu.memory_space<vmem>>, vector<128x16xf32>
    %cst_58 = arith.constant dense<0.000000e+00> : vector<1x16xf32>
    %75 = tpu.matmul %71, %74, %cst_58 {dimension_numbers = #tpu.dot_dimension_numbers<[1], [0], [0], [1], [0, 0, 1, 1], [], []>} : vector<1x128xf32>, vector<128x16xf32>, vector<1x16xf32> -> vector<1x16xf32>
    %cst_59 = arith.constant 7.812500e-03 : f32
    %76 = vector.broadcast %cst_59 : f32 to vector<1x16xf32>
    %77 = arith.mulf %73, %76 : vector<1x16xf32>
    %cst_60 = arith.constant 7.812500e-03 : f32
    %78 = vector.broadcast %cst_60 : f32 to vector<1x16xf32>
    %79 = arith.mulf %75, %78 : vector<1x16xf32>
    %80 = arith.mulf %77, %77 : vector<1x16xf32>
    %81 = arith.subf %79, %80 : vector<1x16xf32>
    %cst_61 = arith.constant 0.000000e+00 : f32
    %82 = vector.broadcast %cst_61 : f32 to vector<1x16xf32>
    %83 = arith.maximumf %81, %82 : vector<1x16xf32>
    %c0_62 = arith.constant 0 : index
    %c0_63 = arith.constant 0 : index
    %84 = vector.load %arg13[%c0_62, %c0_63] : memref<1x16xf32, #tpu.memory_space<vmem>>, vector<1x16xf32>
    %cst_64 = arith.constant 9.99999974E-6 : f32
    %85 = vector.broadcast %cst_64 : f32 to vector<1x16xf32>
    %86 = arith.addf %83, %85 : vector<1x16xf32>
    %87 = math.rsqrt %86 : vector<1x16xf32>
    %88 = arith.mulf %84, %87 : vector<1x16xf32>
    %c0_65 = arith.constant 0 : index
    %c0_66 = arith.constant 0 : index
    %89 = vector.load %arg14[%c0_65, %c0_66] : memref<1x16xf32, #tpu.memory_space<vmem>>, vector<1x16xf32>
    %90 = arith.mulf %77, %88 : vector<1x16xf32>
    %91 = arith.subf %89, %90 : vector<1x16xf32>
    %c0_67 = arith.constant 0 : index
    %c0_68 = arith.constant 0 : index
    %92 = vector.load %arg12[%c0_67, %c0_68] : memref<16x128xf32, #tpu.memory_space<vmem>>, vector<16x128xf32>
    %cst_69 = arith.constant dense<0.000000e+00> : vector<1x128xf32>
    %93 = tpu.matmul %88, %92, %cst_69 {dimension_numbers = #tpu.dot_dimension_numbers<[1], [0], [0], [1], [0, 0, 1, 1], [], []>} : vector<1x16xf32>, vector<16x128xf32>, vector<1x128xf32> -> vector<1x128xf32>
    %c0_70 = arith.constant 0 : index
    %c0_71 = arith.constant 0 : index
    %94 = vector.load %arg12[%c0_70, %c0_71] : memref<16x128xf32, #tpu.memory_space<vmem>>, vector<16x128xf32>
    %cst_72 = arith.constant dense<0.000000e+00> : vector<1x128xf32>
    %95 = tpu.matmul %91, %94, %cst_72 {dimension_numbers = #tpu.dot_dimension_numbers<[1], [0], [0], [1], [0, 0, 1, 1], [], []>} : vector<1x16xf32>, vector<16x128xf32>, vector<1x128xf32> -> vector<1x128xf32>
    %96 = vector.broadcast %93 : vector<1x128xf32> to vector<16x128xf32>
    %97 = arith.mulf %66, %96 : vector<16x128xf32>
    %98 = vector.broadcast %95 : vector<1x128xf32> to vector<16x128xf32>
    %99 = arith.addf %97, %98 : vector<16x128xf32>
    %cst_73 = arith.constant 0.000000e+00 : f32
    %100 = vector.broadcast %cst_73 : f32 to vector<16x128xf32>
    %101 = arith.maximumf %99, %100 : vector<16x128xf32>
    %102 = arith.truncf %101 : vector<16x128xf32> to vector<16x128xbf16>
    %c0_74 = arith.constant 0 : index
    %c0_75 = arith.constant 0 : index
    %c0_76 = arith.constant 0 : index
    %103 = vector.load %arg15[%c0_74, %c0_75, %c0_76] : memref<3x8x16xbf16, #tpu.memory_space<vmem>>, vector<1x8x16xbf16>
    %104 = vector.shape_cast %103 : vector<1x8x16xbf16> to vector<8x16xbf16>
    %cst_77 = arith.constant dense<0.000000e+00> : vector<8x128xf32>
    %105 = tpu.matmul %104, %102, %cst_77 {dimension_numbers = #tpu.dot_dimension_numbers<[1], [0], [0], [1], [0, 0, 1, 1], [], []>} : vector<8x16xbf16>, vector<16x128xbf16>, vector<8x128xf32> -> vector<8x128xf32>
    %106 = arith.truncf %105 : vector<8x128xf32> to vector<8x128xbf16>
    %c1_78 = arith.constant 1 : index
    %c0_79 = arith.constant 0 : index
    %c0_80 = arith.constant 0 : index
    %107 = vector.load %arg15[%c1_78, %c0_79, %c0_80] : memref<3x8x16xbf16, #tpu.memory_space<vmem>>, vector<1x8x16xbf16>
    %108 = vector.shape_cast %107 : vector<1x8x16xbf16> to vector<8x16xbf16>
    %cst_81 = arith.constant dense<0.000000e+00> : vector<8x128xf32>
    %109 = tpu.matmul %108, %102, %cst_81 {dimension_numbers = #tpu.dot_dimension_numbers<[1], [0], [0], [1], [0, 0, 1, 1], [], []>} : vector<8x16xbf16>, vector<16x128xbf16>, vector<8x128xf32> -> vector<8x128xf32>
    %110 = arith.truncf %109 : vector<8x128xf32> to vector<8x128xbf16>
    %c2_82 = arith.constant 2 : index
    %c0_83 = arith.constant 0 : index
    %c0_84 = arith.constant 0 : index
    %111 = vector.load %arg15[%c2_82, %c0_83, %c0_84] : memref<3x8x16xbf16, #tpu.memory_space<vmem>>, vector<1x8x16xbf16>
    %112 = vector.shape_cast %111 : vector<1x8x16xbf16> to vector<8x16xbf16>
    %cst_85 = arith.constant dense<0.000000e+00> : vector<8x128xf32>
    %113 = tpu.matmul %112, %102, %cst_85 {dimension_numbers = #tpu.dot_dimension_numbers<[1], [0], [0], [1], [0, 0, 1, 1], [], []>} : vector<8x16xbf16>, vector<16x128xbf16>, vector<8x128xf32> -> vector<8x128xf32>
    %114 = arith.truncf %113 : vector<8x128xf32> to vector<8x128xbf16>
    %115 = tpu.concatenate %106, %110, %114 in 1 : vector<8x128xbf16>, vector<8x128xbf16>, vector<8x128xbf16> -> vector<8x384xbf16>
    %c0_86 = arith.constant 0 : index
    %c0_87 = arith.constant 0 : index
    %116 = vector.load %arg16[%c0_86, %c0_87] : memref<384x128xbf16, #tpu.memory_space<vmem>>, vector<384x128xbf16>
    %cst_88 = arith.constant dense<0.000000e+00> : vector<8x128xf32>
    %117 = tpu.matmul %115, %116, %cst_88 {dimension_numbers = #tpu.dot_dimension_numbers<[1], [0], [0], [1], [0, 0, 1, 1], [], []>} : vector<8x384xbf16>, vector<384x128xbf16>, vector<8x128xf32> -> vector<8x128xf32>
    %cst_89 = arith.constant dense<0.000000e+00> : vector<128xf32>
    %118 = vector.multi_reduction <add>, %117, %cst_89 [0] : vector<8x128xf32> to vector<128xf32>
    %119 = vector.shape_cast %118 : vector<128xf32> to vector<1x128xf32>
    %120 = arith.mulf %117, %117 : vector<8x128xf32>
    %cst_90 = arith.constant dense<0.000000e+00> : vector<128xf32>
    %121 = vector.multi_reduction <add>, %120, %cst_90 [0] : vector<8x128xf32> to vector<128xf32>
    %122 = vector.shape_cast %121 : vector<128xf32> to vector<1x128xf32>
    %c0_91 = arith.constant 0 : index
    %c0_92 = arith.constant 0 : index
    %123 = vector.load %arg17[%c0_91, %c0_92] : memref<128x32xf32, #tpu.memory_space<vmem>>, vector<128x32xf32>
    %cst_93 = arith.constant dense<0.000000e+00> : vector<1x32xf32>
    %124 = tpu.matmul %119, %123, %cst_93 {dimension_numbers = #tpu.dot_dimension_numbers<[1], [0], [0], [1], [0, 0, 1, 1], [], []>} : vector<1x128xf32>, vector<128x32xf32>, vector<1x32xf32> -> vector<1x32xf32>
    %c0_94 = arith.constant 0 : index
    %c0_95 = arith.constant 0 : index
    %125 = vector.load %arg17[%c0_94, %c0_95] : memref<128x32xf32, #tpu.memory_space<vmem>>, vector<128x32xf32>
    %cst_96 = arith.constant dense<0.000000e+00> : vector<1x32xf32>
    %126 = tpu.matmul %122, %125, %cst_96 {dimension_numbers = #tpu.dot_dimension_numbers<[1], [0], [0], [1], [0, 0, 1, 1], [], []>} : vector<1x128xf32>, vector<128x32xf32>, vector<1x32xf32> -> vector<1x32xf32>
    %cst_97 = arith.constant 3.125000e-02 : f32
    %127 = vector.broadcast %cst_97 : f32 to vector<1x32xf32>
    %128 = arith.mulf %124, %127 : vector<1x32xf32>
    %cst_98 = arith.constant 3.125000e-02 : f32
    %129 = vector.broadcast %cst_98 : f32 to vector<1x32xf32>
    %130 = arith.mulf %126, %129 : vector<1x32xf32>
    %131 = arith.mulf %128, %128 : vector<1x32xf32>
    %132 = arith.subf %130, %131 : vector<1x32xf32>
    %cst_99 = arith.constant 0.000000e+00 : f32
    %133 = vector.broadcast %cst_99 : f32 to vector<1x32xf32>
    %134 = arith.maximumf %132, %133 : vector<1x32xf32>
    %c0_100 = arith.constant 0 : index
    %c0_101 = arith.constant 0 : index
    %135 = vector.load %arg19[%c0_100, %c0_101] : memref<1x32xf32, #tpu.memory_space<vmem>>, vector<1x32xf32>
    %cst_102 = arith.constant 9.99999974E-6 : f32
    %136 = vector.broadcast %cst_102 : f32 to vector<1x32xf32>
    %137 = arith.addf %134, %136 : vector<1x32xf32>
    %138 = math.rsqrt %137 : vector<1x32xf32>
    %139 = arith.mulf %135, %138 : vector<1x32xf32>
    %c0_103 = arith.constant 0 : index
    %c0_104 = arith.constant 0 : index
    %140 = vector.load %arg20[%c0_103, %c0_104] : memref<1x32xf32, #tpu.memory_space<vmem>>, vector<1x32xf32>
    %141 = arith.mulf %128, %139 : vector<1x32xf32>
    %142 = arith.subf %140, %141 : vector<1x32xf32>
    %c0_105 = arith.constant 0 : index
    %c0_106 = arith.constant 0 : index
    %143 = vector.load %arg18[%c0_105, %c0_106] : memref<32x128xf32, #tpu.memory_space<vmem>>, vector<32x128xf32>
    %cst_107 = arith.constant dense<0.000000e+00> : vector<1x128xf32>
    %144 = tpu.matmul %139, %143, %cst_107 {dimension_numbers = #tpu.dot_dimension_numbers<[1], [0], [0], [1], [0, 0, 1, 1], [], []>} : vector<1x32xf32>, vector<32x128xf32>, vector<1x128xf32> -> vector<1x128xf32>
    %c0_108 = arith.constant 0 : index
    %c0_109 = arith.constant 0 : index
    %145 = vector.load %arg18[%c0_108, %c0_109] : memref<32x128xf32, #tpu.memory_space<vmem>>, vector<32x128xf32>
    %cst_110 = arith.constant dense<0.000000e+00> : vector<1x128xf32>
    %146 = tpu.matmul %142, %145, %cst_110 {dimension_numbers = #tpu.dot_dimension_numbers<[1], [0], [0], [1], [0, 0, 1, 1], [], []>} : vector<1x32xf32>, vector<32x128xf32>, vector<1x128xf32> -> vector<1x128xf32>
    %147 = vector.broadcast %144 : vector<1x128xf32> to vector<8x128xf32>
    %148 = arith.mulf %117, %147 : vector<8x128xf32>
    %149 = vector.broadcast %146 : vector<1x128xf32> to vector<8x128xf32>
    %150 = arith.addf %148, %149 : vector<8x128xf32>
    %cst_111 = arith.constant 0.000000e+00 : f32
    %151 = vector.broadcast %cst_111 : f32 to vector<8x128xf32>
    %152 = arith.maximumf %150, %151 : vector<8x128xf32>
    %153 = arith.truncf %152 : vector<8x128xf32> to vector<8x128xbf16>
    %c0_112 = arith.constant 0 : index
    %c0_113 = arith.constant 0 : index
    %c0_114 = arith.constant 0 : index
    %154 = vector.load %arg21[%c0_112, %c0_113, %c0_114] : memref<3x4x8xbf16, #tpu.memory_space<vmem>>, vector<1x4x8xbf16>
    %155 = vector.shape_cast %154 : vector<1x4x8xbf16> to vector<4x8xbf16>
    %cst_115 = arith.constant dense<0.000000e+00> : vector<4x128xf32>
    %156 = tpu.matmul %155, %153, %cst_115 {dimension_numbers = #tpu.dot_dimension_numbers<[1], [0], [0], [1], [0, 0, 1, 1], [], []>} : vector<4x8xbf16>, vector<8x128xbf16>, vector<4x128xf32> -> vector<4x128xf32>
    %157 = arith.truncf %156 : vector<4x128xf32> to vector<4x128xbf16>
    %c1_116 = arith.constant 1 : index
    %c0_117 = arith.constant 0 : index
    %c0_118 = arith.constant 0 : index
    %158 = vector.load %arg21[%c1_116, %c0_117, %c0_118] : memref<3x4x8xbf16, #tpu.memory_space<vmem>>, vector<1x4x8xbf16>
    %159 = vector.shape_cast %158 : vector<1x4x8xbf16> to vector<4x8xbf16>
    %cst_119 = arith.constant dense<0.000000e+00> : vector<4x128xf32>
    %160 = tpu.matmul %159, %153, %cst_119 {dimension_numbers = #tpu.dot_dimension_numbers<[1], [0], [0], [1], [0, 0, 1, 1], [], []>} : vector<4x8xbf16>, vector<8x128xbf16>, vector<4x128xf32> -> vector<4x128xf32>
    %161 = arith.truncf %160 : vector<4x128xf32> to vector<4x128xbf16>
    %c2_120 = arith.constant 2 : index
    %c0_121 = arith.constant 0 : index
    %c0_122 = arith.constant 0 : index
    %162 = vector.load %arg21[%c2_120, %c0_121, %c0_122] : memref<3x4x8xbf16, #tpu.memory_space<vmem>>, vector<1x4x8xbf16>
    %163 = vector.shape_cast %162 : vector<1x4x8xbf16> to vector<4x8xbf16>
    %cst_123 = arith.constant dense<0.000000e+00> : vector<4x128xf32>
    %164 = tpu.matmul %163, %153, %cst_123 {dimension_numbers = #tpu.dot_dimension_numbers<[1], [0], [0], [1], [0, 0, 1, 1], [], []>} : vector<4x8xbf16>, vector<8x128xbf16>, vector<4x128xf32> -> vector<4x128xf32>
    %165 = arith.truncf %164 : vector<4x128xf32> to vector<4x128xbf16>
    %166 = tpu.concatenate %157, %161, %165 in 1 : vector<4x128xbf16>, vector<4x128xbf16>, vector<4x128xbf16> -> vector<4x384xbf16>
    %c0_124 = arith.constant 0 : index
    %c0_125 = arith.constant 0 : index
    %167 = vector.load %arg22[%c0_124, %c0_125] : memref<384x128xbf16, #tpu.memory_space<vmem>>, vector<384x128xbf16>
    %cst_126 = arith.constant dense<0.000000e+00> : vector<4x128xf32>
    %168 = tpu.matmul %166, %167, %cst_126 {dimension_numbers = #tpu.dot_dimension_numbers<[1], [0], [0], [1], [0, 0, 1, 1], [], []>} : vector<4x384xbf16>, vector<384x128xbf16>, vector<4x128xf32> -> vector<4x128xf32>
    %cst_127 = arith.constant dense<0.000000e+00> : vector<128xf32>
    %169 = vector.multi_reduction <add>, %168, %cst_127 [0] : vector<4x128xf32> to vector<128xf32>
    %170 = vector.shape_cast %169 : vector<128xf32> to vector<1x128xf32>
    %171 = arith.mulf %168, %168 : vector<4x128xf32>
    %cst_128 = arith.constant dense<0.000000e+00> : vector<128xf32>
    %172 = vector.multi_reduction <add>, %171, %cst_128 [0] : vector<4x128xf32> to vector<128xf32>
    %173 = vector.shape_cast %172 : vector<128xf32> to vector<1x128xf32>
    %c0_129 = arith.constant 0 : index
    %c0_130 = arith.constant 0 : index
    %174 = vector.load %arg23[%c0_129, %c0_130] : memref<128x64xf32, #tpu.memory_space<vmem>>, vector<128x64xf32>
    %cst_131 = arith.constant dense<0.000000e+00> : vector<1x64xf32>
    %175 = tpu.matmul %170, %174, %cst_131 {dimension_numbers = #tpu.dot_dimension_numbers<[1], [0], [0], [1], [0, 0, 1, 1], [], []>} : vector<1x128xf32>, vector<128x64xf32>, vector<1x64xf32> -> vector<1x64xf32>
    %c0_132 = arith.constant 0 : index
    %c0_133 = arith.constant 0 : index
    %176 = vector.load %arg23[%c0_132, %c0_133] : memref<128x64xf32, #tpu.memory_space<vmem>>, vector<128x64xf32>
    %cst_134 = arith.constant dense<0.000000e+00> : vector<1x64xf32>
    %177 = tpu.matmul %173, %176, %cst_134 {dimension_numbers = #tpu.dot_dimension_numbers<[1], [0], [0], [1], [0, 0, 1, 1], [], []>} : vector<1x128xf32>, vector<128x64xf32>, vector<1x64xf32> -> vector<1x64xf32>
    %cst_135 = arith.constant 1.250000e-01 : f32
    %178 = vector.broadcast %cst_135 : f32 to vector<1x64xf32>
    %179 = arith.mulf %175, %178 : vector<1x64xf32>
    %cst_136 = arith.constant 1.250000e-01 : f32
    %180 = vector.broadcast %cst_136 : f32 to vector<1x64xf32>
    %181 = arith.mulf %177, %180 : vector<1x64xf32>
    %182 = arith.mulf %179, %179 : vector<1x64xf32>
    %183 = arith.subf %181, %182 : vector<1x64xf32>
    %cst_137 = arith.constant 0.000000e+00 : f32
    %184 = vector.broadcast %cst_137 : f32 to vector<1x64xf32>
    %185 = arith.maximumf %183, %184 : vector<1x64xf32>
    %c0_138 = arith.constant 0 : index
    %c0_139 = arith.constant 0 : index
    %186 = vector.load %arg25[%c0_138, %c0_139] : memref<1x64xf32, #tpu.memory_space<vmem>>, vector<1x64xf32>
    %cst_140 = arith.constant 9.99999974E-6 : f32
    %187 = vector.broadcast %cst_140 : f32 to vector<1x64xf32>
    %188 = arith.addf %185, %187 : vector<1x64xf32>
    %189 = math.rsqrt %188 : vector<1x64xf32>
    %190 = arith.mulf %186, %189 : vector<1x64xf32>
    %c0_141 = arith.constant 0 : index
    %c0_142 = arith.constant 0 : index
    %191 = vector.load %arg26[%c0_141, %c0_142] : memref<1x64xf32, #tpu.memory_space<vmem>>, vector<1x64xf32>
    %192 = arith.mulf %179, %190 : vector<1x64xf32>
    %193 = arith.subf %191, %192 : vector<1x64xf32>
    %c0_143 = arith.constant 0 : index
    %c0_144 = arith.constant 0 : index
    %194 = vector.load %arg24[%c0_143, %c0_144] : memref<64x128xf32, #tpu.memory_space<vmem>>, vector<64x128xf32>
    %cst_145 = arith.constant dense<0.000000e+00> : vector<1x128xf32>
    %195 = tpu.matmul %190, %194, %cst_145 {dimension_numbers = #tpu.dot_dimension_numbers<[1], [0], [0], [1], [0, 0, 1, 1], [], []>} : vector<1x64xf32>, vector<64x128xf32>, vector<1x128xf32> -> vector<1x128xf32>
    %c0_146 = arith.constant 0 : index
    %c0_147 = arith.constant 0 : index
    %196 = vector.load %arg24[%c0_146, %c0_147] : memref<64x128xf32, #tpu.memory_space<vmem>>, vector<64x128xf32>
    %cst_148 = arith.constant dense<0.000000e+00> : vector<1x128xf32>
    %197 = tpu.matmul %193, %196, %cst_148 {dimension_numbers = #tpu.dot_dimension_numbers<[1], [0], [0], [1], [0, 0, 1, 1], [], []>} : vector<1x64xf32>, vector<64x128xf32>, vector<1x128xf32> -> vector<1x128xf32>
    %198 = vector.broadcast %195 : vector<1x128xf32> to vector<4x128xf32>
    %199 = arith.mulf %168, %198 : vector<4x128xf32>
    %200 = vector.broadcast %197 : vector<1x128xf32> to vector<4x128xf32>
    %201 = arith.addf %199, %200 : vector<4x128xf32>
    %cst_149 = arith.constant 0.000000e+00 : f32
    %202 = vector.broadcast %cst_149 : f32 to vector<4x128xf32>
    %203 = arith.maximumf %201, %202 : vector<4x128xf32>
    %204 = arith.truncf %203 : vector<4x128xf32> to vector<4x128xbf16>
    %cst_150 = arith.constant 0.000000e+00 : f32
    %205 = vector.broadcast %cst_150 : f32 to vector<2x11xf32>
    %c0_151 = arith.constant 0 : index
    %c0_152 = arith.constant 0 : index
    %c0_153 = arith.constant 0 : index
    %206 = vector.load %arg27[%c0_151, %c0_152, %c0_153] : memref<2x2x4xbf16, #tpu.memory_space<vmem>>, vector<1x2x4xbf16>
    %207 = vector.shape_cast %206 : vector<1x2x4xbf16> to vector<2x4xbf16>
    %cst_154 = arith.constant dense<0.000000e+00> : vector<2x128xf32>
    %208 = tpu.matmul %207, %204, %cst_154 {dimension_numbers = #tpu.dot_dimension_numbers<[1], [0], [0], [1], [0, 0, 1, 1], [], []>} : vector<2x4xbf16>, vector<4x128xbf16>, vector<2x128xf32> -> vector<2x128xf32>
    %209 = arith.truncf %208 : vector<2x128xf32> to vector<2x128xbf16>
    %c0_155 = arith.constant 0 : index
    %c0_156 = arith.constant 0 : index
    %c0_157 = arith.constant 0 : index
    %210 = vector.load %arg28[%c0_155, %c0_156, %c0_157] : memref<2x128x11xbf16, #tpu.memory_space<vmem>>, vector<1x128x11xbf16>
    %211 = vector.shape_cast %210 : vector<1x128x11xbf16> to vector<128x11xbf16>
    %cst_158 = arith.constant dense<0.000000e+00> : vector<2x11xf32>
    %212 = tpu.matmul %209, %211, %cst_158 {dimension_numbers = #tpu.dot_dimension_numbers<[1], [0], [0], [1], [0, 0, 1, 1], [], []>} : vector<2x128xbf16>, vector<128x11xbf16>, vector<2x11xf32> -> vector<2x11xf32>
    %213 = arith.addf %205, %212 : vector<2x11xf32>
    %c1_159 = arith.constant 1 : index
    %c0_160 = arith.constant 0 : index
    %c0_161 = arith.constant 0 : index
    %214 = vector.load %arg27[%c1_159, %c0_160, %c0_161] : memref<2x2x4xbf16, #tpu.memory_space<vmem>>, vector<1x2x4xbf16>
    %215 = vector.shape_cast %214 : vector<1x2x4xbf16> to vector<2x4xbf16>
    %cst_162 = arith.constant dense<0.000000e+00> : vector<2x128xf32>
    %216 = tpu.matmul %215, %204, %cst_162 {dimension_numbers = #tpu.dot_dimension_numbers<[1], [0], [0], [1], [0, 0, 1, 1], [], []>} : vector<2x4xbf16>, vector<4x128xbf16>, vector<2x128xf32> -> vector<2x128xf32>
    %217 = arith.truncf %216 : vector<2x128xf32> to vector<2x128xbf16>
    %c1_163 = arith.constant 1 : index
    %c0_164 = arith.constant 0 : index
    %c0_165 = arith.constant 0 : index
    %218 = vector.load %arg28[%c1_163, %c0_164, %c0_165] : memref<2x128x11xbf16, #tpu.memory_space<vmem>>, vector<1x128x11xbf16>
    %219 = vector.shape_cast %218 : vector<1x128x11xbf16> to vector<128x11xbf16>
    %cst_166 = arith.constant dense<0.000000e+00> : vector<2x11xf32>
    %220 = tpu.matmul %217, %219, %cst_166 {dimension_numbers = #tpu.dot_dimension_numbers<[1], [0], [0], [1], [0, 0, 1, 1], [], []>} : vector<2x128xbf16>, vector<128x11xbf16>, vector<2x11xf32> -> vector<2x11xf32>
    %221 = arith.addf %213, %220 : vector<2x11xf32>
    %c0_167 = arith.constant 0 : index
    %c0_168 = arith.constant 0 : index
    %222 = vector.load %arg2[%c0_167, %c0_168] : memref<2x19xf32, #tpu.memory_space<vmem>>, vector<2x19xf32>
    %223 = arith.truncf %222 : vector<2x19xf32> to vector<2x19xbf16>
    %c0_169 = arith.constant 0 : index
    %c0_170 = arith.constant 0 : index
    %224 = vector.load %arg29[%c0_169, %c0_170] : memref<19x11xbf16, #tpu.memory_space<vmem>>, vector<19x11xbf16>
    %cst_171 = arith.constant dense<0.000000e+00> : vector<2x11xf32>
    %225 = tpu.matmul %223, %224, %cst_171 {dimension_numbers = #tpu.dot_dimension_numbers<[1], [0], [0], [1], [0, 0, 1, 1], [], []>} : vector<2x19xbf16>, vector<19x11xbf16>, vector<2x11xf32> -> vector<2x11xf32>
    %226 = arith.addf %221, %225 : vector<2x11xf32>
    %c0_172 = arith.constant 0 : index
    %c0_173 = arith.constant 0 : index
    %227 = vector.load %arg30[%c0_172, %c0_173] : memref<1x11xf32, #tpu.memory_space<vmem>>, vector<1x11xf32>
    %228 = vector.broadcast %227 : vector<1x11xf32> to vector<2x11xf32>
    %229 = arith.addf %226, %228 : vector<2x11xf32>
    %c0_174 = arith.constant 0 : index
    %c0_175 = arith.constant 0 : index
    %230 = vector.load %arg31[%c0_174, %c0_175] : memref<2x11xf32, #tpu.memory_space<vmem>>, vector<2x11xf32>
    tpu.vector_store %arg31[%c0_174, %c0_175], %229 {strides = array<i32>} : memref<2x11xf32, #tpu.memory_space<vmem>>, vector<2x11xf32>,
    return
  }
  func.func @transform_0(%arg0: i32) -> (i32, i32) {
    %c0_i32 = arith.constant 0 : i32
    %c0_i32_0 = arith.constant 0 : i32
    %c0_i32_1 = arith.constant 0 : i32
    return %c0_i32, %c0_i32_0 : i32, i32
  }
  func.func @transform_1(%arg0: i32) -> (i32, i32) {
    %c0_i32 = arith.constant 0 : i32
    %c0_i32_0 = arith.constant 0 : i32
    %c0_i32_1 = arith.constant 0 : i32
    return %c0_i32, %c0_i32_0 : i32, i32
  }
  func.func @transform_2(%arg0: i32) -> (i32, i32, i32) {
    %c0_i32 = arith.constant 0 : i32
    %c0_i32_0 = arith.constant 0 : i32
    %c0_i32_1 = arith.constant 0 : i32
    %c0_i32_2 = arith.constant 0 : i32
    return %c0_i32, %c0_i32_0, %c0_i32_1 : i32, i32, i32
  }
  func.func @transform_3(%arg0: i32) -> (i32, i32) {
    %c0_i32 = arith.constant 0 : i32
    %c0_i32_0 = arith.constant 0 : i32
    %c0_i32_1 = arith.constant 0 : i32
    return %c0_i32, %c0_i32_0 : i32, i32
  }
  func.func @transform_4(%arg0: i32) -> (i32, i32) {
    %c0_i32 = arith.constant 0 : i32
    %c0_i32_0 = arith.constant 0 : i32
    %c0_i32_1 = arith.constant 0 : i32
    return %c0_i32, %c0_i32_0 : i32, i32
  }
  func.func @transform_5(%arg0: i32) -> (i32, i32) {
    %c0_i32 = arith.constant 0 : i32
    %c0_i32_0 = arith.constant 0 : i32
    %c0_i32_1 = arith.constant 0 : i32
    return %c0_i32, %c0_i32_0 : i32, i32
  }
  func.func @transform_6(%arg0: i32) -> (i32, i32) {
    %c0_i32 = arith.constant 0 : i32
    %c0_i32_0 = arith.constant 0 : i32
    %c0_i32_1 = arith.constant 0 : i32
    return %c0_i32, %c0_i32_0 : i32, i32
  }
  func.func @transform_7(%arg0: i32) -> (i32, i32) {
    %c0_i32 = arith.constant 0 : i32
    %c0_i32_0 = arith.constant 0 : i32
    %c0_i32_1 = arith.constant 0 : i32
    return %c0_i32, %c0_i32_0 : i32, i32
  }
  func.func @transform_8(%arg0: i32) -> (i32, i32, i32) {
    %c0_i32 = arith.constant 0 : i32
    %c0_i32_0 = arith.constant 0 : i32
    %c0_i32_1 = arith.constant 0 : i32
    %c0_i32_2 = arith.constant 0 : i32
    return %c0_i32, %c0_i32_0, %c0_i32_1 : i32, i32, i32
  }
  func.func @transform_9(%arg0: i32) -> (i32, i32) {
    %c0_i32 = arith.constant 0 : i32
    %c0_i32_0 = arith.constant 0 : i32
    %c0_i32_1 = arith.constant 0 : i32
    return %c0_i32, %c0_i32_0 : i32, i32
  }
  func.func @transform_10(%arg0: i32) -> (i32, i32) {
    %c0_i32 = arith.constant 0 : i32
    %c0_i32_0 = arith.constant 0 : i32
    %c0_i32_1 = arith.constant 0 : i32
    return %c0_i32, %c0_i32_0 : i32, i32
  }
  func.func @transform_11(%arg0: i32) -> (i32, i32) {
    %c0_i32 = arith.constant 0 : i32
    %c0_i32_0 = arith.constant 0 : i32
    %c0_i32_1 = arith.constant 0 : i32
    return %c0_i32, %c0_i32_0 : i32, i32
  }
  func.func @transform_12(%arg0: i32) -> (i32, i32) {
    %c0_i32 = arith.constant 0 : i32
    %c0_i32_0 = arith.constant 0 : i32
    %c0_i32_1 = arith.constant 0 : i32
    return %c0_i32, %c0_i32_0 : i32, i32
  }
  func.func @transform_13(%arg0: i32) -> (i32, i32) {
    %c0_i32 = arith.constant 0 : i32
    %c0_i32_0 = arith.constant 0 : i32
    %c0_i32_1 = arith.constant 0 : i32
    return %c0_i32, %c0_i32_0 : i32, i32
  }
  func.func @transform_14(%arg0: i32) -> (i32, i32, i32) {
    %c0_i32 = arith.constant 0 : i32
    %c0_i32_0 = arith.constant 0 : i32
    %c0_i32_1 = arith.constant 0 : i32
    %c0_i32_2 = arith.constant 0 : i32
    return %c0_i32, %c0_i32_0, %c0_i32_1 : i32, i32, i32
  }
  func.func @transform_15(%arg0: i32) -> (i32, i32) {
    %c0_i32 = arith.constant 0 : i32
    %c0_i32_0 = arith.constant 0 : i32
    %c0_i32_1 = arith.constant 0 : i32
    return %c0_i32, %c0_i32_0 : i32, i32
  }
  func.func @transform_16(%arg0: i32) -> (i32, i32) {
    %c0_i32 = arith.constant 0 : i32
    %c0_i32_0 = arith.constant 0 : i32
    %c0_i32_1 = arith.constant 0 : i32
    return %c0_i32, %c0_i32_0 : i32, i32
  }
  func.func @transform_17(%arg0: i32) -> (i32, i32) {
    %c0_i32 = arith.constant 0 : i32
    %c0_i32_0 = arith.constant 0 : i32
    %c0_i32_1 = arith.constant 0 : i32
    return %c0_i32, %c0_i32_0 : i32, i32
  }
  func.func @transform_18(%arg0: i32) -> (i32, i32) {
    %c0_i32 = arith.constant 0 : i32
    %c0_i32_0 = arith.constant 0 : i32
    %c0_i32_1 = arith.constant 0 : i32
    return %c0_i32, %c0_i32_0 : i32, i32
  }
  func.func @transform_19(%arg0: i32) -> (i32, i32) {
    %c0_i32 = arith.constant 0 : i32
    %c0_i32_0 = arith.constant 0 : i32
    %c0_i32_1 = arith.constant 0 : i32
    return %c0_i32, %c0_i32_0 : i32, i32
  }
  func.func @transform_20(%arg0: i32) -> (i32, i32, i32) {
    %c0_i32 = arith.constant 0 : i32
    %c0_i32_0 = arith.constant 0 : i32
    %c0_i32_1 = arith.constant 0 : i32
    %c0_i32_2 = arith.constant 0 : i32
    return %c0_i32, %c0_i32_0, %c0_i32_1 : i32, i32, i32
  }
  func.func @transform_21(%arg0: i32) -> (i32, i32) {
    %c0_i32 = arith.constant 0 : i32
    %c0_i32_0 = arith.constant 0 : i32
    %c0_i32_1 = arith.constant 0 : i32
    return %c0_i32, %c0_i32_0 : i32, i32
  }
  func.func @transform_22(%arg0: i32) -> (i32, i32) {
    %c0_i32 = arith.constant 0 : i32
    %c0_i32_0 = arith.constant 0 : i32
    %c0_i32_1 = arith.constant 0 : i32
    return %c0_i32, %c0_i32_0 : i32, i32
  }
  func.func @transform_23(%arg0: i32) -> (i32, i32) {
    %c0_i32 = arith.constant 0 : i32
    %c0_i32_0 = arith.constant 0 : i32
    %c0_i32_1 = arith.constant 0 : i32
    return %c0_i32, %c0_i32_0 : i32, i32
  }
  func.func @transform_24(%arg0: i32) -> (i32, i32) {
    %c0_i32 = arith.constant 0 : i32
    %c0_i32_0 = arith.constant 0 : i32
    %c0_i32_1 = arith.constant 0 : i32
    return %c0_i32, %c0_i32_0 : i32, i32
  }
  func.func @transform_25(%arg0: i32) -> (i32, i32) {
    %c0_i32 = arith.constant 0 : i32
    %c0_i32_0 = arith.constant 0 : i32
    %c0_i32_1 = arith.constant 0 : i32
    return %c0_i32, %c0_i32_0 : i32, i32
  }
  func.func @transform_26(%arg0: i32) -> (i32, i32, i32) {
    %c0_i32 = arith.constant 0 : i32
    %c0_i32_0 = arith.constant 0 : i32
    %c0_i32_1 = arith.constant 0 : i32
    %c0_i32_2 = arith.constant 0 : i32
    return %c0_i32, %c0_i32_0, %c0_i32_1 : i32, i32, i32
  }
  func.func @transform_27(%arg0: i32) -> (i32, i32, i32) {
    %c0_i32 = arith.constant 0 : i32
    %c0_i32_0 = arith.constant 0 : i32
    %c0_i32_1 = arith.constant 0 : i32
    %c0_i32_2 = arith.constant 0 : i32
    return %c0_i32, %c0_i32_0, %c0_i32_1 : i32, i32, i32
  }
  func.func @transform_28(%arg0: i32) -> (i32, i32) {
    %c0_i32 = arith.constant 0 : i32
    %c0_i32_0 = arith.constant 0 : i32
    %c0_i32_1 = arith.constant 0 : i32
    return %c0_i32, %c0_i32_0 : i32, i32
  }
  func.func @transform_29(%arg0: i32) -> (i32, i32) {
    %c0_i32 = arith.constant 0 : i32
    %c0_i32_0 = arith.constant 0 : i32
    %c0_i32_1 = arith.constant 0 : i32
    return %c0_i32, %c0_i32_0 : i32, i32
  }
  func.func @transform_30(%arg0: i32) -> (i32, i32) {
    %c0_i32 = arith.constant 0 : i32
    %c0_i32_0 = arith.constant 0 : i32
    %c0_i32_1 = arith.constant 0 : i32
    return %c0_i32, %c0_i32_0 : i32, i32
  }
}

</mosaic_0001>

<llo_original>
// kernel: forward.1
$region0: #{forward.1}
  #allocation0 [shape = 'u32[]', space=smem, size = 0x4, offset = 0x4, fixed_abs, tag = 'smem constant byte address 0x4 - core index']
  #allocation1 [shape = 'u32[144,128]{1,0:T(1,128)}', space=vmem, size = 0x12000, scoped, tag = 'internal scratch']
  %s0 = inlined_call_operand.smem [shape: u32[31], index: -1, kind: input, shape index: {}]
  %s1 = sld [smem:[%s0]]
  %s2 = scalar_lea.smem %s0, 1
  %s3 = sld [smem:[%s2]]
  %s4 = scalar_lea.smem %s0, 2
  %s5 = sld [smem:[%s4]]
  %s6 = scalar_lea.smem %s0, 3
  %s7 = sld [smem:[%s6]]
  %s8 = scalar_lea.smem %s0, 4
  %s9 = sld [smem:[%s8]]
  %s10 = scalar_lea.smem %s0, 5
  %s11 = sld [smem:[%s10]]
  %s12 = scalar_lea.smem %s0, 6
  %s13 = sld [smem:[%s12]]
  %s14 = scalar_lea.smem %s0, 7
  %s15 = sld [smem:[%s14]]
  %s16 = scalar_lea.smem %s0, 8
  %s17 = sld [smem:[%s16]]
  %s18 = scalar_lea.smem %s0, 9
  %s19 = sld [smem:[%s18]]
  %s20 = scalar_lea.smem %s0, 10
  %s21 = sld [smem:[%s20]]
  %s22 = scalar_lea.smem %s0, 11
  %s23 = sld [smem:[%s22]]
  %s24 = scalar_lea.smem %s0, 12
  %s25 = sld [smem:[%s24]]
  %s26 = scalar_lea.smem %s0, 13
  %s27 = sld [smem:[%s26]]
  %s28 = scalar_lea.smem %s0, 14
  %s29 = sld [smem:[%s28]]
  %s30 = scalar_lea.smem %s0, 15
  %s31 = sld [smem:[%s30]]
  %s32 = scalar_lea.smem %s0, 16
  %s33 = sld [smem:[%s32]]
  %s34 = scalar_lea.smem %s0, 17
  %s35 = sld [smem:[%s34]]
  %s36 = scalar_lea.smem %s0, 18
  %s37 = sld [smem:[%s36]]
  %s38 = scalar_lea.smem %s0, 19
  %s39 = sld [smem:[%s38]]
  %s40 = scalar_lea.smem %s0, 20
  %s41 = sld [smem:[%s40]]
  %s42 = scalar_lea.smem %s0, 21
  %s43 = sld [smem:[%s42]]
  %s44 = scalar_lea.smem %s0, 22
  %s45 = sld [smem:[%s44]]
  %s46 = scalar_lea.smem %s0, 23
  %s47 = sld [smem:[%s46]]
  %s48 = scalar_lea.smem %s0, 24
  %s49 = sld [smem:[%s48]]
  %s50 = scalar_lea.smem %s0, 25
  %s51 = sld [smem:[%s50]]
  %s52 = scalar_lea.smem %s0, 26
  %s53 = sld [smem:[%s52]]
  %s54 = scalar_lea.smem %s0, 27
  %s55 = sld [smem:[%s54]]
  %s56 = scalar_lea.smem %s0, 28
  %s57 = sld [smem:[%s56]]
  %s58 = scalar_lea.smem %s0, 29
  %s59 = sld [smem:[%s58]]
  %s60 = scalar_lea.smem %s0, 30
  %s61 = sld [smem:[%s60]]
  %s62 = sld [smem:[#allocation0]]
  $region130: #{forward.1} parent=0
    _
  %s64 = ssub.s32 1, %s62
  %s65 = scalar_select 0, %s64, %s62
  $region1: #{forward.1} parent=0
    #allocation2 [shape = 'u8[1024]{0}', space=vmem, size = 0x400, scoped, tag = 'output window, operand 0, single buffered']
    #allocation3 [shape = 's32[1]{0}', space=sflag, size = 0x4, scoped, tag = 'scoped memory for forward.1']
    %66 = vsyncpa [#allocation3], 0
    // Predicated region
    $region2: #{forward.1} parent=1 // pred_check
      _
    $region3: #{forward.1} parent=1 // pred_check_branch
      %68 = sbr.rel (0) target = $region5
    $region4: #{forward.1} parent=1 // pred_region
      _
    $region5: #{forward.1} parent=1 // pred_fallthru
      _
    // Predicated region
    $region6: #{forward.1} parent=1 // pred_check
      _
    $region7: #{forward.1} parent=1 // pred_check_branch
      %70 = sbr.rel (0) target = $region9
    $region8: #{forward.1} parent=1 // pred_region
      _
    $region9: #{forward.1} parent=1 // pred_fallthru
      _
    // Predicated region
    $region10: #{forward.1} parent=1 // pred_check
      _
    $region11: #{forward.1} parent=1 // pred_check_branch
      %72 = sbr.rel (0) target = $region13
    $region12: #{forward.1} parent=1 // pred_region
      _
    $region13: #{forward.1} parent=1 // pred_fallthru
      _
    // Predicated region
    $region14: #{forward.1} parent=1 // pred_check
      _
    $region15: #{forward.1} parent=1 // pred_check_branch
      %74 = sbr.rel (0) target = $region17
    $region16: #{forward.1} parent=1 // pred_region
      _
    $region17: #{forward.1} parent=1 // pred_fallthru
      _
    // Predicated region
    $region18: #{forward.1} parent=1 // pred_check
      _
    $region19: #{forward.1} parent=1 // pred_check_branch
      %76 = sbr.rel (0) target = $region21
    $region20: #{forward.1} parent=1 // pred_region
      _
    $region21: #{forward.1} parent=1 // pred_fallthru
      _
    // Predicated region
    $region22: #{forward.1} parent=1 // pred_check
      _
    $region23: #{forward.1} parent=1 // pred_check_branch
      %78 = sbr.rel (0) target = $region25
    $region24: #{forward.1} parent=1 // pred_region
      _
    $region25: #{forward.1} parent=1 // pred_fallthru
      _
    // Predicated region
    $region26: #{forward.1} parent=1 // pred_check
      _
    $region27: #{forward.1} parent=1 // pred_check_branch
      %80 = sbr.rel (0) target = $region29
    $region28: #{forward.1} parent=1 // pred_region
      _
    $region29: #{forward.1} parent=1 // pred_fallthru
      _
    // Predicated region
    $region30: #{forward.1} parent=1 // pred_check
      _
    $region31: #{forward.1} parent=1 // pred_check_branch
      %82 = sbr.rel (0) target = $region33
    $region32: #{forward.1} parent=1 // pred_region
      _
    $region33: #{forward.1} parent=1 // pred_fallthru
      _
    // Predicated region
    $region34: #{forward.1} parent=1 // pred_check
      _
    $region35: #{forward.1} parent=1 // pred_check_branch
      %84 = sbr.rel (0) target = $region37
    $region36: #{forward.1} parent=1 // pred_region
      _
    $region37: #{forward.1} parent=1 // pred_fallthru
      _
    // Predicated region
    $region38: #{forward.1} parent=1 // pred_check
      _
    $region39: #{forward.1} parent=1 // pred_check_branch
      %86 = sbr.rel (0) target = $region41
    $region40: #{forward.1} parent=1 // pred_region
      _
    $region41: #{forward.1} parent=1 // pred_fallthru
      _
    // Predicated region
    $region42: #{forward.1} parent=1 // pred_check
      _
    $region43: #{forward.1} parent=1 // pred_check_branch
      %88 = sbr.rel (0) target = $region45
    $region44: #{forward.1} parent=1 // pred_region
      _
    $region45: #{forward.1} parent=1 // pred_fallthru
      _
    // Predicated region
    $region46: #{forward.1} parent=1 // pred_check
      _
    $region47: #{forward.1} parent=1 // pred_check_branch
      %90 = sbr.rel (0) target = $region49
    $region48: #{forward.1} parent=1 // pred_region
      _
    $region49: #{forward.1} parent=1 // pred_fallthru
      _
    // Predicated region
    $region50: #{forward.1} parent=1 // pred_check
      _
    $region51: #{forward.1} parent=1 // pred_check_branch
      %92 = sbr.rel (0) target = $region53
    $region52: #{forward.1} parent=1 // pred_region
      _
    $region53: #{forward.1} parent=1 // pred_fallthru
      _
    // Predicated region
    $region54: #{forward.1} parent=1 // pred_check
      _
    $region55: #{forward.1} parent=1 // pred_check_branch
      %94 = sbr.rel (0) target = $region57
    $region56: #{forward.1} parent=1 // pred_region
      _
    $region57: #{forward.1} parent=1 // pred_fallthru
      _
    // Predicated region
    $region58: #{forward.1} parent=1 // pred_check
      _
    $region59: #{forward.1} parent=1 // pred_check_branch
      %96 = sbr.rel (0) target = $region61
    $region60: #{forward.1} parent=1 // pred_region
      _
    $region61: #{forward.1} parent=1 // pred_fallthru
      _
    // Predicated region
    $region62: #{forward.1} parent=1 // pred_check
      _
    $region63: #{forward.1} parent=1 // pred_check_branch
      %98 = sbr.rel (0) target = $region65
    $region64: #{forward.1} parent=1 // pred_region
      _
    $region65: #{forward.1} parent=1 // pred_fallthru
      _
    // Predicated region
    $region66: #{forward.1} parent=1 // pred_check
      _
    $region67: #{forward.1} parent=1 // pred_check_branch
      %100 = sbr.rel (0) target = $region69
    $region68: #{forward.1} parent=1 // pred_region
      _
    $region69: #{forward.1} parent=1 // pred_fallthru
      _
    // Predicated region
    $region70: #{forward.1} parent=1 // pred_check
      _
    $region71: #{forward.1} parent=1 // pred_check_branch
      %102 = sbr.rel (0) target = $region73
    $region72: #{forward.1} parent=1 // pred_region
      _
    $region73: #{forward.1} parent=1 // pred_fallthru
      _
    // Predicated region
    $region74: #{forward.1} parent=1 // pred_check
      _
    $region75: #{forward.1} parent=1 // pred_check_branch
      %104 = sbr.rel (0) target = $region77
    $region76: #{forward.1} parent=1 // pred_region
      _
    $region77: #{forward.1} parent=1 // pred_fallthru
      _
    // Predicated region
    $region78: #{forward.1} parent=1 // pred_check
      _
    $region79: #{forward.1} parent=1 // pred_check_branch
      %106 = sbr.rel (0) target = $region81
    $region80: #{forward.1} parent=1 // pred_region
      _
    $region81: #{forward.1} parent=1 // pred_fallthru
      _
    // Predicated region
    $region82: #{forward.1} parent=1 // pred_check
      _
    $region83: #{forward.1} parent=1 // pred_check_branch
      %108 = sbr.rel (0) target = $region85
    $region84: #{forward.1} parent=1 // pred_region
      _
    $region85: #{forward.1} parent=1 // pred_fallthru
      _
    // Predicated region
    $region86: #{forward.1} parent=1 // pred_check
      _
    $region87: #{forward.1} parent=1 // pred_check_branch
      %110 = sbr.rel (0) target = $region89
    $region88: #{forward.1} parent=1 // pred_region
      _
    $region89: #{forward.1} parent=1 // pred_fallthru
      _
    // Predicated region
    $region90: #{forward.1} parent=1 // pred_check
      _
    $region91: #{forward.1} parent=1 // pred_check_branch
      %112 = sbr.rel (0) target = $region93
    $region92: #{forward.1} parent=1 // pred_region
      _
    $region93: #{forward.1} parent=1 // pred_fallthru
      _
    // Predicated region
    $region94: #{forward.1} parent=1 // pred_check
      _
    $region95: #{forward.1} parent=1 // pred_check_branch
      %114 = sbr.rel (0) target = $region97
    $region96: #{forward.1} parent=1 // pred_region
      _
    $region97: #{forward.1} parent=1 // pred_fallthru
      _
    // Predicated region
    $region98: #{forward.1} parent=1 // pred_check
      _
    $region99: #{forward.1} parent=1 // pred_check_branch
      %116 = sbr.rel (0) target = $region101
    $region100: #{forward.1} parent=1 // pred_region
      _
    $region101: #{forward.1} parent=1 // pred_fallthru
      _
    // Predicated region
    $region102: #{forward.1} parent=1 // pred_check
      _
    $region103: #{forward.1} parent=1 // pred_check_branch
      %118 = sbr.rel (0) target = $region105
    $region104: #{forward.1} parent=1 // pred_region
      _
    $region105: #{forward.1} parent=1 // pred_fallthru
      _
    // Predicated region
    $region106: #{forward.1} parent=1 // pred_check
      _
    $region107: #{forward.1} parent=1 // pred_check_branch
      %120 = sbr.rel (0) target = $region109
    $region108: #{forward.1} parent=1 // pred_region
      _
    $region109: #{forward.1} parent=1 // pred_fallthru
      _
    // Predicated region
    $region110: #{forward.1} parent=1 // pred_check
      _
    $region111: #{forward.1} parent=1 // pred_check_branch
      %122 = sbr.rel (0) target = $region113
    $region112: #{forward.1} parent=1 // pred_region
      _
    $region113: #{forward.1} parent=1 // pred_fallthru
      _
    // Predicated region
    $region114: #{forward.1} parent=1 // pred_check
      _
    $region115: #{forward.1} parent=1 // pred_check_branch
      %124 = sbr.rel (0) target = $region117
    $region116: #{forward.1} parent=1 // pred_region
      _
    $region117: #{forward.1} parent=1 // pred_fallthru
      _
    // Predicated region
    $region118: #{forward.1} parent=1 // pred_check
      _
    $region119: #{forward.1} parent=1 // pred_check_branch
      %126 = sbr.rel (0) target = $region121
    $region120: #{forward.1} parent=1 // pred_region
      _
    $region121: #{forward.1} parent=1 // pred_fallthru
      _
    %v128 = vld [vmem:[%s1] sm:$0xf]
    %v129 = vld [vmem:[%s1 + $0x4] sm:$0xf]
    %v130 = vld [vmem:[%s1 + $0x8] sm:$0xf]
    %v131 = vld [vmem:[%s1 + $0xc] sm:$0xf]
    %v132 = vld [vmem:[%s1 + $0x10] sm:$0xf]
    %v133 = vld [vmem:[%s1 + $0x14] sm:$0xf]
    %v134 = vld [vmem:[%s1 + $0x18] sm:$0xf]
    %v135 = vld [vmem:[%s1 + $0x1c] sm:$0xf]
    %v136 = vld [vmem:[%s5] sm:$0xf]
    %v137 = vld [vmem:[%s5 + $0x4] sm:$0xf]
    %v138 = vld [vmem:[%s5 + $0x8] sm:$0xf]
    %v139 = vld [vmem:[%s5 + $0xc] sm:$0xf]
    %v144 = vunpack.c.l.b16 %v136
    %v145 = vunpack.c.l.b16 %v137
    %v146 = vunpack.c.l.b16 %v138
    %v147 = vunpack.c.l.b16 %v139
    %v148 = vpack.c.b16 %v145, %v144
    %v149 = vpack.c.b16 %v147, %v146
    %v158 = vunpack.c.l.b16 %v128
    %v159 = vunpack.c.l.b16 %v129
    %v160 = vunpack.c.l.b16 %v130
    %v161 = vunpack.c.l.b16 %v131
    %v162 = vunpack.c.l.b16 %v132
    %v163 = vunpack.c.l.b16 %v133
    %v164 = vunpack.c.l.b16 %v134
    %v165 = vunpack.c.l.b16 %v135
    %v166 = vpack.c.b16 %v159, %v158
    %v167 = vpack.c.b16 %v161, %v160
    %v168 = vpack.c.b16 %v163, %v162
    %v169 = vpack.c.b16 %v165, %v164
    %vm174 = vcmask 523264
    %v176 = vsel %vm174, %v148, 0
    %v179 = vsel %vm174, %v149, 0
    %181 = vmatprep.subr.bf16.mxu0 0
    %182 = vmatpush1.bf16.msra.mxu0 0
    %183 = vmatprep.subr.bf16.mxu0 0
    %184 = vmatpush1.bf16.msra.mxu0 0
    %185 = vmatprep.subr.bf16.mxu0 0
    %186 = vmatpush1.bf16.msra.mxu0 0
    %187 = vmatprep.subr.bf16.mxu0 0
    %188 = vmatpush1.bf16.msra.mxu0 0
    %189 = vmatprep.subr.bf16.mxu0 0
    %190 = vmatpush1.bf16.msra.mxu0 %v169
    %191 = vmatprep.subr.bf16.mxu0 0
    %192 = vmatpush1.bf16.msra.mxu0 %v168
    %193 = vmatprep.subr.bf16.mxu0 0
    %194 = vmatpush1.bf16.msra.mxu0 %v167
    %195 = vmatprep.subr.bf16.mxu0 0
    %196 = vmatpush1.bf16.msra.mxu0 %v166
    %197 = vmatprep.subr.bf16.mxu0 0
    %198 = vmatpush2.bf16.msra.mxu0 0
    %199 = vmatprep.subr.bf16.mxu0 0
    %200 = vmatpush2.bf16.msra.mxu0 0
    %201 = vmatprep.subr.bf16.mxu0 0
    %202 = vmatpush2.bf16.msra.mxu0 0
    %203 = vmatprep.subr.bf16.mxu0 0
    %204 = vmatpush2.bf16.msra.mxu0 0
    %205 = vmatprep.subr.bf16.mxu0 0
    %206 = vmatpush2.bf16.msra.mxu0 0
    %207 = vmatprep.subr.bf16.mxu0 0
    %208 = vmatpush2.bf16.msra.mxu0 0
    %209 = vmatprep.subr.bf16.mxu0 0
    %210 = vmatpush2.bf16.msra.mxu0 0
    %211 = vmatprep.subr.bf16.mxu0 0
    %212 = vmatpush2.bf16.msra.mxu0 0
    %213 = vmatprep.mubr.bf16.mxu0 0
    %214 = vmatmul.mubr.bf16.gmra.mxu0 %v176
    %v215 = vpop.f32.mrf.mxu0
    %v216 = vadd.f32 0.0, %v215
    %v217 = vpop.f32.mrf.mxu0
    %v218 = vpop.f32.mrf.mxu0
    %v219 = vadd.f32 0.0, %v218
    %v220 = vpop.f32.mrf.mxu0
    %221 = vmatprep.mubr.bf16.mxu0 0
    %222 = vmatmul.mubr.bf16.gmra.mxu0 %v179
    %v223 = vpop.f32.mrf.mxu0
    %v224 = vadd.f32 0.0, %v223
    %v225 = vpop.f32.mrf.mxu0
    %v226 = vpop.f32.mrf.mxu0
    %v227 = vadd.f32 0.0, %v226
    %v228 = vpop.f32.mrf.mxu0
    %229 = vdwg.mxu0
    %v230 = vpack.c.bf16 %v219, %v216
    %v231 = vpack.c.bf16 %v227, %v224
    %s232 = scalar_lea.vmem %s5, 16
    %v233 = vld [vmem:[%s232] sm:$0xf]
    %v234 = vld [vmem:[%s232 + $0x4] sm:$0xf]
    %v235 = vld [vmem:[%s232 + $0x8] sm:$0xf]
    %v236 = vld [vmem:[%s232 + $0xc] sm:$0xf]
    %v241 = vunpack.c.l.b16 %v233
    %v242 = vunpack.c.l.b16 %v234
    %v243 = vunpack.c.l.b16 %v235
    %v244 = vunpack.c.l.b16 %v236
    %v245 = vpack.c.b16 %v242, %v241
    %v246 = vpack.c.b16 %v244, %v243
    %v248 = vsel %vm174, %v245, 0
    %v251 = vsel %vm174, %v246, 0
    %253 = vmatprep.subr.bf16.mxu0 0
    %254 = vmatpush1.bf16.msra.mxu0 0
    %255 = vmatprep.subr.bf16.mxu0 0
    %256 = vmatpush1.bf16.msra.mxu0 0
    %257 = vmatprep.subr.bf16.mxu0 0
    %258 = vmatpush1.bf16.msra.mxu0 0
    %259 = vmatprep.subr.bf16.mxu0 0
    %260 = vmatpush1.bf16.msra.mxu0 0
    %261 = vmatprep.subr.bf16.mxu0 0
    %262 = vmatpush1.bf16.msra.mxu0 %v169
    %263 = vmatprep.subr.bf16.mxu0 0
    %264 = vmatpush1.bf16.msra.mxu0 %v168
    %265 = vmatprep.subr.bf16.mxu0 0
    %266 = vmatpush1.bf16.msra.mxu0 %v167
    %267 = vmatprep.subr.bf16.mxu0 0
    %268 = vmatpush1.bf16.msra.mxu0 %v166
    %269 = vmatprep.subr.bf16.mxu0 0
    %270 = vmatpush2.bf16.msra.mxu0 0
    %271 = vmatprep.subr.bf16.mxu0 0
    %272 = vmatpush2.bf16.msra.mxu0 0
    %273 = vmatprep.subr.bf16.mxu0 0
    %274 = vmatpush2.bf16.msra.mxu0 0
    %275 = vmatprep.subr.bf16.mxu0 0
    %276 = vmatpush2.bf16.msra.mxu0 0
    %277 = vmatprep.subr.bf16.mxu0 0
    %278 = vmatpush2.bf16.msra.mxu0 0
    %279 = vmatprep.subr.bf16.mxu0 0
    %280 = vmatpush2.bf16.msra.mxu0 0
    %281 = vmatprep.subr.bf16.mxu0 0
    %282 = vmatpush2.bf16.msra.mxu0 0
    %283 = vmatprep.subr.bf16.mxu0 0
    %284 = vmatpush2.bf16.msra.mxu0 0
    %285 = vmatprep.mubr.bf16.mxu0 0
    %286 = vmatmul.mubr.bf16.gmra.mxu0 %v248
    %v287 = vpop.f32.mrf.mxu0
    %v288 = vadd.f32 0.0, %v287
    %v289 = vpop.f32.mrf.mxu0
    %v290 = vpop.f32.mrf.mxu0
    %v291 = vadd.f32 0.0, %v290
    %v292 = vpop.f32.mrf.mxu0
    %293 = vmatprep.mubr.bf16.mxu0 0
    %294 = vmatmul.mubr.bf16.gmra.mxu0 %v251
    %v295 = vpop.f32.mrf.mxu0
    %v296 = vadd.f32 0.0, %v295
    %v297 = vpop.f32.mrf.mxu0
    %v298 = vpop.f32.mrf.mxu0
    %v299 = vadd.f32 0.0, %v298
    %v300 = vpop.f32.mrf.mxu0
    %301 = vdwg.mxu0
    %v302 = vpack.c.bf16 %v291, %v288
    %v303 = vpack.c.bf16 %v299, %v296
    %s304 = scalar_lea.vmem %s5, 32
    %v305 = vld [vmem:[%s304] sm:$0xf]
    %v306 = vld [vmem:[%s304 + $0x4] sm:$0xf]
    %v307 = vld [vmem:[%s304 + $0x8] sm:$0xf]
    %v308 = vld [vmem:[%s304 + $0xc] sm:$0xf]
    %v313 = vunpack.c.l.b16 %v305
    %v314 = vunpack.c.l.b16 %v306
    %v315 = vunpack.c.l.b16 %v307
    %v316 = vunpack.c.l.b16 %v308
    %v317 = vpack.c.b16 %v314, %v313
    %v318 = vpack.c.b16 %v316, %v315
    %v320 = vsel %vm174, %v317, 0
    %v323 = vsel %vm174, %v318, 0
    %325 = vmatprep.subr.bf16.mxu0 0
    %326 = vmatpush1.bf16.msra.mxu0 0
    %327 = vmatprep.subr.bf16.mxu0 0
    %328 = vmatpush1.bf16.msra.mxu0 0
    %329 = vmatprep.subr.bf16.mxu0 0
    %330 = vmatpush1.bf16.msra.mxu0 0
    %331 = vmatprep.subr.bf16.mxu0 0
    %332 = vmatpush1.bf16.msra.mxu0 0
    %333 = vmatprep.subr.bf16.mxu0 0
    %334 = vmatpush1.bf16.msra.mxu0 %v169
    %335 = vmatprep.subr.bf16.mxu0 0
    %336 = vmatpush1.bf16.msra.mxu0 %v168
    %337 = vmatprep.subr.bf16.mxu0 0
    %338 = vmatpush1.bf16.msra.mxu0 %v167
    %339 = vmatprep.subr.bf16.mxu0 0
    %340 = vmatpush1.bf16.msra.mxu0 %v166
    %341 = vmatprep.subr.bf16.mxu0 0
    %342 = vmatpush2.bf16.msra.mxu0 0
    %343 = vmatprep.subr.bf16.mxu0 0
    %344 = vmatpush2.bf16.msra.mxu0 0
    %345 = vmatprep.subr.bf16.mxu0 0
    %346 = vmatpush2.bf16.msra.mxu0 0
    %347 = vmatprep.subr.bf16.mxu0 0
    %348 = vmatpush2.bf16.msra.mxu0 0
    %349 = vmatprep.subr.bf16.mxu0 0
    %350 = vmatpush2.bf16.msra.mxu0 0
    %351 = vmatprep.subr.bf16.mxu0 0
    %352 = vmatpush2.bf16.msra.mxu0 0
    %353 = vmatprep.subr.bf16.mxu0 0
    %354 = vmatpush2.bf16.msra.mxu0 0
    %355 = vmatprep.subr.bf16.mxu0 0
    %356 = vmatpush2.bf16.msra.mxu0 0
    %357 = vmatprep.mubr.bf16.mxu0 0
    %358 = vmatmul.mubr.bf16.gmra.mxu0 %v320
    %v359 = vpop.f32.mrf.mxu0
    %v360 = vadd.f32 0.0, %v359
    %v361 = vpop.f32.mrf.mxu0
    %v362 = vpop.f32.mrf.mxu0
    %v363 = vadd.f32 0.0, %v362
    %v364 = vpop.f32.mrf.mxu0
    %365 = vmatprep.mubr.bf16.mxu0 0
    %366 = vmatmul.mubr.bf16.gmra.mxu0 %v323
    %v367 = vpop.f32.mrf.mxu0
    %v368 = vadd.f32 0.0, %v367
    %v369 = vpop.f32.mrf.mxu0
    %v370 = vpop.f32.mrf.mxu0
    %v371 = vadd.f32 0.0, %v370
    %v372 = vpop.f32.mrf.mxu0
    %373 = vdwg.mxu0
    %v374 = vpack.c.bf16 %v363, %v360
    %v375 = vpack.c.bf16 %v371, %v368
    %v376 = vld [vmem:[%s7] sm:$0xf]
    %v377 = vld [vmem:[%s7 + $0x4] sm:$0xf]
    %v378 = vld [vmem:[%s7 + $0x8] sm:$0xf]
    %v379 = vld [vmem:[%s7 + $0xc] sm:$0xf]
    %v380 = vld [vmem:[%s7 + $0x10] sm:$0xf]
    %v381 = vld [vmem:[%s7 + $0x14] sm:$0xf]
    %v382 = vld [vmem:[%s7 + $0x18] sm:$0xf]
    %v383 = vld [vmem:[%s7 + $0x1c] sm:$0xf]
    %v384 = vld [vmem:[%s7 + $0x20] sm:$0xf]
    %v385 = vld [vmem:[%s7 + $0x24] sm:$0xf]
    %v386 = vld [vmem:[%s7 + $0x28] sm:$0xf]
    %v387 = vld [vmem:[%s7 + $0x2c] sm:$0xf]
    %v388 = vld [vmem:[%s7 + $0x30] sm:$0xf]
    %v389 = vld [vmem:[%s7 + $0x34] sm:$0xf]
    %v390 = vld [vmem:[%s7 + $0x38] sm:$0xf]
    %v391 = vld [vmem:[%s7 + $0x3c] sm:$0xf]
    %v392 = vld [vmem:[%s7 + $0x40] sm:$0xf]
    %v393 = vld [vmem:[%s7 + $0x44] sm:$0xf]
    %v394 = vld [vmem:[%s7 + $0x48] sm:$0xf]
    %v395 = vld [vmem:[%s7 + $0x4c] sm:$0xf]
    %v396 = vld [vmem:[%s7 + $0x50] sm:$0xf]
    %v397 = vld [vmem:[%s7 + $0x54] sm:$0xf]
    %v398 = vld [vmem:[%s7 + $0x58] sm:$0xf]
    %v399 = vld [vmem:[%s7 + $0x5c] sm:$0xf]
    %v400 = vld [vmem:[%s7 + $0x60] sm:$0xf]
    %v401 = vld [vmem:[%s7 + $0x64] sm:$0xf]
    %v402 = vld [vmem:[%s7 + $0x68] sm:$0xf]
    %v403 = vld [vmem:[%s7 + $0x6c] sm:$0xf]
    %v404 = vld [vmem:[%s7 + $0x70] sm:$0xf]
    %v405 = vld [vmem:[%s7 + $0x74] sm:$0xf]
    %v406 = vld [vmem:[%s7 + $0x78] sm:$0xf]
    %v407 = vld [vmem:[%s7 + $0x7c] sm:$0xf]
    %v408 = vld [vmem:[%s7 + $0x80] sm:$0xf]
    %v409 = vld [vmem:[%s7 + $0x84] sm:$0xf]
    %v410 = vld [vmem:[%s7 + $0x88] sm:$0xf]
    %v411 = vld [vmem:[%s7 + $0x8c] sm:$0xf]
    %v412 = vld [vmem:[%s7 + $0x90] sm:$0xf]
    %v413 = vld [vmem:[%s7 + $0x94] sm:$0xf]
    %v414 = vld [vmem:[%s7 + $0x98] sm:$0xf]
    %v415 = vld [vmem:[%s7 + $0x9c] sm:$0xf]
    %v416 = vld [vmem:[%s7 + $0xa0] sm:$0xf]
    %v417 = vld [vmem:[%s7 + $0xa4] sm:$0xf]
    %v418 = vld [vmem:[%s7 + $0xa8] sm:$0xf]
    %v419 = vld [vmem:[%s7 + $0xac] sm:$0xf]
    %v420 = vld [vmem:[%s7 + $0xb0] sm:$0xf]
    %v421 = vld [vmem:[%s7 + $0xb4] sm:$0xf]
    %v422 = vld [vmem:[%s7 + $0xb8] sm:$0xf]
    %v423 = vld [vmem:[%s7 + $0xbc] sm:$0xf]
    %v472 = vunpack.c.l.b16 %v376
    %v473 = vunpack.c.l.b16 %v377
    %v474 = vunpack.c.l.b16 %v378
    %v475 = vunpack.c.l.b16 %v379
    %v476 = vunpack.c.l.b16 %v380
    %v477 = vunpack.c.l.b16 %v381
    %v478 = vunpack.c.l.b16 %v382
    %v479 = vunpack.c.l.b16 %v383
    %v480 = vunpack.c.l.b16 %v384
    %v481 = vunpack.c.l.b16 %v385
    %v482 = vunpack.c.l.b16 %v386
    %v483 = vunpack.c.l.b16 %v387
    %v484 = vunpack.c.l.b16 %v388
    %v485 = vunpack.c.l.b16 %v389
    %v486 = vunpack.c.l.b16 %v390
    %v487 = vunpack.c.l.b16 %v391
    %v488 = vunpack.c.l.b16 %v392
    %v489 = vunpack.c.l.b16 %v393
    %v490 = vunpack.c.l.b16 %v394
    %v491 = vunpack.c.l.b16 %v395
    %v492 = vunpack.c.l.b16 %v396
    %v493 = vunpack.c.l.b16 %v397
    %v494 = vunpack.c.l.b16 %v398
    %v495 = vunpack.c.l.b16 %v399
    %v496 = vunpack.c.l.b16 %v400
    %v497 = vunpack.c.l.b16 %v401
    %v498 = vunpack.c.l.b16 %v402
    %v499 = vunpack.c.l.b16 %v403
    %v500 = vunpack.c.l.b16 %v404
    %v501 = vunpack.c.l.b16 %v405
    %v502 = vunpack.c.l.b16 %v406
    %v503 = vunpack.c.l.b16 %v407
    %v504 = vunpack.c.l.b16 %v408
    %v505 = vunpack.c.l.b16 %v409
    %v506 = vunpack.c.l.b16 %v410
    %v507 = vunpack.c.l.b16 %v411
    %v508 = vunpack.c.l.b16 %v412
    %v509 = vunpack.c.l.b16 %v413
    %v510 = vunpack.c.l.b16 %v414
    %v511 = vunpack.c.l.b16 %v415
    %v512 = vunpack.c.l.b16 %v416
    %v513 = vunpack.c.l.b16 %v417
    %v514 = vunpack.c.l.b16 %v418
    %v515 = vunpack.c.l.b16 %v419
    %v516 = vunpack.c.l.b16 %v420
    %v517 = vunpack.c.l.b16 %v421
    %v518 = vunpack.c.l.b16 %v422
    %v519 = vunpack.c.l.b16 %v423
    %v520 = vpack.c.b16 %v473, %v472
    %v521 = vpack.c.b16 %v475, %v474
    %v522 = vpack.c.b16 %v477, %v476
    %v523 = vpack.c.b16 %v479, %v478
    %v524 = vpack.c.b16 %v481, %v480
    %v525 = vpack.c.b16 %v483, %v482
    %v526 = vpack.c.b16 %v485, %v484
    %v527 = vpack.c.b16 %v487, %v486
    %v528 = vpack.c.b16 %v489, %v488
    %v529 = vpack.c.b16 %v491, %v490
    %v530 = vpack.c.b16 %v493, %v492
    %v531 = vpack.c.b16 %v495, %v494
    %v532 = vpack.c.b16 %v497, %v496
    %v533 = vpack.c.b16 %v499, %v498
    %v534 = vpack.c.b16 %v501, %v500
    %v535 = vpack.c.b16 %v503, %v502
    %v536 = vpack.c.b16 %v505, %v504
    %v537 = vpack.c.b16 %v507, %v506
    %v538 = vpack.c.b16 %v509, %v508
    %v539 = vpack.c.b16 %v511, %v510
    %v540 = vpack.c.b16 %v513, %v512
    %v541 = vpack.c.b16 %v515, %v514
    %v542 = vpack.c.b16 %v517, %v516
    %v543 = vpack.c.b16 %v519, %v518
    %568 = vmatprep.subr.bf16.mxu0 0
    %569 = vmatpush1.bf16.msra.mxu0 %v527
    %570 = vmatprep.subr.bf16.mxu0 0
    %571 = vmatpush1.bf16.msra.mxu0 %v526
    %572 = vmatprep.subr.bf16.mxu0 0
    %573 = vmatpush1.bf16.msra.mxu0 %v525
    %574 = vmatprep.subr.bf16.mxu0 0
    %575 = vmatpush1.bf16.msra.mxu0 %v524
    %576 = vmatprep.subr.bf16.mxu0 0
    %577 = vmatpush1.bf16.msra.mxu0 %v523
    %578 = vmatprep.subr.bf16.mxu0 0
    %579 = vmatpush1.bf16.msra.mxu0 %v522
    %580 = vmatprep.subr.bf16.mxu0 0
    %581 = vmatpush1.bf16.msra.mxu0 %v521
    %582 = vmatprep.subr.bf16.mxu0 0
    %583 = vmatpush1.bf16.msra.mxu0 %v520
    %584 = vmatprep.subr.bf16.mxu0 0
    %585 = vmatpush2.bf16.msra.mxu0 %v535
    %586 = vmatprep.subr.bf16.mxu0 0
    %587 = vmatpush2.bf16.msra.mxu0 %v534
    %588 = vmatprep.subr.bf16.mxu0 0
    %589 = vmatpush2.bf16.msra.mxu0 %v533
    %590 = vmatprep.subr.bf16.mxu0 0
    %591 = vmatpush2.bf16.msra.mxu0 %v532
    %592 = vmatprep.subr.bf16.mxu0 0
    %593 = vmatpush2.bf16.msra.mxu0 %v531
    %594 = vmatprep.subr.bf16.mxu0 0
    %595 = vmatpush2.bf16.msra.mxu0 %v530
    %596 = vmatprep.subr.bf16.mxu0 0
    %597 = vmatpush2.bf16.msra.mxu0 %v529
    %598 = vmatprep.subr.bf16.mxu0 0
    %599 = vmatpush2.bf16.msra.mxu0 %v528
    %600 = vmatprep.mubr.bf16.mxu0 %v302
    %601 = vmatmul.mubr.bf16.gmra.mxu0 %v230
    %v602 = vpop.f32.mrf.mxu0
    %v603 = vadd.f32 0.0, %v602
    %v604 = vpop.f32.mrf.mxu0
    %v605 = vpop.f32.mrf.mxu0
    %v606 = vadd.f32 0.0, %v605
    %v607 = vpop.f32.mrf.mxu0
    %608 = vmatprep.mubr.bf16.mxu0 %v303
    %609 = vmatmul.mubr.bf16.gmra.mxu0 %v231
    %v610 = vpop.f32.mrf.mxu0
    %v611 = vadd.f32 0.0, %v610
    %v612 = vpop.f32.mrf.mxu0
    %v613 = vpop.f32.mrf.mxu0
    %v614 = vadd.f32 0.0, %v613
    %v615 = vpop.f32.mrf.mxu0
    %616 = vdwg.mxu0
    %617 = vmatprep.subr.bf16.mxu0 0
    %618 = vmatpush1.bf16.msra.mxu0 %v543
    %619 = vmatprep.subr.bf16.mxu0 0
    %620 = vmatpush1.bf16.msra.mxu0 %v542
    %621 = vmatprep.subr.bf16.mxu0 0
    %622 = vmatpush1.bf16.msra.mxu0 %v541
    %623 = vmatprep.subr.bf16.mxu0 0
    %624 = vmatpush1.bf16.msra.mxu0 %v540
    %625 = vmatprep.subr.bf16.mxu0 0
    %626 = vmatpush1.bf16.msra.mxu0 %v539
    %627 = vmatprep.subr.bf16.mxu0 0
    %628 = vmatpush1.bf16.msra.mxu0 %v538
    %629 = vmatprep.subr.bf16.mxu0 0
    %630 = vmatpush1.bf16.msra.mxu0 %v537
    %631 = vmatprep.subr.bf16.mxu0 0
    %632 = vmatpush1.bf16.msra.mxu0 %v536
    %633 = vmatprep.subr.bf16.mxu0 0
    %634 = vmatpush2.bf16.msra.mxu0 0
    %635 = vmatprep.subr.bf16.mxu0 0
    %636 = vmatpush2.bf16.msra.mxu0 0
    %637 = vmatprep.subr.bf16.mxu0 0
    %638 = vmatpush2.bf16.msra.mxu0 0
    %639 = vmatprep.subr.bf16.mxu0 0
    %640 = vmatpush2.bf16.msra.mxu0 0
    %641 = vmatprep.subr.bf16.mxu0 0
    %642 = vmatpush2.bf16.msra.mxu0 0
    %643 = vmatprep.subr.bf16.mxu0 0
    %644 = vmatpush2.bf16.msra.mxu0 0
    %645 = vmatprep.subr.bf16.mxu0 0
    %646 = vmatpush2.bf16.msra.mxu0 0
    %647 = vmatprep.subr.bf16.mxu0 0
    %648 = vmatpush2.bf16.msra.mxu0 0
    %649 = vmatprep.mubr.bf16.mxu0 0
    %650 = vmatmul.mubr.bf16.gmra.mxu0 %v374
    %v651 = vpop.f32.mrf.mxu0
    %v652 = vadd.f32 %v603, %v651
    %v653 = vpop.f32.mrf.mxu0
    %v654 = vpop.f32.mrf.mxu0
    %v655 = vadd.f32 %v606, %v654
    %v656 = vpop.f32.mrf.mxu0
    %657 = vmatprep.mubr.bf16.mxu0 0
    %658 = vmatmul.mubr.bf16.gmra.mxu0 %v375
    %v659 = vpop.f32.mrf.mxu0
    %v660 = vadd.f32 %v611, %v659
    %v661 = vpop.f32.mrf.mxu0
    %v662 = vpop.f32.mrf.mxu0
    %v663 = vadd.f32 %v614, %v662
    %v664 = vpop.f32.mrf.mxu0
    %665 = vdwg.mxu0
    %v666 = vadd.f32 %v652, %v655
    %v667 = vadd.f32 %v666, %v660
    %v668 = vadd.f32 %v667, %v663
    %v669 = vrot.slane %v668, 4
    %v670 = vadd.f32 %v668, %v669
    %v671 = vrot.slane %v670, 2
    %v672 = vadd.f32 %v670, %v671
    %v673 = vrot.slane %v672, 1
    %v674 = vadd.f32 %v672, %v673
    %v675 = vmul.f32 %v652, %v652
    %v676 = vmul.f32 %v655, %v655
    %v677 = vmul.f32 %v660, %v660
    %v678 = vmul.f32 %v663, %v663
    %v679 = vadd.f32 %v675, %v676
    %v680 = vadd.f32 %v679, %v677
    %v681 = vadd.f32 %v680, %v678
    %v682 = vrot.slane %v681, 4
    %v683 = vadd.f32 %v681, %v682
    %v684 = vrot.slane %v683, 2
    %v685 = vadd.f32 %v683, %v684
    %v686 = vrot.slane %v685, 1
    %v687 = vadd.f32 %v685, %v686
    %v688 = vld [vmem:[%s9] sm:$0xff]
    %v689 = vld [vmem:[%s9 + $0x8] sm:$0xff]
    %v690 = vld [vmem:[%s9 + $0x10] sm:$0xff]
    %v691 = vld [vmem:[%s9 + $0x18] sm:$0xff]
    %v692 = vld [vmem:[%s9 + $0x20] sm:$0xff]
    %v693 = vld [vmem:[%s9 + $0x28] sm:$0xff]
    %v694 = vld [vmem:[%s9 + $0x30] sm:$0xff]
    %v695 = vld [vmem:[%s9 + $0x38] sm:$0xff]
    %v696 = vld [vmem:[%s9 + $0x40] sm:$0xff]
    %v697 = vld [vmem:[%s9 + $0x48] sm:$0xff]
    %v698 = vld [vmem:[%s9 + $0x50] sm:$0xff]
    %v699 = vld [vmem:[%s9 + $0x58] sm:$0xff]
    %v700 = vld [vmem:[%s9 + $0x60] sm:$0xff]
    %v701 = vld [vmem:[%s9 + $0x68] sm:$0xff]
    %v702 = vld [vmem:[%s9 + $0x70] sm:$0xff]
    %v703 = vld [vmem:[%s9 + $0x78] sm:$0xff]
    %704 = vmatprep.subr.mxu0 0.0
    %705 = vmatpush1.msra.mxu0 %v703
    %706 = vmatprep.subr.mxu0 0.0
    %707 = vmatpush1.msra.mxu0 %v702
    %708 = vmatprep.subr.mxu0 0.0
    %709 = vmatpush1.msra.mxu0 %v701
    %710 = vmatprep.subr.mxu0 0.0
    %711 = vmatpush1.msra.mxu0 %v700
    %712 = vmatprep.subr.mxu0 0.0
    %713 = vmatpush1.msra.mxu0 %v699
    %714 = vmatprep.subr.mxu0 0.0
    %715 = vmatpush1.msra.mxu0 %v698
    %716 = vmatprep.subr.mxu0 0.0
    %717 = vmatpush1.msra.mxu0 %v697
    %718 = vmatprep.subr.mxu0 0.0
    %719 = vmatpush1.msra.mxu0 %v696
    %720 = vmatprep.subr.mxu0 0.0
    %721 = vmatpush1.msra.mxu0 %v695
    %722 = vmatprep.subr.mxu0 0.0
    %723 = vmatpush1.msra.mxu0 %v694
    %724 = vmatprep.subr.mxu0 0.0
    %725 = vmatpush1.msra.mxu0 %v693
    %726 = vmatprep.subr.mxu0 0.0
    %727 = vmatpush1.msra.mxu0 %v692
    %728 = vmatprep.subr.mxu0 0.0
    %729 = vmatpush1.msra.mxu0 %v691
    %730 = vmatprep.subr.mxu0 0.0
    %731 = vmatpush1.msra.mxu0 %v690
    %732 = vmatprep.subr.mxu0 0.0
    %733 = vmatpush1.msra.mxu0 %v689
    %734 = vmatprep.subr.mxu0 0.0
    %735 = vmatpush1.msra.mxu0 %v688
    %736 = vmatprep.subr.mxu0 0.0
    %737 = vmatpush2.msra.mxu0 0.0
    %738 = vmatprep.subr.mxu0 0.0
    %739 = vmatpush2.msra.mxu0 0.0
    %740 = vmatprep.subr.mxu0 0.0
    %741 = vmatpush2.msra.mxu0 0.0
    %742 = vmatprep.subr.mxu0 0.0
    %743 = vmatpush2.msra.mxu0 0.0
    %744 = vmatprep.subr.mxu0 0.0
    %745 = vmatpush2.msra.mxu0 0.0
    %746 = vmatprep.subr.mxu0 0.0
    %747 = vmatpush2.msra.mxu0 0.0
    %748 = vmatprep.subr.mxu0 0.0
    %749 = vmatpush2.msra.mxu0 0.0
    %750 = vmatprep.subr.mxu0 0.0
    %751 = vmatpush2.msra.mxu0 0.0
    %752 = vmatprep.subr.mxu0 0.0
    %753 = vmatpush2.msra.mxu0 0.0
    %754 = vmatprep.subr.mxu0 0.0
    %755 = vmatpush2.msra.mxu0 0.0
    %756 = vmatprep.subr.mxu0 0.0
    %757 = vmatpush2.msra.mxu0 0.0
    %758 = vmatprep.subr.mxu0 0.0
    %759 = vmatpush2.msra.mxu0 0.0
    %760 = vmatprep.subr.mxu0 0.0
    %761 = vmatpush2.msra.mxu0 0.0
    %762 = vmatprep.subr.mxu0 0.0
    %763 = vmatpush2.msra.mxu0 0.0
    %764 = vmatprep.subr.mxu0 0.0
    %765 = vmatpush2.msra.mxu0 0.0
    %766 = vmatprep.subr.mxu0 0.0
    %767 = vmatpush2.msra.mxu0 0.0
    %768 = vmatprep.mubr.f32.mxu0 0.0
    %769 = vmatmul.mubr.f32.gmra.mxu0 %v674
    %v770 = vpop.f32.mrf.mxu0
    %v771 = vadd.f32 0.0, %v770
    %v772 = vpop.f32.mrf.mxu0
    %773 = vdwg.mxu0
    %774 = vmatprep.subr.mxu0 0.0
    %775 = vmatpush1.msra.mxu0 %v703
    %776 = vmatprep.subr.mxu0 0.0
    %777 = vmatpush1.msra.mxu0 %v702
    %778 = vmatprep.subr.mxu0 0.0
    %779 = vmatpush1.msra.mxu0 %v701
    %780 = vmatprep.subr.mxu0 0.0
    %781 = vmatpush1.msra.mxu0 %v700
    %782 = vmatprep.subr.mxu0 0.0
    %783 = vmatpush1.msra.mxu0 %v699
    %784 = vmatprep.subr.mxu0 0.0
    %785 = vmatpush1.msra.mxu0 %v698
    %786 = vmatprep.subr.mxu0 0.0
    %787 = vmatpush1.msra.mxu0 %v697
    %788 = vmatprep.subr.mxu0 0.0
    %789 = vmatpush1.msra.mxu0 %v696
    %790 = vmatprep.subr.mxu0 0.0
    %791 = vmatpush1.msra.mxu0 %v695
    %792 = vmatprep.subr.mxu0 0.0
    %793 = vmatpush1.msra.mxu0 %v694
    %794 = vmatprep.subr.mxu0 0.0
    %795 = vmatpush1.msra.mxu0 %v693
    %796 = vmatprep.subr.mxu0 0.0
    %797 = vmatpush1.msra.mxu0 %v692
    %798 = vmatprep.subr.mxu0 0.0
    %799 = vmatpush1.msra.mxu0 %v691
    %800 = vmatprep.subr.mxu0 0.0
    %801 = vmatpush1.msra.mxu0 %v690
    %802 = vmatprep.subr.mxu0 0.0
    %803 = vmatpush1.msra.mxu0 %v689
    %804 = vmatprep.subr.mxu0 0.0
    %805 = vmatpush1.msra.mxu0 %v688
    %806 = vmatprep.subr.mxu0 0.0
    %807 = vmatpush2.msra.mxu0 0.0
    %808 = vmatprep.subr.mxu0 0.0
    %809 = vmatpush2.msra.mxu0 0.0
    %810 = vmatprep.subr.mxu0 0.0
    %811 = vmatpush2.msra.mxu0 0.0
    %812 = vmatprep.subr.mxu0 0.0
    %813 = vmatpush2.msra.mxu0 0.0
    %814 = vmatprep.subr.mxu0 0.0
    %815 = vmatpush2.msra.mxu0 0.0
    %816 = vmatprep.subr.mxu0 0.0
    %817 = vmatpush2.msra.mxu0 0.0
    %818 = vmatprep.subr.mxu0 0.0
    %819 = vmatpush2.msra.mxu0 0.0
    %820 = vmatprep.subr.mxu0 0.0
    %821 = vmatpush2.msra.mxu0 0.0
    %822 = vmatprep.subr.mxu0 0.0
    %823 = vmatpush2.msra.mxu0 0.0
    %824 = vmatprep.subr.mxu0 0.0
    %825 = vmatpush2.msra.mxu0 0.0
    %826 = vmatprep.subr.mxu0 0.0
    %827 = vmatpush2.msra.mxu0 0.0
    %828 = vmatprep.subr.mxu0 0.0
    %829 = vmatpush2.msra.mxu0 0.0
    %830 = vmatprep.subr.mxu0 0.0
    %831 = vmatpush2.msra.mxu0 0.0
    %832 = vmatprep.subr.mxu0 0.0
    %833 = vmatpush2.msra.mxu0 0.0
    %834 = vmatprep.subr.mxu0 0.0
    %835 = vmatpush2.msra.mxu0 0.0
    %836 = vmatprep.subr.mxu0 0.0
    %837 = vmatpush2.msra.mxu0 0.0
    %838 = vmatprep.mubr.f32.mxu0 0.0
    %839 = vmatmul.mubr.f32.gmra.mxu0 %v687
    %v840 = vpop.f32.mrf.mxu0
    %v841 = vadd.f32 0.0, %v840
    %v842 = vpop.f32.mrf.mxu0
    %843 = vdwg.mxu0
    %v844 = vmul.f32 %v771, 0.001953125
    %v845 = vmul.f32 %v841, 0.001953125
    %v846 = vmul.f32 %v844, %v844
    %v847 = vsub.f32 %v845, %v846
    %v848 = vmax.f32 %v847, 0.0
    %v849 = vld [vmem:[%s13] sm:$0x1]
    %v850 = vadd.f32 %v848, 1e-05
    %v851 = vrsqrt.pop %v850
    %v852 = vmul.f32 %v849, %v851
    %v853 = vld [vmem:[%s15] sm:$0x1]
    %v854 = vmul.f32 %v844, %v852
    %v855 = vsub.f32 %v853, %v854
    %v856 = vld [vmem:[%s11] sm:$0xff]
    %vm857 = vcmask 64512
    %v859 = vsel %vm857, %v852, 0
    %861 = vmatprep.subr.mxu0 0.0
    %862 = vmatpush1.msra.mxu0 0.0
    %863 = vmatprep.subr.mxu0 0.0
    %864 = vmatpush1.msra.mxu0 0.0
    %865 = vmatprep.subr.mxu0 0.0
    %866 = vmatpush1.msra.mxu0 0.0
    %867 = vmatprep.subr.mxu0 0.0
    %868 = vmatpush1.msra.mxu0 0.0
    %869 = vmatprep.subr.mxu0 0.0
    %870 = vmatpush1.msra.mxu0 0.0
    %871 = vmatprep.subr.mxu0 0.0
    %872 = vmatpush1.msra.mxu0 0.0
    %873 = vmatprep.subr.mxu0 0.0
    %874 = vmatpush1.msra.mxu0 0.0
    %875 = vmatprep.subr.mxu0 0.0
    %876 = vmatpush1.msra.mxu0 0.0
    %877 = vmatprep.subr.mxu0 0.0
    %878 = vmatpush1.msra.mxu0 0.0
    %879 = vmatprep.subr.mxu0 0.0
    %880 = vmatpush1.msra.mxu0 0.0
    %881 = vmatprep.subr.mxu0 0.0
    %882 = vmatpush1.msra.mxu0 0.0
    %883 = vmatprep.subr.mxu0 0.0
    %884 = vmatpush1.msra.mxu0 0.0
    %885 = vmatprep.subr.mxu0 0.0
    %886 = vmatpush1.msra.mxu0 0.0
    %887 = vmatprep.subr.mxu0 0.0
    %888 = vmatpush1.msra.mxu0 0.0
    %889 = vmatprep.subr.mxu0 0.0
    %890 = vmatpush1.msra.mxu0 0.0
    %891 = vmatprep.subr.mxu0 0.0
    %892 = vmatpush1.msra.mxu0 %v856
    %893 = vmatprep.subr.mxu0 0.0
    %894 = vmatpush2.msra.mxu0 0.0
    %895 = vmatprep.subr.mxu0 0.0
    %896 = vmatpush2.msra.mxu0 0.0
    %897 = vmatprep.subr.mxu0 0.0
    %898 = vmatpush2.msra.mxu0 0.0
    %899 = vmatprep.subr.mxu0 0.0
    %900 = vmatpush2.msra.mxu0 0.0
    %901 = vmatprep.subr.mxu0 0.0
    %902 = vmatpush2.msra.mxu0 0.0
    %903 = vmatprep.subr.mxu0 0.0
    %904 = vmatpush2.msra.mxu0 0.0
    %905 = vmatprep.subr.mxu0 0.0
    %906 = vmatpush2.msra.mxu0 0.0
    %907 = vmatprep.subr.mxu0 0.0
    %908 = vmatpush2.msra.mxu0 0.0
    %909 = vmatprep.subr.mxu0 0.0
    %910 = vmatpush2.msra.mxu0 0.0
    %911 = vmatprep.subr.mxu0 0.0
    %912 = vmatpush2.msra.mxu0 0.0
    %913 = vmatprep.subr.mxu0 0.0
    %914 = vmatpush2.msra.mxu0 0.0
    %915 = vmatprep.subr.mxu0 0.0
    %916 = vmatpush2.msra.mxu0 0.0
    %917 = vmatprep.subr.mxu0 0.0
    %918 = vmatpush2.msra.mxu0 0.0
    %919 = vmatprep.subr.mxu0 0.0
    %920 = vmatpush2.msra.mxu0 0.0
    %921 = vmatprep.subr.mxu0 0.0
    %922 = vmatpush2.msra.mxu0 0.0
    %923 = vmatprep.subr.mxu0 0.0
    %924 = vmatpush2.msra.mxu0 0.0
    %925 = vmatprep.mubr.f32.mxu0 0.0
    %926 = vmatmul.mubr.f32.gmra.mxu0 %v859
    %v927 = vpop.f32.mrf.mxu0
    %v928 = vadd.f32 0.0, %v927
    %v929 = vpop.f32.mrf.mxu0
    %930 = vdwg.mxu0
    %v932 = vsel %vm857, %v855, 0
    %934 = vmatprep.subr.mxu0 0.0
    %935 = vmatpush1.msra.mxu0 0.0
    %936 = vmatprep.subr.mxu0 0.0
    %937 = vmatpush1.msra.mxu0 0.0
    %938 = vmatprep.subr.mxu0 0.0
    %939 = vmatpush1.msra.mxu0 0.0
    %940 = vmatprep.subr.mxu0 0.0
    %941 = vmatpush1.msra.mxu0 0.0
    %942 = vmatprep.subr.mxu0 0.0
    %943 = vmatpush1.msra.mxu0 0.0
    %944 = vmatprep.subr.mxu0 0.0
    %945 = vmatpush1.msra.mxu0 0.0
    %946 = vmatprep.subr.mxu0 0.0
    %947 = vmatpush1.msra.mxu0 0.0
    %948 = vmatprep.subr.mxu0 0.0
    %949 = vmatpush1.msra.mxu0 0.0
    %950 = vmatprep.subr.mxu0 0.0
    %951 = vmatpush1.msra.mxu0 0.0
    %952 = vmatprep.subr.mxu0 0.0
    %953 = vmatpush1.msra.mxu0 0.0
    %954 = vmatprep.subr.mxu0 0.0
    %955 = vmatpush1.msra.mxu0 0.0
    %956 = vmatprep.subr.mxu0 0.0
    %957 = vmatpush1.msra.mxu0 0.0
    %958 = vmatprep.subr.mxu0 0.0
    %959 = vmatpush1.msra.mxu0 0.0
    %960 = vmatprep.subr.mxu0 0.0
    %961 = vmatpush1.msra.mxu0 0.0
    %962 = vmatprep.subr.mxu0 0.0
    %963 = vmatpush1.msra.mxu0 0.0
    %964 = vmatprep.subr.mxu0 0.0
    %965 = vmatpush1.msra.mxu0 %v856
    %966 = vmatprep.subr.mxu0 0.0
    %967 = vmatpush2.msra.mxu0 0.0
    %968 = vmatprep.subr.mxu0 0.0
    %969 = vmatpush2.msra.mxu0 0.0
    %970 = vmatprep.subr.mxu0 0.0
    %971 = vmatpush2.msra.mxu0 0.0
    %972 = vmatprep.subr.mxu0 0.0
    %973 = vmatpush2.msra.mxu0 0.0
    %974 = vmatprep.subr.mxu0 0.0
    %975 = vmatpush2.msra.mxu0 0.0
    %976 = vmatprep.subr.mxu0 0.0
    %977 = vmatpush2.msra.mxu0 0.0
    %978 = vmatprep.subr.mxu0 0.0
    %979 = vmatpush2.msra.mxu0 0.0
    %980 = vmatprep.subr.mxu0 0.0
    %981 = vmatpush2.msra.mxu0 0.0
    %982 = vmatprep.subr.mxu0 0.0
    %983 = vmatpush2.msra.mxu0 0.0
    %984 = vmatprep.subr.mxu0 0.0
    %985 = vmatpush2.msra.mxu0 0.0
    %986 = vmatprep.subr.mxu0 0.0
    %987 = vmatpush2.msra.mxu0 0.0
    %988 = vmatprep.subr.mxu0 0.0
    %989 = vmatpush2.msra.mxu0 0.0
    %990 = vmatprep.subr.mxu0 0.0
    %991 = vmatpush2.msra.mxu0 0.0
    %992 = vmatprep.subr.mxu0 0.0
    %993 = vmatpush2.msra.mxu0 0.0
    %994 = vmatprep.subr.mxu0 0.0
    %995 = vmatpush2.msra.mxu0 0.0
    %996 = vmatprep.subr.mxu0 0.0
    %997 = vmatpush2.msra.mxu0 0.0
    %998 = vmatprep.mubr.f32.mxu0 0.0
    %999 = vmatmul.mubr.f32.gmra.mxu0 %v932
    %v1000 = vpop.f32.mrf.mxu0
    %v1001 = vadd.f32 0.0, %v1000
    %v1002 = vpop.f32.mrf.mxu0
    %1003 = vdwg.mxu0
    %v1004 = vlaneseq
    %v1005 = vshrl.u32 %v1004, 7
    %v1006 = vsub.s32 0, %v1005
    %v1007 = vrot.slane %v928, %v1006
    %v1008 = vmul.f32 %v652, %v1007
    %v1009 = vmul.f32 %v655, %v1007
    %v1010 = vmul.f32 %v660, %v1007
    %v1011 = vmul.f32 %v663, %v1007
    %v1012 = vlaneseq
    %v1013 = vshrl.u32 %v1012, 7
    %v1014 = vsub.s32 0, %v1013
    %v1015 = vrot.slane %v1001, %v1014
    %v1016 = vadd.f32 %v1008, %v1015
    %v1017 = vadd.f32 %v1009, %v1015
    %v1018 = vadd.f32 %v1010, %v1015
    %v1019 = vadd.f32 %v1011, %v1015
    %v1020 = vmax.f32 %v1016, 0.0
    %v1021 = vmax.f32 %v1017, 0.0
    %v1022 = vmax.f32 %v1018, 0.0
    %v1023 = vmax.f32 %v1019, 0.0
    %v1024 = vpack.c.bf16 %v1021, %v1020
    %v1025 = vpack.c.bf16 %v1023, %v1022
    %v1026 = vld [vmem:[%s17] sm:$0xf]
    %v1027 = vld [vmem:[%s17 + $0x4] sm:$0xf]
    %v1030 = vunpack.c.l.b16 %v1026
    %v1031 = vunpack.c.l.b16 %v1027
    %v1032 = vpack.c.b16 %v1031, %v1030
    %vm1033 = vcmask 261120
    %v1035 = vsel %vm1033, %v1032, 0
    %1037 = vmatprep.subr.bf16.mxu0 0
    %1038 = vmatpush1.bf16.msra.mxu0 0
    %1039 = vmatprep.subr.bf16.mxu0 0
    %1040 = vmatpush1.bf16.msra.mxu0 0
    %1041 = vmatprep.subr.bf16.mxu0 0
    %1042 = vmatpush1.bf16.msra.mxu0 0
    %1043 = vmatprep.subr.bf16.mxu0 0
    %1044 = vmatpush1.bf16.msra.mxu0 0
    %1045 = vmatprep.subr.bf16.mxu0 0
    %1046 = vmatpush1.bf16.msra.mxu0 0
    %1047 = vmatprep.subr.bf16.mxu0 0
    %1048 = vmatpush1.bf16.msra.mxu0 0
    %1049 = vmatprep.subr.bf16.mxu0 0
    %1050 = vmatpush1.bf16.msra.mxu0 %v1025
    %1051 = vmatprep.subr.bf16.mxu0 0
    %1052 = vmatpush1.bf16.msra.mxu0 %v1024
    %1053 = vmatprep.subr.bf16.mxu0 0
    %1054 = vmatpush2.bf16.msra.mxu0 0
    %1055 = vmatprep.subr.bf16.mxu0 0
    %1056 = vmatpush2.bf16.msra.mxu0 0
    %1057 = vmatprep.subr.bf16.mxu0 0
    %1058 = vmatpush2.bf16.msra.mxu0 0
    %1059 = vmatprep.subr.bf16.mxu0 0
    %1060 = vmatpush2.bf16.msra.mxu0 0
    %1061 = vmatprep.subr.bf16.mxu0 0
    %1062 = vmatpush2.bf16.msra.mxu0 0
    %1063 = vmatprep.subr.bf16.mxu0 0
    %1064 = vmatpush2.bf16.msra.mxu0 0
    %1065 = vmatprep.subr.bf16.mxu0 0
    %1066 = vmatpush2.bf16.msra.mxu0 0
    %1067 = vmatprep.subr.bf16.mxu0 0
    %1068 = vmatpush2.bf16.msra.mxu0 0
    %1069 = vmatprep.mubr.bf16.mxu0 0
    %1070 = vmatmul.mubr.bf16.gmra.mxu0 %v1035
    %v1071 = vpop.f32.mrf.mxu0
    %v1072 = vadd.f32 0.0, %v1071
    %v1073 = vpop.f32.mrf.mxu0
    %v1074 = vpop.f32.mrf.mxu0
    %v1075 = vadd.f32 0.0, %v1074
    %v1076 = vpop.f32.mrf.mxu0
    %1077 = vdwg.mxu0
    %v1078 = vpack.c.bf16 %v1075, %v1072
    %s1079 = scalar_lea.vmem %s17, 8
    %v1080 = vld [vmem:[%s1079] sm:$0xf]
    %v1081 = vld [vmem:[%s1079 + $0x4] sm:$0xf]
    %v1084 = vunpack.c.l.b16 %v1080
    %v1085 = vunpack.c.l.b16 %v1081
    %v1086 = vpack.c.b16 %v1085, %v1084
    %v1088 = vsel %vm1033, %v1086, 0
    %1090 = vmatprep.subr.bf16.mxu0 0
    %1091 = vmatpush1.bf16.msra.mxu0 0
    %1092 = vmatprep.subr.bf16.mxu0 0
    %1093 = vmatpush1.bf16.msra.mxu0 0
    %1094 = vmatprep.subr.bf16.mxu0 0
    %1095 = vmatpush1.bf16.msra.mxu0 0
    %1096 = vmatprep.subr.bf16.mxu0 0
    %1097 = vmatpush1.bf16.msra.mxu0 0
    %1098 = vmatprep.subr.bf16.mxu0 0
    %1099 = vmatpush1.bf16.msra.mxu0 0
    %1100 = vmatprep.subr.bf16.mxu0 0
    %1101 = vmatpush1.bf16.msra.mxu0 0
    %1102 = vmatprep.subr.bf16.mxu0 0
    %1103 = vmatpush1.bf16.msra.mxu0 %v1025
    %1104 = vmatprep.subr.bf16.mxu0 0
    %1105 = vmatpush1.bf16.msra.mxu0 %v1024
    %1106 = vmatprep.subr.bf16.mxu0 0
    %1107 = vmatpush2.bf16.msra.mxu0 0
    %1108 = vmatprep.subr.bf16.mxu0 0
    %1109 = vmatpush2.bf16.msra.mxu0 0
    %1110 = vmatprep.subr.bf16.mxu0 0
    %1111 = vmatpush2.bf16.msra.mxu0 0
    %1112 = vmatprep.subr.bf16.mxu0 0
    %1113 = vmatpush2.bf16.msra.mxu0 0
    %1114 = vmatprep.subr.bf16.mxu0 0
    %1115 = vmatpush2.bf16.msra.mxu0 0
    %1116 = vmatprep.subr.bf16.mxu0 0
    %1117 = vmatpush2.bf16.msra.mxu0 0
    %1118 = vmatprep.subr.bf16.mxu0 0
    %1119 = vmatpush2.bf16.msra.mxu0 0
    %1120 = vmatprep.subr.bf16.mxu0 0
    %1121 = vmatpush2.bf16.msra.mxu0 0
    %1122 = vmatprep.mubr.bf16.mxu0 0
    %1123 = vmatmul.mubr.bf16.gmra.mxu0 %v1088
    %v1124 = vpop.f32.mrf.mxu0
    %v1125 = vadd.f32 0.0, %v1124
    %v1126 = vpop.f32.mrf.mxu0
    %v1127 = vpop.f32.mrf.mxu0
    %v1128 = vadd.f32 0.0, %v1127
    %v1129 = vpop.f32.mrf.mxu0
    %1130 = vdwg.mxu0
    %v1131 = vpack.c.bf16 %v1128, %v1125
    %s1132 = scalar_lea.vmem %s17, 16
    %v1133 = vld [vmem:[%s1132] sm:$0xf]
    %v1134 = vld [vmem:[%s1132 + $0x4] sm:$0xf]
    %v1137 = vunpack.c.l.b16 %v1133
    %v1138 = vunpack.c.l.b16 %v1134
    %v1139 = vpack.c.b16 %v1138, %v1137
    %v1141 = vsel %vm1033, %v1139, 0
    %1143 = vmatprep.subr.bf16.mxu0 0
    %1144 = vmatpush1.bf16.msra.mxu0 0
    %1145 = vmatprep.subr.bf16.mxu0 0
    %1146 = vmatpush1.bf16.msra.mxu0 0
    %1147 = vmatprep.subr.bf16.mxu0 0
    %1148 = vmatpush1.bf16.msra.mxu0 0
    %1149 = vmatprep.subr.bf16.mxu0 0
    %1150 = vmatpush1.bf16.msra.mxu0 0
    %1151 = vmatprep.subr.bf16.mxu0 0
    %1152 = vmatpush1.bf16.msra.mxu0 0
    %1153 = vmatprep.subr.bf16.mxu0 0
    %1154 = vmatpush1.bf16.msra.mxu0 0
    %1155 = vmatprep.subr.bf16.mxu0 0
    %1156 = vmatpush1.bf16.msra.mxu0 %v1025
    %1157 = vmatprep.subr.bf16.mxu0 0
    %1158 = vmatpush1.bf16.msra.mxu0 %v1024
    %1159 = vmatprep.subr.bf16.mxu0 0
    %1160 = vmatpush2.bf16.msra.mxu0 0
    %1161 = vmatprep.subr.bf16.mxu0 0
    %1162 = vmatpush2.bf16.msra.mxu0 0
    %1163 = vmatprep.subr.bf16.mxu0 0
    %1164 = vmatpush2.bf16.msra.mxu0 0
    %1165 = vmatprep.subr.bf16.mxu0 0
    %1166 = vmatpush2.bf16.msra.mxu0 0
    %1167 = vmatprep.subr.bf16.mxu0 0
    %1168 = vmatpush2.bf16.msra.mxu0 0
    %1169 = vmatprep.subr.bf16.mxu0 0
    %1170 = vmatpush2.bf16.msra.mxu0 0
    %1171 = vmatprep.subr.bf16.mxu0 0
    %1172 = vmatpush2.bf16.msra.mxu0 0
    %1173 = vmatprep.subr.bf16.mxu0 0
    %1174 = vmatpush2.bf16.msra.mxu0 0
    %1175 = vmatprep.mubr.bf16.mxu0 0
    %1176 = vmatmul.mubr.bf16.gmra.mxu0 %v1141
    %v1177 = vpop.f32.mrf.mxu0
    %v1178 = vadd.f32 0.0, %v1177
    %v1179 = vpop.f32.mrf.mxu0
    %v1180 = vpop.f32.mrf.mxu0
    %v1181 = vadd.f32 0.0, %v1180
    %v1182 = vpop.f32.mrf.mxu0
    %1183 = vdwg.mxu0
    %v1184 = vpack.c.bf16 %v1181, %v1178
    %v1185 = vld [vmem:[%s19] sm:$0xf]
    %v1186 = vld [vmem:[%s19 + $0x4] sm:$0xf]
    %v1187 = vld [vmem:[%s19 + $0x8] sm:$0xf]
    %v1188 = vld [vmem:[%s19 + $0xc] sm:$0xf]
    %v1189 = vld [vmem:[%s19 + $0x10] sm:$0xf]
    %v1190 = vld [vmem:[%s19 + $0x14] sm:$0xf]
    %v1191 = vld [vmem:[%s19 + $0x18] sm:$0xf]
    %v1192 = vld [vmem:[%s19 + $0x1c] sm:$0xf]
    %v1193 = vld [vmem:[%s19 + $0x20] sm:$0xf]
    %v1194 = vld [vmem:[%s19 + $0x24] sm:$0xf]
    %v1195 = vld [vmem:[%s19 + $0x28] sm:$0xf]
    %v1196 = vld [vmem:[%s19 + $0x2c] sm:$0xf]
    %v1197 = vld [vmem:[%s19 + $0x30] sm:$0xf]
    %v1198 = vld [vmem:[%s19 + $0x34] sm:$0xf]
    %v1199 = vld [vmem:[%s19 + $0x38] sm:$0xf]
    %v1200 = vld [vmem:[%s19 + $0x3c] sm:$0xf]
    %v1201 = vld [vmem:[%s19 + $0x40] sm:$0xf]
    %v1202 = vld [vmem:[%s19 + $0x44] sm:$0xf]
    %v1203 = vld [vmem:[%s19 + $0x48] sm:$0xf]
    %v1204 = vld [vmem:[%s19 + $0x4c] sm:$0xf]
    %v1205 = vld [vmem:[%s19 + $0x50] sm:$0xf]
    %v1206 = vld [vmem:[%s19 + $0x54] sm:$0xf]
    %v1207 = vld [vmem:[%s19 + $0x58] sm:$0xf]
    %v1208 = vld [vmem:[%s19 + $0x5c] sm:$0xf]
    %v1209 = vld [vmem:[%s19 + $0x60] sm:$0xf]
    %v1210 = vld [vmem:[%s19 + $0x64] sm:$0xf]
    %v1211 = vld [vmem:[%s19 + $0x68] sm:$0xf]
    %v1212 = vld [vmem:[%s19 + $0x6c] sm:$0xf]
    %v1213 = vld [vmem:[%s19 + $0x70] sm:$0xf]
    %v1214 = vld [vmem:[%s19 + $0x74] sm:$0xf]
    %v1215 = vld [vmem:[%s19 + $0x78] sm:$0xf]
    %v1216 = vld [vmem:[%s19 + $0x7c] sm:$0xf]
    %v1217 = vld [vmem:[%s19 + $0x80] sm:$0xf]
    %v1218 = vld [vmem:[%s19 + $0x84] sm:$0xf]
    %v1219 = vld [vmem:[%s19 + $0x88] sm:$0xf]
    %v1220 = vld [vmem:[%s19 + $0x8c] sm:$0xf]
    %v1221 = vld [vmem:[%s19 + $0x90] sm:$0xf]
    %v1222 = vld [vmem:[%s19 + $0x94] sm:$0xf]
    %v1223 = vld [vmem:[%s19 + $0x98] sm:$0xf]
    %v1224 = vld [vmem:[%s19 + $0x9c] sm:$0xf]
    %v1225 = vld [vmem:[%s19 + $0xa0] sm:$0xf]
    %v1226 = vld [vmem:[%s19 + $0xa4] sm:$0xf]
    %v1227 = vld [vmem:[%s19 + $0xa8] sm:$0xf]
    %v1228 = vld [vmem:[%s19 + $0xac] sm:$0xf]
    %v1229 = vld [vmem:[%s19 + $0xb0] sm:$0xf]
    %v1230 = vld [vmem:[%s19 + $0xb4] sm:$0xf]
    %v1231 = vld [vmem:[%s19 + $0xb8] sm:$0xf]
    %v1232 = vld [vmem:[%s19 + $0xbc] sm:$0xf]
    %v1281 = vunpack.c.l.b16 %v1185
    %v1282 = vunpack.c.l.b16 %v1186
    %v1283 = vunpack.c.l.b16 %v1187
    %v1284 = vunpack.c.l.b16 %v1188
    %v1285 = vunpack.c.l.b16 %v1189
    %v1286 = vunpack.c.l.b16 %v1190
    %v1287 = vunpack.c.l.b16 %v1191
    %v1288 = vunpack.c.l.b16 %v1192
    %v1289 = vunpack.c.l.b16 %v1193
    %v1290 = vunpack.c.l.b16 %v1194
    %v1291 = vunpack.c.l.b16 %v1195
    %v1292 = vunpack.c.l.b16 %v1196
    %v1293 = vunpack.c.l.b16 %v1197
    %v1294 = vunpack.c.l.b16 %v1198
    %v1295 = vunpack.c.l.b16 %v1199
    %v1296 = vunpack.c.l.b16 %v1200
    %v1297 = vunpack.c.l.b16 %v1201
    %v1298 = vunpack.c.l.b16 %v1202
    %v1299 = vunpack.c.l.b16 %v1203
    %v1300 = vunpack.c.l.b16 %v1204
    %v1301 = vunpack.c.l.b16 %v1205
    %v1302 = vunpack.c.l.b16 %v1206
    %v1303 = vunpack.c.l.b16 %v1207
    %v1304 = vunpack.c.l.b16 %v1208
    %v1305 = vunpack.c.l.b16 %v1209
    %v1306 = vunpack.c.l.b16 %v1210
    %v1307 = vunpack.c.l.b16 %v1211
    %v1308 = vunpack.c.l.b16 %v1212
    %v1309 = vunpack.c.l.b16 %v1213
    %v1310 = vunpack.c.l.b16 %v1214
    %v1311 = vunpack.c.l.b16 %v1215
    %v1312 = vunpack.c.l.b16 %v1216
    %v1313 = vunpack.c.l.b16 %v1217
    %v1314 = vunpack.c.l.b16 %v1218
    %v1315 = vunpack.c.l.b16 %v1219
    %v1316 = vunpack.c.l.b16 %v1220
    %v1317 = vunpack.c.l.b16 %v1221
    %v1318 = vunpack.c.l.b16 %v1222
    %v1319 = vunpack.c.l.b16 %v1223
    %v1320 = vunpack.c.l.b16 %v1224
    %v1321 = vunpack.c.l.b16 %v1225
    %v1322 = vunpack.c.l.b16 %v1226
    %v1323 = vunpack.c.l.b16 %v1227
    %v1324 = vunpack.c.l.b16 %v1228
    %v1325 = vunpack.c.l.b16 %v1229
    %v1326 = vunpack.c.l.b16 %v1230
    %v1327 = vunpack.c.l.b16 %v1231
    %v1328 = vunpack.c.l.b16 %v1232
    %v1329 = vpack.c.b16 %v1282, %v1281
    %v1330 = vpack.c.b16 %v1284, %v1283
    %v1331 = vpack.c.b16 %v1286, %v1285
    %v1332 = vpack.c.b16 %v1288, %v1287
    %v1333 = vpack.c.b16 %v1290, %v1289
    %v1334 = vpack.c.b16 %v1292, %v1291
    %v1335 = vpack.c.b16 %v1294, %v1293
    %v1336 = vpack.c.b16 %v1296, %v1295
    %v1337 = vpack.c.b16 %v1298, %v1297
    %v1338 = vpack.c.b16 %v1300, %v1299
    %v1339 = vpack.c.b16 %v1302, %v1301
    %v1340 = vpack.c.b16 %v1304, %v1303
    %v1341 = vpack.c.b16 %v1306, %v1305
    %v1342 = vpack.c.b16 %v1308, %v1307
    %v1343 = vpack.c.b16 %v1310, %v1309
    %v1344 = vpack.c.b16 %v1312, %v1311
    %v1345 = vpack.c.b16 %v1314, %v1313
    %v1346 = vpack.c.b16 %v1316, %v1315
    %v1347 = vpack.c.b16 %v1318, %v1317
    %v1348 = vpack.c.b16 %v1320, %v1319
    %v1349 = vpack.c.b16 %v1322, %v1321
    %v1350 = vpack.c.b16 %v1324, %v1323
    %v1351 = vpack.c.b16 %v1326, %v1325
    %v1352 = vpack.c.b16 %v1328, %v1327
    %1377 = vmatprep.subr.bf16.mxu0 0
    %1378 = vmatpush1.bf16.msra.mxu0 %v1336
    %1379 = vmatprep.subr.bf16.mxu0 0
    %1380 = vmatpush1.bf16.msra.mxu0 %v1335
    %1381 = vmatprep.subr.bf16.mxu0 0
    %1382 = vmatpush1.bf16.msra.mxu0 %v1334
    %1383 = vmatprep.subr.bf16.mxu0 0
    %1384 = vmatpush1.bf16.msra.mxu0 %v1333
    %1385 = vmatprep.subr.bf16.mxu0 0
    %1386 = vmatpush1.bf16.msra.mxu0 %v1332
    %1387 = vmatprep.subr.bf16.mxu0 0
    %1388 = vmatpush1.bf16.msra.mxu0 %v1331
    %1389 = vmatprep.subr.bf16.mxu0 0
    %1390 = vmatpush1.bf16.msra.mxu0 %v1330
    %1391 = vmatprep.subr.bf16.mxu0 0
    %1392 = vmatpush1.bf16.msra.mxu0 %v1329
    %1393 = vmatprep.subr.bf16.mxu0 0
    %1394 = vmatpush2.bf16.msra.mxu0 %v1344
    %1395 = vmatprep.subr.bf16.mxu0 0
    %1396 = vmatpush2.bf16.msra.mxu0 %v1343
    %1397 = vmatprep.subr.bf16.mxu0 0
    %1398 = vmatpush2.bf16.msra.mxu0 %v1342
    %1399 = vmatprep.subr.bf16.mxu0 0
    %1400 = vmatpush2.bf16.msra.mxu0 %v1341
    %1401 = vmatprep.subr.bf16.mxu0 0
    %1402 = vmatpush2.bf16.msra.mxu0 %v1340
    %1403 = vmatprep.subr.bf16.mxu0 0
    %1404 = vmatpush2.bf16.msra.mxu0 %v1339
    %1405 = vmatprep.subr.bf16.mxu0 0
    %1406 = vmatpush2.bf16.msra.mxu0 %v1338
    %1407 = vmatprep.subr.bf16.mxu0 0
    %1408 = vmatpush2.bf16.msra.mxu0 %v1337
    %1409 = vmatprep.mubr.bf16.mxu0 %v1131
    %1410 = vmatmul.mubr.bf16.gmra.mxu0 %v1078
    %v1411 = vpop.f32.mrf.mxu0
    %v1412 = vadd.f32 0.0, %v1411
    %v1413 = vpop.f32.mrf.mxu0
    %v1414 = vpop.f32.mrf.mxu0
    %v1415 = vadd.f32 0.0, %v1414
    %v1416 = vpop.f32.mrf.mxu0
    %1417 = vdwg.mxu0
    %1418 = vmatprep.subr.bf16.mxu0 0
    %1419 = vmatpush1.bf16.msra.mxu0 %v1352
    %1420 = vmatprep.subr.bf16.mxu0 0
    %1421 = vmatpush1.bf16.msra.mxu0 %v1351
    %1422 = vmatprep.subr.bf16.mxu0 0
    %1423 = vmatpush1.bf16.msra.mxu0 %v1350
    %1424 = vmatprep.subr.bf16.mxu0 0
    %1425 = vmatpush1.bf16.msra.mxu0 %v1349
    %1426 = vmatprep.subr.bf16.mxu0 0
    %1427 = vmatpush1.bf16.msra.mxu0 %v1348
    %1428 = vmatprep.subr.bf16.mxu0 0
    %1429 = vmatpush1.bf16.msra.mxu0 %v1347
    %1430 = vmatprep.subr.bf16.mxu0 0
    %1431 = vmatpush1.bf16.msra.mxu0 %v1346
    %1432 = vmatprep.subr.bf16.mxu0 0
    %1433 = vmatpush1.bf16.msra.mxu0 %v1345
    %1434 = vmatprep.subr.bf16.mxu0 0
    %1435 = vmatpush2.bf16.msra.mxu0 0
    %1436 = vmatprep.subr.bf16.mxu0 0
    %1437 = vmatpush2.bf16.msra.mxu0 0
    %1438 = vmatprep.subr.bf16.mxu0 0
    %1439 = vmatpush2.bf16.msra.mxu0 0
    %1440 = vmatprep.subr.bf16.mxu0 0
    %1441 = vmatpush2.bf16.msra.mxu0 0
    %1442 = vmatprep.subr.bf16.mxu0 0
    %1443 = vmatpush2.bf16.msra.mxu0 0
    %1444 = vmatprep.subr.bf16.mxu0 0
    %1445 = vmatpush2.bf16.msra.mxu0 0
    %1446 = vmatprep.subr.bf16.mxu0 0
    %1447 = vmatpush2.bf16.msra.mxu0 0
    %1448 = vmatprep.subr.bf16.mxu0 0
    %1449 = vmatpush2.bf16.msra.mxu0 0
    %1450 = vmatprep.mubr.bf16.mxu0 0
    %1451 = vmatmul.mubr.bf16.gmra.mxu0 %v1184
    %v1452 = vpop.f32.mrf.mxu0
    %v1453 = vadd.f32 %v1412, %v1452
    %v1454 = vpop.f32.mrf.mxu0
    %v1455 = vpop.f32.mrf.mxu0
    %v1456 = vadd.f32 %v1415, %v1455
    %v1457 = vpop.f32.mrf.mxu0
    %1458 = vdwg.mxu0
    %v1459 = vadd.f32 %v1453, %v1456
    %v1460 = vrot.slane %v1459, 4
    %v1461 = vadd.f32 %v1459, %v1460
    %v1462 = vrot.slane %v1461, 2
    %v1463 = vadd.f32 %v1461, %v1462
    %v1464 = vrot.slane %v1463, 1
    %v1465 = vadd.f32 %v1463, %v1464
    %v1466 = vmul.f32 %v1453, %v1453
    %v1467 = vmul.f32 %v1456, %v1456
    %v1468 = vadd.f32 %v1466, %v1467
    %v1469 = vrot.slane %v1468, 4
    %v1470 = vadd.f32 %v1468, %v1469
    %v1471 = vrot.slane %v1470, 2
    %v1472 = vadd.f32 %v1470, %v1471
    %v1473 = vrot.slane %v1472, 1
    %v1474 = vadd.f32 %v1472, %v1473
    %v1475 = vld [vmem:[%s21] sm:$0xff]
    %v1476 = vld [vmem:[%s21 + $0x8] sm:$0xff]
    %v1477 = vld [vmem:[%s21 + $0x10] sm:$0xff]
    %v1478 = vld [vmem:[%s21 + $0x18] sm:$0xff]
    %v1479 = vld [vmem:[%s21 + $0x20] sm:$0xff]
    %v1480 = vld [vmem:[%s21 + $0x28] sm:$0xff]
    %v1481 = vld [vmem:[%s21 + $0x30] sm:$0xff]
    %v1482 = vld [vmem:[%s21 + $0x38] sm:$0xff]
    %v1483 = vld [vmem:[%s21 + $0x40] sm:$0xff]
    %v1484 = vld [vmem:[%s21 + $0x48] sm:$0xff]
    %v1485 = vld [vmem:[%s21 + $0x50] sm:$0xff]
    %v1486 = vld [vmem:[%s21 + $0x58] sm:$0xff]
    %v1487 = vld [vmem:[%s21 + $0x60] sm:$0xff]
    %v1488 = vld [vmem:[%s21 + $0x68] sm:$0xff]
    %v1489 = vld [vmem:[%s21 + $0x70] sm:$0xff]
    %v1490 = vld [vmem:[%s21 + $0x78] sm:$0xff]
    %1491 = vmatprep.subr.mxu0 0.0
    %1492 = vmatpush1.msra.mxu0 %v1490
    %1493 = vmatprep.subr.mxu0 0.0
    %1494 = vmatpush1.msra.mxu0 %v1489
    %1495 = vmatprep.subr.mxu0 0.0
    %1496 = vmatpush1.msra.mxu0 %v1488
    %1497 = vmatprep.subr.mxu0 0.0
    %1498 = vmatpush1.msra.mxu0 %v1487
    %1499 = vmatprep.subr.mxu0 0.0
    %1500 = vmatpush1.msra.mxu0 %v1486
    %1501 = vmatprep.subr.mxu0 0.0
    %1502 = vmatpush1.msra.mxu0 %v1485
    %1503 = vmatprep.subr.mxu0 0.0
    %1504 = vmatpush1.msra.mxu0 %v1484
    %1505 = vmatprep.subr.mxu0 0.0
    %1506 = vmatpush1.msra.mxu0 %v1483
    %1507 = vmatprep.subr.mxu0 0.0
    %1508 = vmatpush1.msra.mxu0 %v1482
    %1509 = vmatprep.subr.mxu0 0.0
    %1510 = vmatpush1.msra.mxu0 %v1481
    %1511 = vmatprep.subr.mxu0 0.0
    %1512 = vmatpush1.msra.mxu0 %v1480
    %1513 = vmatprep.subr.mxu0 0.0
    %1514 = vmatpush1.msra.mxu0 %v1479
    %1515 = vmatprep.subr.mxu0 0.0
    %1516 = vmatpush1.msra.mxu0 %v1478
    %1517 = vmatprep.subr.mxu0 0.0
    %1518 = vmatpush1.msra.mxu0 %v1477
    %1519 = vmatprep.subr.mxu0 0.0
    %1520 = vmatpush1.msra.mxu0 %v1476
    %1521 = vmatprep.subr.mxu0 0.0
    %1522 = vmatpush1.msra.mxu0 %v1475
    %1523 = vmatprep.subr.mxu0 0.0
    %1524 = vmatpush2.msra.mxu0 0.0
    %1525 = vmatprep.subr.mxu0 0.0
    %1526 = vmatpush2.msra.mxu0 0.0
    %1527 = vmatprep.subr.mxu0 0.0
    %1528 = vmatpush2.msra.mxu0 0.0
    %1529 = vmatprep.subr.mxu0 0.0
    %1530 = vmatpush2.msra.mxu0 0.0
    %1531 = vmatprep.subr.mxu0 0.0
    %1532 = vmatpush2.msra.mxu0 0.0
    %1533 = vmatprep.subr.mxu0 0.0
    %1534 = vmatpush2.msra.mxu0 0.0
    %1535 = vmatprep.subr.mxu0 0.0
    %1536 = vmatpush2.msra.mxu0 0.0
    %1537 = vmatprep.subr.mxu0 0.0
    %1538 = vmatpush2.msra.mxu0 0.0
    %1539 = vmatprep.subr.mxu0 0.0
    %1540 = vmatpush2.msra.mxu0 0.0
    %1541 = vmatprep.subr.mxu0 0.0
    %1542 = vmatpush2.msra.mxu0 0.0
    %1543 = vmatprep.subr.mxu0 0.0
    %1544 = vmatpush2.msra.mxu0 0.0
    %1545 = vmatprep.subr.mxu0 0.0
    %1546 = vmatpush2.msra.mxu0 0.0
    %1547 = vmatprep.subr.mxu0 0.0
    %1548 = vmatpush2.msra.mxu0 0.0
    %1549 = vmatprep.subr.mxu0 0.0
    %1550 = vmatpush2.msra.mxu0 0.0
    %1551 = vmatprep.subr.mxu0 0.0
    %1552 = vmatpush2.msra.mxu0 0.0
    %1553 = vmatprep.subr.mxu0 0.0
    %1554 = vmatpush2.msra.mxu0 0.0
    %1555 = vmatprep.mubr.f32.mxu0 0.0
    %1556 = vmatmul.mubr.f32.gmra.mxu0 %v1465
    %v1557 = vpop.f32.mrf.mxu0
    %v1558 = vadd.f32 0.0, %v1557
    %v1559 = vpop.f32.mrf.mxu0
    %1560 = vdwg.mxu0
    %1561 = vmatprep.subr.mxu0 0.0
    %1562 = vmatpush1.msra.mxu0 %v1490
    %1563 = vmatprep.subr.mxu0 0.0
    %1564 = vmatpush1.msra.mxu0 %v1489
    %1565 = vmatprep.subr.mxu0 0.0
    %1566 = vmatpush1.msra.mxu0 %v1488
    %1567 = vmatprep.subr.mxu0 0.0
    %1568 = vmatpush1.msra.mxu0 %v1487
    %1569 = vmatprep.subr.mxu0 0.0
    %1570 = vmatpush1.msra.mxu0 %v1486
    %1571 = vmatprep.subr.mxu0 0.0
    %1572 = vmatpush1.msra.mxu0 %v1485
    %1573 = vmatprep.subr.mxu0 0.0
    %1574 = vmatpush1.msra.mxu0 %v1484
    %1575 = vmatprep.subr.mxu0 0.0
    %1576 = vmatpush1.msra.mxu0 %v1483
    %1577 = vmatprep.subr.mxu0 0.0
    %1578 = vmatpush1.msra.mxu0 %v1482
    %1579 = vmatprep.subr.mxu0 0.0
    %1580 = vmatpush1.msra.mxu0 %v1481
    %1581 = vmatprep.subr.mxu0 0.0
    %1582 = vmatpush1.msra.mxu0 %v1480
    %1583 = vmatprep.subr.mxu0 0.0
    %1584 = vmatpush1.msra.mxu0 %v1479
    %1585 = vmatprep.subr.mxu0 0.0
    %1586 = vmatpush1.msra.mxu0 %v1478
    %1587 = vmatprep.subr.mxu0 0.0
    %1588 = vmatpush1.msra.mxu0 %v1477
    %1589 = vmatprep.subr.mxu0 0.0
    %1590 = vmatpush1.msra.mxu0 %v1476
    %1591 = vmatprep.subr.mxu0 0.0
    %1592 = vmatpush1.msra.mxu0 %v1475
    %1593 = vmatprep.subr.mxu0 0.0
    %1594 = vmatpush2.msra.mxu0 0.0
    %1595 = vmatprep.subr.mxu0 0.0
    %1596 = vmatpush2.msra.mxu0 0.0
    %1597 = vmatprep.subr.mxu0 0.0
    %1598 = vmatpush2.msra.mxu0 0.0
    %1599 = vmatprep.subr.mxu0 0.0
    %1600 = vmatpush2.msra.mxu0 0.0
    %1601 = vmatprep.subr.mxu0 0.0
    %1602 = vmatpush2.msra.mxu0 0.0
    %1603 = vmatprep.subr.mxu0 0.0
    %1604 = vmatpush2.msra.mxu0 0.0
    %1605 = vmatprep.subr.mxu0 0.0
    %1606 = vmatpush2.msra.mxu0 0.0
    %1607 = vmatprep.subr.mxu0 0.0
    %1608 = vmatpush2.msra.mxu0 0.0
    %1609 = vmatprep.subr.mxu0 0.0
    %1610 = vmatpush2.msra.mxu0 0.0
    %1611 = vmatprep.subr.mxu0 0.0
    %1612 = vmatpush2.msra.mxu0 0.0
    %1613 = vmatprep.subr.mxu0 0.0
    %1614 = vmatpush2.msra.mxu0 0.0
    %1615 = vmatprep.subr.mxu0 0.0
    %1616 = vmatpush2.msra.mxu0 0.0
    %1617 = vmatprep.subr.mxu0 0.0
    %1618 = vmatpush2.msra.mxu0 0.0
    %1619 = vmatprep.subr.mxu0 0.0
    %1620 = vmatpush2.msra.mxu0 0.0
    %1621 = vmatprep.subr.mxu0 0.0
    %1622 = vmatpush2.msra.mxu0 0.0
    %1623 = vmatprep.subr.mxu0 0.0
    %1624 = vmatpush2.msra.mxu0 0.0
    %1625 = vmatprep.mubr.f32.mxu0 0.0
    %1626 = vmatmul.mubr.f32.gmra.mxu0 %v1474
    %v1627 = vpop.f32.mrf.mxu0
    %v1628 = vadd.f32 0.0, %v1627
    %v1629 = vpop.f32.mrf.mxu0
    %1630 = vdwg.mxu0
    %v1631 = vmul.f32 %v1558, 0.0078125
    %v1632 = vmul.f32 %v1628, 0.0078125
    %v1633 = vmul.f32 %v1631, %v1631
    %v1634 = vsub.f32 %v1632, %v1633
    %v1635 = vmax.f32 %v1634, 0.0
    %v1636 = vld [vmem:[%s25] sm:$0x1]
    %v1637 = vadd.f32 %v1635, 1e-05
    %v1638 = vrsqrt.pop %v1637
    %v1639 = vmul.f32 %v1636, %v1638
    %v1640 = vld [vmem:[%s27] sm:$0x1]
    %v1641 = vmul.f32 %v1631, %v1639
    %v1642 = vsub.f32 %v1640, %v1641
    %v1643 = vld [vmem:[%s23] sm:$0xff]
    %v1644 = vld [vmem:[%s23 + $0x8] sm:$0xff]
    %vm1645 = vcmask 130048
    %v1647 = vsel %vm1645, %v1639, 0
    %1649 = vmatprep.subr.mxu0 0.0
    %1650 = vmatpush1.msra.mxu0 0.0
    %1651 = vmatprep.subr.mxu0 0.0
    %1652 = vmatpush1.msra.mxu0 0.0
    %1653 = vmatprep.subr.mxu0 0.0
    %1654 = vmatpush1.msra.mxu0 0.0
    %1655 = vmatprep.subr.mxu0 0.0
    %1656 = vmatpush1.msra.mxu0 0.0
    %1657 = vmatprep.subr.mxu0 0.0
    %1658 = vmatpush1.msra.mxu0 0.0
    %1659 = vmatprep.subr.mxu0 0.0
    %1660 = vmatpush1.msra.mxu0 0.0
    %1661 = vmatprep.subr.mxu0 0.0
    %1662 = vmatpush1.msra.mxu0 0.0
    %1663 = vmatprep.subr.mxu0 0.0
    %1664 = vmatpush1.msra.mxu0 0.0
    %1665 = vmatprep.subr.mxu0 0.0
    %1666 = vmatpush1.msra.mxu0 0.0
    %1667 = vmatprep.subr.mxu0 0.0
    %1668 = vmatpush1.msra.mxu0 0.0
    %1669 = vmatprep.subr.mxu0 0.0
    %1670 = vmatpush1.msra.mxu0 0.0
    %1671 = vmatprep.subr.mxu0 0.0
    %1672 = vmatpush1.msra.mxu0 0.0
    %1673 = vmatprep.subr.mxu0 0.0
    %1674 = vmatpush1.msra.mxu0 0.0
    %1675 = vmatprep.subr.mxu0 0.0
    %1676 = vmatpush1.msra.mxu0 0.0
    %1677 = vmatprep.subr.mxu0 0.0
    %1678 = vmatpush1.msra.mxu0 %v1644
    %1679 = vmatprep.subr.mxu0 0.0
    %1680 = vmatpush1.msra.mxu0 %v1643
    %1681 = vmatprep.subr.mxu0 0.0
    %1682 = vmatpush2.msra.mxu0 0.0
    %1683 = vmatprep.subr.mxu0 0.0
    %1684 = vmatpush2.msra.mxu0 0.0
    %1685 = vmatprep.subr.mxu0 0.0
    %1686 = vmatpush2.msra.mxu0 0.0
    %1687 = vmatprep.subr.mxu0 0.0
    %1688 = vmatpush2.msra.mxu0 0.0
    %1689 = vmatprep.subr.mxu0 0.0
    %1690 = vmatpush2.msra.mxu0 0.0
    %1691 = vmatprep.subr.mxu0 0.0
    %1692 = vmatpush2.msra.mxu0 0.0
    %1693 = vmatprep.subr.mxu0 0.0
    %1694 = vmatpush2.msra.mxu0 0.0
    %1695 = vmatprep.subr.mxu0 0.0
    %1696 = vmatpush2.msra.mxu0 0.0
    %1697 = vmatprep.subr.mxu0 0.0
    %1698 = vmatpush2.msra.mxu0 0.0
    %1699 = vmatprep.subr.mxu0 0.0
    %1700 = vmatpush2.msra.mxu0 0.0
    %1701 = vmatprep.subr.mxu0 0.0
    %1702 = vmatpush2.msra.mxu0 0.0
    %1703 = vmatprep.subr.mxu0 0.0
    %1704 = vmatpush2.msra.mxu0 0.0
    %1705 = vmatprep.subr.mxu0 0.0
    %1706 = vmatpush2.msra.mxu0 0.0
    %1707 = vmatprep.subr.mxu0 0.0
    %1708 = vmatpush2.msra.mxu0 0.0
    %1709 = vmatprep.subr.mxu0 0.0
    %1710 = vmatpush2.msra.mxu0 0.0
    %1711 = vmatprep.subr.mxu0 0.0
    %1712 = vmatpush2.msra.mxu0 0.0
    %1713 = vmatprep.mubr.f32.mxu0 0.0
    %1714 = vmatmul.mubr.f32.gmra.mxu0 %v1647
    %v1715 = vpop.f32.mrf.mxu0
    %v1716 = vadd.f32 0.0, %v1715
    %v1717 = vpop.f32.mrf.mxu0
    %1718 = vdwg.mxu0
    %v1720 = vsel %vm1645, %v1642, 0
    %1722 = vmatprep.subr.mxu0 0.0
    %1723 = vmatpush1.msra.mxu0 0.0
    %1724 = vmatprep.subr.mxu0 0.0
    %1725 = vmatpush1.msra.mxu0 0.0
    %1726 = vmatprep.subr.mxu0 0.0
    %1727 = vmatpush1.msra.mxu0 0.0
    %1728 = vmatprep.subr.mxu0 0.0
    %1729 = vmatpush1.msra.mxu0 0.0
    %1730 = vmatprep.subr.mxu0 0.0
    %1731 = vmatpush1.msra.mxu0 0.0
    %1732 = vmatprep.subr.mxu0 0.0
    %1733 = vmatpush1.msra.mxu0 0.0
    %1734 = vmatprep.subr.mxu0 0.0
    %1735 = vmatpush1.msra.mxu0 0.0
    %1736 = vmatprep.subr.mxu0 0.0
    %1737 = vmatpush1.msra.mxu0 0.0
    %1738 = vmatprep.subr.mxu0 0.0
    %1739 = vmatpush1.msra.mxu0 0.0
    %1740 = vmatprep.subr.mxu0 0.0
    %1741 = vmatpush1.msra.mxu0 0.0
    %1742 = vmatprep.subr.mxu0 0.0
    %1743 = vmatpush1.msra.mxu0 0.0
    %1744 = vmatprep.subr.mxu0 0.0
    %1745 = vmatpush1.msra.mxu0 0.0
    %1746 = vmatprep.subr.mxu0 0.0
    %1747 = vmatpush1.msra.mxu0 0.0
    %1748 = vmatprep.subr.mxu0 0.0
    %1749 = vmatpush1.msra.mxu0 0.0
    %1750 = vmatprep.subr.mxu0 0.0
    %1751 = vmatpush1.msra.mxu0 %v1644
    %1752 = vmatprep.subr.mxu0 0.0
    %1753 = vmatpush1.msra.mxu0 %v1643
    %1754 = vmatprep.subr.mxu0 0.0
    %1755 = vmatpush2.msra.mxu0 0.0
    %1756 = vmatprep.subr.mxu0 0.0
    %1757 = vmatpush2.msra.mxu0 0.0
    %1758 = vmatprep.subr.mxu0 0.0
    %1759 = vmatpush2.msra.mxu0 0.0
    %1760 = vmatprep.subr.mxu0 0.0
    %1761 = vmatpush2.msra.mxu0 0.0
    %1762 = vmatprep.subr.mxu0 0.0
    %1763 = vmatpush2.msra.mxu0 0.0
    %1764 = vmatprep.subr.mxu0 0.0
    %1765 = vmatpush2.msra.mxu0 0.0
    %1766 = vmatprep.subr.mxu0 0.0
    %1767 = vmatpush2.msra.mxu0 0.0
    %1768 = vmatprep.subr.mxu0 0.0
    %1769 = vmatpush2.msra.mxu0 0.0
    %1770 = vmatprep.subr.mxu0 0.0
    %1771 = vmatpush2.msra.mxu0 0.0
    %1772 = vmatprep.subr.mxu0 0.0
    %1773 = vmatpush2.msra.mxu0 0.0
    %1774 = vmatprep.subr.mxu0 0.0
    %1775 = vmatpush2.msra.mxu0 0.0
    %1776 = vmatprep.subr.mxu0 0.0
    %1777 = vmatpush2.msra.mxu0 0.0
    %1778 = vmatprep.subr.mxu0 0.0
    %1779 = vmatpush2.msra.mxu0 0.0
    %1780 = vmatprep.subr.mxu0 0.0
    %1781 = vmatpush2.msra.mxu0 0.0
    %1782 = vmatprep.subr.mxu0 0.0
    %1783 = vmatpush2.msra.mxu0 0.0
    %1784 = vmatprep.subr.mxu0 0.0
    %1785 = vmatpush2.msra.mxu0 0.0
    %1786 = vmatprep.mubr.f32.mxu0 0.0
    %1787 = vmatmul.mubr.f32.gmra.mxu0 %v1720
    %v1788 = vpop.f32.mrf.mxu0
    %v1789 = vadd.f32 0.0, %v1788
    %v1790 = vpop.f32.mrf.mxu0
    %1791 = vdwg.mxu0
    %v1792 = vlaneseq
    %v1793 = vshrl.u32 %v1792, 7
    %v1794 = vsub.s32 0, %v1793
    %v1795 = vrot.slane %v1716, %v1794
    %v1796 = vmul.f32 %v1453, %v1795
    %v1797 = vmul.f32 %v1456, %v1795
    %v1798 = vlaneseq
    %v1799 = vshrl.u32 %v1798, 7
    %v1800 = vsub.s32 0, %v1799
    %v1801 = vrot.slane %v1789, %v1800
    %v1802 = vadd.f32 %v1796, %v1801
    %v1803 = vadd.f32 %v1797, %v1801
    %v1804 = vmax.f32 %v1802, 0.0
    %v1805 = vmax.f32 %v1803, 0.0
    %v1806 = vpack.c.bf16 %v1805, %v1804
    %v1807 = vld [vmem:[%s29] sm:$0xf]
    %v1809 = vsel %vm1645, %v1807, 0
    %1811 = vmatprep.subr.bf16.mxu0 0
    %1812 = vmatpush1.bf16.msra.mxu0 0
    %1813 = vmatprep.subr.bf16.mxu0 0
    %1814 = vmatpush1.bf16.msra.mxu0 0
    %1815 = vmatprep.subr.bf16.mxu0 0
    %1816 = vmatpush1.bf16.msra.mxu0 0
    %1817 = vmatprep.subr.bf16.mxu0 0
    %1818 = vmatpush1.bf16.msra.mxu0 0
    %1819 = vmatprep.subr.bf16.mxu0 0
    %1820 = vmatpush1.bf16.msra.mxu0 0
    %1821 = vmatprep.subr.bf16.mxu0 0
    %1822 = vmatpush1.bf16.msra.mxu0 0
    %1823 = vmatprep.subr.bf16.mxu0 0
    %1824 = vmatpush1.bf16.msra.mxu0 0
    %1825 = vmatprep.subr.bf16.mxu0 0
    %1826 = vmatpush1.bf16.msra.mxu0 %v1806
    %1827 = vmatprep.subr.bf16.mxu0 0
    %1828 = vmatpush2.bf16.msra.mxu0 0
    %1829 = vmatprep.subr.bf16.mxu0 0
    %1830 = vmatpush2.bf16.msra.mxu0 0
    %1831 = vmatprep.subr.bf16.mxu0 0
    %1832 = vmatpush2.bf16.msra.mxu0 0
    %1833 = vmatprep.subr.bf16.mxu0 0
    %1834 = vmatpush2.bf16.msra.mxu0 0
    %1835 = vmatprep.subr.bf16.mxu0 0
    %1836 = vmatpush2.bf16.msra.mxu0 0
    %1837 = vmatprep.subr.bf16.mxu0 0
    %1838 = vmatpush2.bf16.msra.mxu0 0
    %1839 = vmatprep.subr.bf16.mxu0 0
    %1840 = vmatpush2.bf16.msra.mxu0 0
    %1841 = vmatprep.subr.bf16.mxu0 0
    %1842 = vmatpush2.bf16.msra.mxu0 0
    %1843 = vmatprep.mubr.bf16.mxu0 0
    %1844 = vmatmul.mubr.bf16.gmra.mxu0 %v1809
    %v1845 = vpop.f32.mrf.mxu0
    %v1846 = vadd.f32 0.0, %v1845
    %v1847 = vpop.f32.mrf.mxu0
    %v1848 = vpop.f32.mrf.mxu0
    %v1849 = vpop.f32.mrf.mxu0
    %1850 = vdwg.mxu0
    %v1851 = vpack.c.bf16 %v1846, %v1846
    %s1852 = scalar_lea.vmem %s29, 4
    %v1853 = vld [vmem:[%s1852] sm:$0xf]
    %v1855 = vsel %vm1645, %v1853, 0
    %1857 = vmatprep.subr.bf16.mxu0 0
    %1858 = vmatpush1.bf16.msra.mxu0 0
    %1859 = vmatprep.subr.bf16.mxu0 0
    %1860 = vmatpush1.bf16.msra.mxu0 0
    %1861 = vmatprep.subr.bf16.mxu0 0
    %1862 = vmatpush1.bf16.msra.mxu0 0
    %1863 = vmatprep.subr.bf16.mxu0 0
    %1864 = vmatpush1.bf16.msra.mxu0 0
    %1865 = vmatprep.subr.bf16.mxu0 0
    %1866 = vmatpush1.bf16.msra.mxu0 0
    %1867 = vmatprep.subr.bf16.mxu0 0
    %1868 = vmatpush1.bf16.msra.mxu0 0
    %1869 = vmatprep.subr.bf16.mxu0 0
    %1870 = vmatpush1.bf16.msra.mxu0 0
    %1871 = vmatprep.subr.bf16.mxu0 0
    %1872 = vmatpush1.bf16.msra.mxu0 %v1806
    %1873 = vmatprep.subr.bf16.mxu0 0
    %1874 = vmatpush2.bf16.msra.mxu0 0
    %1875 = vmatprep.subr.bf16.mxu0 0
    %1876 = vmatpush2.bf16.msra.mxu0 0
    %1877 = vmatprep.subr.bf16.mxu0 0
    %1878 = vmatpush2.bf16.msra.mxu0 0
    %1879 = vmatprep.subr.bf16.mxu0 0
    %1880 = vmatpush2.bf16.msra.mxu0 0
    %1881 = vmatprep.subr.bf16.mxu0 0
    %1882 = vmatpush2.bf16.msra.mxu0 0
    %1883 = vmatprep.subr.bf16.mxu0 0
    %1884 = vmatpush2.bf16.msra.mxu0 0
    %1885 = vmatprep.subr.bf16.mxu0 0
    %1886 = vmatpush2.bf16.msra.mxu0 0
    %1887 = vmatprep.subr.bf16.mxu0 0
    %1888 = vmatpush2.bf16.msra.mxu0 0
    %1889 = vmatprep.mubr.bf16.mxu0 0
    %1890 = vmatmul.mubr.bf16.gmra.mxu0 %v1855
    %v1891 = vpop.f32.mrf.mxu0
    %v1892 = vadd.f32 0.0, %v1891
    %v1893 = vpop.f32.mrf.mxu0
    %v1894 = vpop.f32.mrf.mxu0
    %v1895 = vpop.f32.mrf.mxu0
    %1896 = vdwg.mxu0
    %v1897 = vpack.c.bf16 %v1892, %v1892
    %s1898 = scalar_lea.vmem %s29, 8
    %v1899 = vld [vmem:[%s1898] sm:$0xf]
    %v1901 = vsel %vm1645, %v1899, 0
    %1903 = vmatprep.subr.bf16.mxu0 0
    %1904 = vmatpush1.bf16.msra.mxu0 0
    %1905 = vmatprep.subr.bf16.mxu0 0
    %1906 = vmatpush1.bf16.msra.mxu0 0
    %1907 = vmatprep.subr.bf16.mxu0 0
    %1908 = vmatpush1.bf16.msra.mxu0 0
    %1909 = vmatprep.subr.bf16.mxu0 0
    %1910 = vmatpush1.bf16.msra.mxu0 0
    %1911 = vmatprep.subr.bf16.mxu0 0
    %1912 = vmatpush1.bf16.msra.mxu0 0
    %1913 = vmatprep.subr.bf16.mxu0 0
    %1914 = vmatpush1.bf16.msra.mxu0 0
    %1915 = vmatprep.subr.bf16.mxu0 0
    %1916 = vmatpush1.bf16.msra.mxu0 0
    %1917 = vmatprep.subr.bf16.mxu0 0
    %1918 = vmatpush1.bf16.msra.mxu0 %v1806
    %1919 = vmatprep.subr.bf16.mxu0 0
    %1920 = vmatpush2.bf16.msra.mxu0 0
    %1921 = vmatprep.subr.bf16.mxu0 0
    %1922 = vmatpush2.bf16.msra.mxu0 0
    %1923 = vmatprep.subr.bf16.mxu0 0
    %1924 = vmatpush2.bf16.msra.mxu0 0
    %1925 = vmatprep.subr.bf16.mxu0 0
    %1926 = vmatpush2.bf16.msra.mxu0 0
    %1927 = vmatprep.subr.bf16.mxu0 0
    %1928 = vmatpush2.bf16.msra.mxu0 0
    %1929 = vmatprep.subr.bf16.mxu0 0
    %1930 = vmatpush2.bf16.msra.mxu0 0
    %1931 = vmatprep.subr.bf16.mxu0 0
    %1932 = vmatpush2.bf16.msra.mxu0 0
    %1933 = vmatprep.subr.bf16.mxu0 0
    %1934 = vmatpush2.bf16.msra.mxu0 0
    %1935 = vmatprep.mubr.bf16.mxu0 0
    %1936 = vmatmul.mubr.bf16.gmra.mxu0 %v1901
    %v1937 = vpop.f32.mrf.mxu0
    %v1938 = vadd.f32 0.0, %v1937
    %v1939 = vpop.f32.mrf.mxu0
    %v1940 = vpop.f32.mrf.mxu0
    %v1941 = vpop.f32.mrf.mxu0
    %1942 = vdwg.mxu0
    %v1943 = vpack.c.bf16 %v1938, %v1938
    %v1944 = vld [vmem:[%s31] sm:$0xf]
    %v1945 = vld [vmem:[%s31 + $0x4] sm:$0xf]
    %v1946 = vld [vmem:[%s31 + $0x8] sm:$0xf]
    %v1947 = vld [vmem:[%s31 + $0xc] sm:$0xf]
    %v1948 = vld [vmem:[%s31 + $0x10] sm:$0xf]
    %v1949 = vld [vmem:[%s31 + $0x14] sm:$0xf]
    %v1950 = vld [vmem:[%s31 + $0x18] sm:$0xf]
    %v1951 = vld [vmem:[%s31 + $0x1c] sm:$0xf]
    %v1952 = vld [vmem:[%s31 + $0x20] sm:$0xf]
    %v1953 = vld [vmem:[%s31 + $0x24] sm:$0xf]
    %v1954 = vld [vmem:[%s31 + $0x28] sm:$0xf]
    %v1955 = vld [vmem:[%s31 + $0x2c] sm:$0xf]
    %v1956 = vld [vmem:[%s31 + $0x30] sm:$0xf]
    %v1957 = vld [vmem:[%s31 + $0x34] sm:$0xf]
    %v1958 = vld [vmem:[%s31 + $0x38] sm:$0xf]
    %v1959 = vld [vmem:[%s31 + $0x3c] sm:$0xf]
    %v1960 = vld [vmem:[%s31 + $0x40] sm:$0xf]
    %v1961 = vld [vmem:[%s31 + $0x44] sm:$0xf]
    %v1962 = vld [vmem:[%s31 + $0x48] sm:$0xf]
    %v1963 = vld [vmem:[%s31 + $0x4c] sm:$0xf]
    %v1964 = vld [vmem:[%s31 + $0x50] sm:$0xf]
    %v1965 = vld [vmem:[%s31 + $0x54] sm:$0xf]
    %v1966 = vld [vmem:[%s31 + $0x58] sm:$0xf]
    %v1967 = vld [vmem:[%s31 + $0x5c] sm:$0xf]
    %v1968 = vld [vmem:[%s31 + $0x60] sm:$0xf]
    %v1969 = vld [vmem:[%s31 + $0x64] sm:$0xf]
    %v1970 = vld [vmem:[%s31 + $0x68] sm:$0xf]
    %v1971 = vld [vmem:[%s31 + $0x6c] sm:$0xf]
    %v1972 = vld [vmem:[%s31 + $0x70] sm:$0xf]
    %v1973 = vld [vmem:[%s31 + $0x74] sm:$0xf]
    %v1974 = vld [vmem:[%s31 + $0x78] sm:$0xf]
    %v1975 = vld [vmem:[%s31 + $0x7c] sm:$0xf]
    %v1976 = vld [vmem:[%s31 + $0x80] sm:$0xf]
    %v1977 = vld [vmem:[%s31 + $0x84] sm:$0xf]
    %v1978 = vld [vmem:[%s31 + $0x88] sm:$0xf]
    %v1979 = vld [vmem:[%s31 + $0x8c] sm:$0xf]
    %v1980 = vld [vmem:[%s31 + $0x90] sm:$0xf]
    %v1981 = vld [vmem:[%s31 + $0x94] sm:$0xf]
    %v1982 = vld [vmem:[%s31 + $0x98] sm:$0xf]
    %v1983 = vld [vmem:[%s31 + $0x9c] sm:$0xf]
    %v1984 = vld [vmem:[%s31 + $0xa0] sm:$0xf]
    %v1985 = vld [vmem:[%s31 + $0xa4] sm:$0xf]
    %v1986 = vld [vmem:[%s31 + $0xa8] sm:$0xf]
    %v1987 = vld [vmem:[%s31 + $0xac] sm:$0xf]
    %v1988 = vld [vmem:[%s31 + $0xb0] sm:$0xf]
    %v1989 = vld [vmem:[%s31 + $0xb4] sm:$0xf]
    %v1990 = vld [vmem:[%s31 + $0xb8] sm:$0xf]
    %v1991 = vld [vmem:[%s31 + $0xbc] sm:$0xf]
    %v2040 = vunpack.c.l.b16 %v1944
    %v2041 = vunpack.c.l.b16 %v1945
    %v2042 = vunpack.c.l.b16 %v1946
    %v2043 = vunpack.c.l.b16 %v1947
    %v2044 = vunpack.c.l.b16 %v1948
    %v2045 = vunpack.c.l.b16 %v1949
    %v2046 = vunpack.c.l.b16 %v1950
    %v2047 = vunpack.c.l.b16 %v1951
    %v2048 = vunpack.c.l.b16 %v1952
    %v2049 = vunpack.c.l.b16 %v1953
    %v2050 = vunpack.c.l.b16 %v1954
    %v2051 = vunpack.c.l.b16 %v1955
    %v2052 = vunpack.c.l.b16 %v1956
    %v2053 = vunpack.c.l.b16 %v1957
    %v2054 = vunpack.c.l.b16 %v1958
    %v2055 = vunpack.c.l.b16 %v1959
    %v2056 = vunpack.c.l.b16 %v1960
    %v2057 = vunpack.c.l.b16 %v1961
    %v2058 = vunpack.c.l.b16 %v1962
    %v2059 = vunpack.c.l.b16 %v1963
    %v2060 = vunpack.c.l.b16 %v1964
    %v2061 = vunpack.c.l.b16 %v1965
    %v2062 = vunpack.c.l.b16 %v1966
    %v2063 = vunpack.c.l.b16 %v1967
    %v2064 = vunpack.c.l.b16 %v1968
    %v2065 = vunpack.c.l.b16 %v1969
    %v2066 = vunpack.c.l.b16 %v1970
    %v2067 = vunpack.c.l.b16 %v1971
    %v2068 = vunpack.c.l.b16 %v1972
    %v2069 = vunpack.c.l.b16 %v1973
    %v2070 = vunpack.c.l.b16 %v1974
    %v2071 = vunpack.c.l.b16 %v1975
    %v2072 = vunpack.c.l.b16 %v1976
    %v2073 = vunpack.c.l.b16 %v1977
    %v2074 = vunpack.c.l.b16 %v1978
    %v2075 = vunpack.c.l.b16 %v1979
    %v2076 = vunpack.c.l.b16 %v1980
    %v2077 = vunpack.c.l.b16 %v1981
    %v2078 = vunpack.c.l.b16 %v1982
    %v2079 = vunpack.c.l.b16 %v1983
    %v2080 = vunpack.c.l.b16 %v1984
    %v2081 = vunpack.c.l.b16 %v1985
    %v2082 = vunpack.c.l.b16 %v1986
    %v2083 = vunpack.c.l.b16 %v1987
    %v2084 = vunpack.c.l.b16 %v1988
    %v2085 = vunpack.c.l.b16 %v1989
    %v2086 = vunpack.c.l.b16 %v1990
    %v2087 = vunpack.c.l.b16 %v1991
    %v2088 = vpack.c.b16 %v2041, %v2040
    %v2089 = vpack.c.b16 %v2043, %v2042
    %v2090 = vpack.c.b16 %v2045, %v2044
    %v2091 = vpack.c.b16 %v2047, %v2046
    %v2092 = vpack.c.b16 %v2049, %v2048
    %v2093 = vpack.c.b16 %v2051, %v2050
    %v2094 = vpack.c.b16 %v2053, %v2052
    %v2095 = vpack.c.b16 %v2055, %v2054
    %v2096 = vpack.c.b16 %v2057, %v2056
    %v2097 = vpack.c.b16 %v2059, %v2058
    %v2098 = vpack.c.b16 %v2061, %v2060
    %v2099 = vpack.c.b16 %v2063, %v2062
    %v2100 = vpack.c.b16 %v2065, %v2064
    %v2101 = vpack.c.b16 %v2067, %v2066
    %v2102 = vpack.c.b16 %v2069, %v2068
    %v2103 = vpack.c.b16 %v2071, %v2070
    %v2104 = vpack.c.b16 %v2073, %v2072
    %v2105 = vpack.c.b16 %v2075, %v2074
    %v2106 = vpack.c.b16 %v2077, %v2076
    %v2107 = vpack.c.b16 %v2079, %v2078
    %v2108 = vpack.c.b16 %v2081, %v2080
    %v2109 = vpack.c.b16 %v2083, %v2082
    %v2110 = vpack.c.b16 %v2085, %v2084
    %v2111 = vpack.c.b16 %v2087, %v2086
    %2136 = vmatprep.subr.bf16.mxu0 0
    %2137 = vmatpush1.bf16.msra.mxu0 %v2095
    %2138 = vmatprep.subr.bf16.mxu0 0
    %2139 = vmatpush1.bf16.msra.mxu0 %v2094
    %2140 = vmatprep.subr.bf16.mxu0 0
    %2141 = vmatpush1.bf16.msra.mxu0 %v2093
    %2142 = vmatprep.subr.bf16.mxu0 0
    %2143 = vmatpush1.bf16.msra.mxu0 %v2092
    %2144 = vmatprep.subr.bf16.mxu0 0
    %2145 = vmatpush1.bf16.msra.mxu0 %v2091
    %2146 = vmatprep.subr.bf16.mxu0 0
    %2147 = vmatpush1.bf16.msra.mxu0 %v2090
    %2148 = vmatprep.subr.bf16.mxu0 0
    %2149 = vmatpush1.bf16.msra.mxu0 %v2089
    %2150 = vmatprep.subr.bf16.mxu0 0
    %2151 = vmatpush1.bf16.msra.mxu0 %v2088
    %2152 = vmatprep.subr.bf16.mxu0 0
    %2153 = vmatpush2.bf16.msra.mxu0 %v2103
    %2154 = vmatprep.subr.bf16.mxu0 0
    %2155 = vmatpush2.bf16.msra.mxu0 %v2102
    %2156 = vmatprep.subr.bf16.mxu0 0
    %2157 = vmatpush2.bf16.msra.mxu0 %v2101
    %2158 = vmatprep.subr.bf16.mxu0 0
    %2159 = vmatpush2.bf16.msra.mxu0 %v2100
    %2160 = vmatprep.subr.bf16.mxu0 0
    %2161 = vmatpush2.bf16.msra.mxu0 %v2099
    %2162 = vmatprep.subr.bf16.mxu0 0
    %2163 = vmatpush2.bf16.msra.mxu0 %v2098
    %2164 = vmatprep.subr.bf16.mxu0 0
    %2165 = vmatpush2.bf16.msra.mxu0 %v2097
    %2166 = vmatprep.subr.bf16.mxu0 0
    %2167 = vmatpush2.bf16.msra.mxu0 %v2096
    %2168 = vmatprep.mubr.bf16.mxu0 %v1897
    %2169 = vmatmul.mubr.bf16.gmra.mxu0 %v1851
    %v2170 = vpop.f32.mrf.mxu0
    %v2171 = vadd.f32 0.0, %v2170
    %v2172 = vpop.f32.mrf.mxu0
    %v2173 = vpop.f32.mrf.mxu0
    %v2174 = vpop.f32.mrf.mxu0
    %2175 = vdwg.mxu0
    %2176 = vmatprep.subr.bf16.mxu0 0
    %2177 = vmatpush1.bf16.msra.mxu0 %v2111
    %2178 = vmatprep.subr.bf16.mxu0 0
    %2179 = vmatpush1.bf16.msra.mxu0 %v2110
    %2180 = vmatprep.subr.bf16.mxu0 0
    %2181 = vmatpush1.bf16.msra.mxu0 %v2109
    %2182 = vmatprep.subr.bf16.mxu0 0
    %2183 = vmatpush1.bf16.msra.mxu0 %v2108
    %2184 = vmatprep.subr.bf16.mxu0 0
    %2185 = vmatpush1.bf16.msra.mxu0 %v2107
    %2186 = vmatprep.subr.bf16.mxu0 0
    %2187 = vmatpush1.bf16.msra.mxu0 %v2106
    %2188 = vmatprep.subr.bf16.mxu0 0
    %2189 = vmatpush1.bf16.msra.mxu0 %v2105
    %2190 = vmatprep.subr.bf16.mxu0 0
    %2191 = vmatpush1.bf16.msra.mxu0 %v2104
    %2192 = vmatprep.subr.bf16.mxu0 0
    %2193 = vmatpush2.bf16.msra.mxu0 0
    %2194 = vmatprep.subr.bf16.mxu0 0
    %2195 = vmatpush2.bf16.msra.mxu0 0
    %2196 = vmatprep.subr.bf16.mxu0 0
    %2197 = vmatpush2.bf16.msra.mxu0 0
    %2198 = vmatprep.subr.bf16.mxu0 0
    %2199 = vmatpush2.bf16.msra.mxu0 0
    %2200 = vmatprep.subr.bf16.mxu0 0
    %2201 = vmatpush2.bf16.msra.mxu0 0
    %2202 = vmatprep.subr.bf16.mxu0 0
    %2203 = vmatpush2.bf16.msra.mxu0 0
    %2204 = vmatprep.subr.bf16.mxu0 0
    %2205 = vmatpush2.bf16.msra.mxu0 0
    %2206 = vmatprep.subr.bf16.mxu0 0
    %2207 = vmatpush2.bf16.msra.mxu0 0
    %2208 = vmatprep.mubr.bf16.mxu0 0
    %2209 = vmatmul.mubr.bf16.gmra.mxu0 %v1943
    %v2210 = vpop.f32.mrf.mxu0
    %v2211 = vadd.f32 %v2171, %v2210
    %v2212 = vpop.f32.mrf.mxu0
    %v2213 = vpop.f32.mrf.mxu0
    %v2214 = vpop.f32.mrf.mxu0
    %2215 = vdwg.mxu0
    %v2216 = vrot.slane %v2211, 4
    %v2217 = vadd.f32 %v2211, %v2216
    %v2218 = vrot.slane %v2217, 2
    %v2219 = vadd.f32 %v2217, %v2218
    %v2220 = vrot.slane %v2219, 1
    %v2221 = vadd.f32 %v2219, %v2220
    %v2222 = vmul.f32 %v2211, %v2211
    %v2223 = vrot.slane %v2222, 4
    %v2224 = vadd.f32 %v2222, %v2223
    %v2225 = vrot.slane %v2224, 2
    %v2226 = vadd.f32 %v2224, %v2225
    %v2227 = vrot.slane %v2226, 1
    %v2228 = vadd.f32 %v2226, %v2227
    %v2229 = vld [vmem:[%s33] sm:$0xff]
    %v2230 = vld [vmem:[%s33 + $0x8] sm:$0xff]
    %v2231 = vld [vmem:[%s33 + $0x10] sm:$0xff]
    %v2232 = vld [vmem:[%s33 + $0x18] sm:$0xff]
    %v2233 = vld [vmem:[%s33 + $0x20] sm:$0xff]
    %v2234 = vld [vmem:[%s33 + $0x28] sm:$0xff]
    %v2235 = vld [vmem:[%s33 + $0x30] sm:$0xff]
    %v2236 = vld [vmem:[%s33 + $0x38] sm:$0xff]
    %v2237 = vld [vmem:[%s33 + $0x40] sm:$0xff]
    %v2238 = vld [vmem:[%s33 + $0x48] sm:$0xff]
    %v2239 = vld [vmem:[%s33 + $0x50] sm:$0xff]
    %v2240 = vld [vmem:[%s33 + $0x58] sm:$0xff]
    %v2241 = vld [vmem:[%s33 + $0x60] sm:$0xff]
    %v2242 = vld [vmem:[%s33 + $0x68] sm:$0xff]
    %v2243 = vld [vmem:[%s33 + $0x70] sm:$0xff]
    %v2244 = vld [vmem:[%s33 + $0x78] sm:$0xff]
    %2245 = vmatprep.subr.mxu0 0.0
    %2246 = vmatpush1.msra.mxu0 %v2244
    %2247 = vmatprep.subr.mxu0 0.0
    %2248 = vmatpush1.msra.mxu0 %v2243
    %2249 = vmatprep.subr.mxu0 0.0
    %2250 = vmatpush1.msra.mxu0 %v2242
    %2251 = vmatprep.subr.mxu0 0.0
    %2252 = vmatpush1.msra.mxu0 %v2241
    %2253 = vmatprep.subr.mxu0 0.0
    %2254 = vmatpush1.msra.mxu0 %v2240
    %2255 = vmatprep.subr.mxu0 0.0
    %2256 = vmatpush1.msra.mxu0 %v2239
    %2257 = vmatprep.subr.mxu0 0.0
    %2258 = vmatpush1.msra.mxu0 %v2238
    %2259 = vmatprep.subr.mxu0 0.0
    %2260 = vmatpush1.msra.mxu0 %v2237
    %2261 = vmatprep.subr.mxu0 0.0
    %2262 = vmatpush1.msra.mxu0 %v2236
    %2263 = vmatprep.subr.mxu0 0.0
    %2264 = vmatpush1.msra.mxu0 %v2235
    %2265 = vmatprep.subr.mxu0 0.0
    %2266 = vmatpush1.msra.mxu0 %v2234
    %2267 = vmatprep.subr.mxu0 0.0
    %2268 = vmatpush1.msra.mxu0 %v2233
    %2269 = vmatprep.subr.mxu0 0.0
    %2270 = vmatpush1.msra.mxu0 %v2232
    %2271 = vmatprep.subr.mxu0 0.0
    %2272 = vmatpush1.msra.mxu0 %v2231
    %2273 = vmatprep.subr.mxu0 0.0
    %2274 = vmatpush1.msra.mxu0 %v2230
    %2275 = vmatprep.subr.mxu0 0.0
    %2276 = vmatpush1.msra.mxu0 %v2229
    %2277 = vmatprep.subr.mxu0 0.0
    %2278 = vmatpush2.msra.mxu0 0.0
    %2279 = vmatprep.subr.mxu0 0.0
    %2280 = vmatpush2.msra.mxu0 0.0
    %2281 = vmatprep.subr.mxu0 0.0
    %2282 = vmatpush2.msra.mxu0 0.0
    %2283 = vmatprep.subr.mxu0 0.0
    %2284 = vmatpush2.msra.mxu0 0.0
    %2285 = vmatprep.subr.mxu0 0.0
    %2286 = vmatpush2.msra.mxu0 0.0
    %2287 = vmatprep.subr.mxu0 0.0
    %2288 = vmatpush2.msra.mxu0 0.0
    %2289 = vmatprep.subr.mxu0 0.0
    %2290 = vmatpush2.msra.mxu0 0.0
    %2291 = vmatprep.subr.mxu0 0.0
    %2292 = vmatpush2.msra.mxu0 0.0
    %2293 = vmatprep.subr.mxu0 0.0
    %2294 = vmatpush2.msra.mxu0 0.0
    %2295 = vmatprep.subr.mxu0 0.0
    %2296 = vmatpush2.msra.mxu0 0.0
    %2297 = vmatprep.subr.mxu0 0.0
    %2298 = vmatpush2.msra.mxu0 0.0
    %2299 = vmatprep.subr.mxu0 0.0
    %2300 = vmatpush2.msra.mxu0 0.0
    %2301 = vmatprep.subr.mxu0 0.0
    %2302 = vmatpush2.msra.mxu0 0.0
    %2303 = vmatprep.subr.mxu0 0.0
    %2304 = vmatpush2.msra.mxu0 0.0
    %2305 = vmatprep.subr.mxu0 0.0
    %2306 = vmatpush2.msra.mxu0 0.0
    %2307 = vmatprep.subr.mxu0 0.0
    %2308 = vmatpush2.msra.mxu0 0.0
    %2309 = vmatprep.mubr.f32.mxu0 0.0
    %2310 = vmatmul.mubr.f32.gmra.mxu0 %v2221
    %v2311 = vpop.f32.mrf.mxu0
    %v2312 = vadd.f32 0.0, %v2311
    %v2313 = vpop.f32.mrf.mxu0
    %2314 = vdwg.mxu0
    %2315 = vmatprep.subr.mxu0 0.0
    %2316 = vmatpush1.msra.mxu0 %v2244
    %2317 = vmatprep.subr.mxu0 0.0
    %2318 = vmatpush1.msra.mxu0 %v2243
    %2319 = vmatprep.subr.mxu0 0.0
    %2320 = vmatpush1.msra.mxu0 %v2242
    %2321 = vmatprep.subr.mxu0 0.0
    %2322 = vmatpush1.msra.mxu0 %v2241
    %2323 = vmatprep.subr.mxu0 0.0
    %2324 = vmatpush1.msra.mxu0 %v2240
    %2325 = vmatprep.subr.mxu0 0.0
    %2326 = vmatpush1.msra.mxu0 %v2239
    %2327 = vmatprep.subr.mxu0 0.0
    %2328 = vmatpush1.msra.mxu0 %v2238
    %2329 = vmatprep.subr.mxu0 0.0
    %2330 = vmatpush1.msra.mxu0 %v2237
    %2331 = vmatprep.subr.mxu0 0.0
    %2332 = vmatpush1.msra.mxu0 %v2236
    %2333 = vmatprep.subr.mxu0 0.0
    %2334 = vmatpush1.msra.mxu0 %v2235
    %2335 = vmatprep.subr.mxu0 0.0
    %2336 = vmatpush1.msra.mxu0 %v2234
    %2337 = vmatprep.subr.mxu0 0.0
    %2338 = vmatpush1.msra.mxu0 %v2233
    %2339 = vmatprep.subr.mxu0 0.0
    %2340 = vmatpush1.msra.mxu0 %v2232
    %2341 = vmatprep.subr.mxu0 0.0
    %2342 = vmatpush1.msra.mxu0 %v2231
    %2343 = vmatprep.subr.mxu0 0.0
    %2344 = vmatpush1.msra.mxu0 %v2230
    %2345 = vmatprep.subr.mxu0 0.0
    %2346 = vmatpush1.msra.mxu0 %v2229
    %2347 = vmatprep.subr.mxu0 0.0
    %2348 = vmatpush2.msra.mxu0 0.0
    %2349 = vmatprep.subr.mxu0 0.0
    %2350 = vmatpush2.msra.mxu0 0.0
    %2351 = vmatprep.subr.mxu0 0.0
    %2352 = vmatpush2.msra.mxu0 0.0
    %2353 = vmatprep.subr.mxu0 0.0
    %2354 = vmatpush2.msra.mxu0 0.0
    %2355 = vmatprep.subr.mxu0 0.0
    %2356 = vmatpush2.msra.mxu0 0.0
    %2357 = vmatprep.subr.mxu0 0.0
    %2358 = vmatpush2.msra.mxu0 0.0
    %2359 = vmatprep.subr.mxu0 0.0
    %2360 = vmatpush2.msra.mxu0 0.0
    %2361 = vmatprep.subr.mxu0 0.0
    %2362 = vmatpush2.msra.mxu0 0.0
    %2363 = vmatprep.subr.mxu0 0.0
    %2364 = vmatpush2.msra.mxu0 0.0
    %2365 = vmatprep.subr.mxu0 0.0
    %2366 = vmatpush2.msra.mxu0 0.0
    %2367 = vmatprep.subr.mxu0 0.0
    %2368 = vmatpush2.msra.mxu0 0.0
    %2369 = vmatprep.subr.mxu0 0.0
    %2370 = vmatpush2.msra.mxu0 0.0
    %2371 = vmatprep.subr.mxu0 0.0
    %2372 = vmatpush2.msra.mxu0 0.0
    %2373 = vmatprep.subr.mxu0 0.0
    %2374 = vmatpush2.msra.mxu0 0.0
    %2375 = vmatprep.subr.mxu0 0.0
    %2376 = vmatpush2.msra.mxu0 0.0
    %2377 = vmatprep.subr.mxu0 0.0
    %2378 = vmatpush2.msra.mxu0 0.0
    %2379 = vmatprep.mubr.f32.mxu0 0.0
    %2380 = vmatmul.mubr.f32.gmra.mxu0 %v2228
    %v2381 = vpop.f32.mrf.mxu0
    %v2382 = vadd.f32 0.0, %v2381
    %v2383 = vpop.f32.mrf.mxu0
    %2384 = vdwg.mxu0
    %v2385 = vmul.f32 %v2312, 0.03125
    %v2386 = vmul.f32 %v2382, 0.03125
    %v2387 = vmul.f32 %v2385, %v2385
    %v2388 = vsub.f32 %v2386, %v2387
    %v2389 = vmax.f32 %v2388, 0.0
    %v2390 = vld [vmem:[%s37] sm:$0x1]
    %v2391 = vadd.f32 %v2389, 1e-05
    %v2392 = vrsqrt.pop %v2391
    %v2393 = vmul.f32 %v2390, %v2392
    %v2394 = vld [vmem:[%s39] sm:$0x1]
    %v2395 = vmul.f32 %v2385, %v2393
    %v2396 = vsub.f32 %v2394, %v2395
    %v2397 = vld [vmem:[%s35] sm:$0xff]
    %v2398 = vld [vmem:[%s35 + $0x8] sm:$0xff]
    %v2399 = vld [vmem:[%s35 + $0x10] sm:$0xff]
    %v2400 = vld [vmem:[%s35 + $0x18] sm:$0xff]
    %v2402 = vsel %vm1033, %v2393, 0
    %2404 = vmatprep.subr.mxu0 0.0
    %2405 = vmatpush1.msra.mxu0 0.0
    %2406 = vmatprep.subr.mxu0 0.0
    %2407 = vmatpush1.msra.mxu0 0.0
    %2408 = vmatprep.subr.mxu0 0.0
    %2409 = vmatpush1.msra.mxu0 0.0
    %2410 = vmatprep.subr.mxu0 0.0
    %2411 = vmatpush1.msra.mxu0 0.0
    %2412 = vmatprep.subr.mxu0 0.0
    %2413 = vmatpush1.msra.mxu0 0.0
    %2414 = vmatprep.subr.mxu0 0.0
    %2415 = vmatpush1.msra.mxu0 0.0
    %2416 = vmatprep.subr.mxu0 0.0
    %2417 = vmatpush1.msra.mxu0 0.0
    %2418 = vmatprep.subr.mxu0 0.0
    %2419 = vmatpush1.msra.mxu0 0.0
    %2420 = vmatprep.subr.mxu0 0.0
    %2421 = vmatpush1.msra.mxu0 0.0
    %2422 = vmatprep.subr.mxu0 0.0
    %2423 = vmatpush1.msra.mxu0 0.0
    %2424 = vmatprep.subr.mxu0 0.0
    %2425 = vmatpush1.msra.mxu0 0.0
    %2426 = vmatprep.subr.mxu0 0.0
    %2427 = vmatpush1.msra.mxu0 0.0
    %2428 = vmatprep.subr.mxu0 0.0
    %2429 = vmatpush1.msra.mxu0 %v2400
    %2430 = vmatprep.subr.mxu0 0.0
    %2431 = vmatpush1.msra.mxu0 %v2399
    %2432 = vmatprep.subr.mxu0 0.0
    %2433 = vmatpush1.msra.mxu0 %v2398
    %2434 = vmatprep.subr.mxu0 0.0
    %2435 = vmatpush1.msra.mxu0 %v2397
    %2436 = vmatprep.subr.mxu0 0.0
    %2437 = vmatpush2.msra.mxu0 0.0
    %2438 = vmatprep.subr.mxu0 0.0
    %2439 = vmatpush2.msra.mxu0 0.0
    %2440 = vmatprep.subr.mxu0 0.0
    %2441 = vmatpush2.msra.mxu0 0.0
    %2442 = vmatprep.subr.mxu0 0.0
    %2443 = vmatpush2.msra.mxu0 0.0
    %2444 = vmatprep.subr.mxu0 0.0
    %2445 = vmatpush2.msra.mxu0 0.0
    %2446 = vmatprep.subr.mxu0 0.0
    %2447 = vmatpush2.msra.mxu0 0.0
    %2448 = vmatprep.subr.mxu0 0.0
    %2449 = vmatpush2.msra.mxu0 0.0
    %2450 = vmatprep.subr.mxu0 0.0
    %2451 = vmatpush2.msra.mxu0 0.0
    %2452 = vmatprep.subr.mxu0 0.0
    %2453 = vmatpush2.msra.mxu0 0.0
    %2454 = vmatprep.subr.mxu0 0.0
    %2455 = vmatpush2.msra.mxu0 0.0
    %2456 = vmatprep.subr.mxu0 0.0
    %2457 = vmatpush2.msra.mxu0 0.0
    %2458 = vmatprep.subr.mxu0 0.0
    %2459 = vmatpush2.msra.mxu0 0.0
    %2460 = vmatprep.subr.mxu0 0.0
    %2461 = vmatpush2.msra.mxu0 0.0
    %2462 = vmatprep.subr.mxu0 0.0
    %2463 = vmatpush2.msra.mxu0 0.0
    %2464 = vmatprep.subr.mxu0 0.0
    %2465 = vmatpush2.msra.mxu0 0.0
    %2466 = vmatprep.subr.mxu0 0.0
    %2467 = vmatpush2.msra.mxu0 0.0
    %2468 = vmatprep.mubr.f32.mxu0 0.0
    %2469 = vmatmul.mubr.f32.gmra.mxu0 %v2402
    %v2470 = vpop.f32.mrf.mxu0
    %v2471 = vadd.f32 0.0, %v2470
    %v2472 = vpop.f32.mrf.mxu0
    %2473 = vdwg.mxu0
    %v2475 = vsel %vm1033, %v2396, 0
    %2477 = vmatprep.subr.mxu0 0.0
    %2478 = vmatpush1.msra.mxu0 0.0
    %2479 = vmatprep.subr.mxu0 0.0
    %2480 = vmatpush1.msra.mxu0 0.0
    %2481 = vmatprep.subr.mxu0 0.0
    %2482 = vmatpush1.msra.mxu0 0.0
    %2483 = vmatprep.subr.mxu0 0.0
    %2484 = vmatpush1.msra.mxu0 0.0
    %2485 = vmatprep.subr.mxu0 0.0
    %2486 = vmatpush1.msra.mxu0 0.0
    %2487 = vmatprep.subr.mxu0 0.0
    %2488 = vmatpush1.msra.mxu0 0.0
    %2489 = vmatprep.subr.mxu0 0.0
    %2490 = vmatpush1.msra.mxu0 0.0
    %2491 = vmatprep.subr.mxu0 0.0
    %2492 = vmatpush1.msra.mxu0 0.0
    %2493 = vmatprep.subr.mxu0 0.0
    %2494 = vmatpush1.msra.mxu0 0.0
    %2495 = vmatprep.subr.mxu0 0.0
    %2496 = vmatpush1.msra.mxu0 0.0
    %2497 = vmatprep.subr.mxu0 0.0
    %2498 = vmatpush1.msra.mxu0 0.0
    %2499 = vmatprep.subr.mxu0 0.0
    %2500 = vmatpush1.msra.mxu0 0.0
    %2501 = vmatprep.subr.mxu0 0.0
    %2502 = vmatpush1.msra.mxu0 %v2400
    %2503 = vmatprep.subr.mxu0 0.0
    %2504 = vmatpush1.msra.mxu0 %v2399
    %2505 = vmatprep.subr.mxu0 0.0
    %2506 = vmatpush1.msra.mxu0 %v2398
    %2507 = vmatprep.subr.mxu0 0.0
    %2508 = vmatpush1.msra.mxu0 %v2397
    %2509 = vmatprep.subr.mxu0 0.0
    %2510 = vmatpush2.msra.mxu0 0.0
    %2511 = vmatprep.subr.mxu0 0.0
    %2512 = vmatpush2.msra.mxu0 0.0
    %2513 = vmatprep.subr.mxu0 0.0
    %2514 = vmatpush2.msra.mxu0 0.0
    %2515 = vmatprep.subr.mxu0 0.0
    %2516 = vmatpush2.msra.mxu0 0.0
    %2517 = vmatprep.subr.mxu0 0.0
    %2518 = vmatpush2.msra.mxu0 0.0
    %2519 = vmatprep.subr.mxu0 0.0
    %2520 = vmatpush2.msra.mxu0 0.0
    %2521 = vmatprep.subr.mxu0 0.0
    %2522 = vmatpush2.msra.mxu0 0.0
    %2523 = vmatprep.subr.mxu0 0.0
    %2524 = vmatpush2.msra.mxu0 0.0
    %2525 = vmatprep.subr.mxu0 0.0
    %2526 = vmatpush2.msra.mxu0 0.0
    %2527 = vmatprep.subr.mxu0 0.0
    %2528 = vmatpush2.msra.mxu0 0.0
    %2529 = vmatprep.subr.mxu0 0.0
    %2530 = vmatpush2.msra.mxu0 0.0
    %2531 = vmatprep.subr.mxu0 0.0
    %2532 = vmatpush2.msra.mxu0 0.0
    %2533 = vmatprep.subr.mxu0 0.0
    %2534 = vmatpush2.msra.mxu0 0.0
    %2535 = vmatprep.subr.mxu0 0.0
    %2536 = vmatpush2.msra.mxu0 0.0
    %2537 = vmatprep.subr.mxu0 0.0
    %2538 = vmatpush2.msra.mxu0 0.0
    %2539 = vmatprep.subr.mxu0 0.0
    %2540 = vmatpush2.msra.mxu0 0.0
    %2541 = vmatprep.mubr.f32.mxu0 0.0
    %2542 = vmatmul.mubr.f32.gmra.mxu0 %v2475
    %v2543 = vpop.f32.mrf.mxu0
    %v2544 = vadd.f32 0.0, %v2543
    %v2545 = vpop.f32.mrf.mxu0
    %2546 = vdwg.mxu0
    %v2547 = vlaneseq
    %v2548 = vshrl.u32 %v2547, 7
    %v2549 = vsub.s32 0, %v2548
    %v2550 = vrot.slane %v2471, %v2549
    %v2551 = vmul.f32 %v2211, %v2550
    %v2552 = vlaneseq
    %v2553 = vshrl.u32 %v2552, 7
    %v2554 = vsub.s32 0, %v2553
    %v2555 = vrot.slane %v2544, %v2554
    %v2556 = vadd.f32 %v2551, %v2555
    %v2557 = vmax.f32 %v2556, 0.0
    %v2558 = vpack.c.bf16 %v2557, %v2557
    %v2559 = vld [vmem:[%s41] sm:$0x3]
    %v2561 = vsel %vm857, %v2559, 0
    %vm2563 = vcmask 1043456
    %v2565 = vsel %vm2563, %v2558, 0
    %2567 = vmatprep.subr.bf16.mxu0 0
    %2568 = vmatpush1.bf16.msra.mxu0 0
    %2569 = vmatprep.subr.bf16.mxu0 0
    %2570 = vmatpush1.bf16.msra.mxu0 0
    %2571 = vmatprep.subr.bf16.mxu0 0
    %2572 = vmatpush1.bf16.msra.mxu0 0
    %2573 = vmatprep.subr.bf16.mxu0 0
    %2574 = vmatpush1.bf16.msra.mxu0 0
    %2575 = vmatprep.subr.bf16.mxu0 0
    %2576 = vmatpush1.bf16.msra.mxu0 0
    %2577 = vmatprep.subr.bf16.mxu0 0
    %2578 = vmatpush1.bf16.msra.mxu0 0
    %2579 = vmatprep.subr.bf16.mxu0 0
    %2580 = vmatpush1.bf16.msra.mxu0 0
    %2581 = vmatprep.subr.bf16.mxu0 0
    %2582 = vmatpush1.bf16.msra.mxu0 %v2565
    %2583 = vmatprep.subr.bf16.mxu0 0
    %2584 = vmatpush2.bf16.msra.mxu0 0
    %2585 = vmatprep.subr.bf16.mxu0 0
    %2586 = vmatpush2.bf16.msra.mxu0 0
    %2587 = vmatprep.subr.bf16.mxu0 0
    %2588 = vmatpush2.bf16.msra.mxu0 0
    %2589 = vmatprep.subr.bf16.mxu0 0
    %2590 = vmatpush2.bf16.msra.mxu0 0
    %2591 = vmatprep.subr.bf16.mxu0 0
    %2592 = vmatpush2.bf16.msra.mxu0 0
    %2593 = vmatprep.subr.bf16.mxu0 0
    %2594 = vmatpush2.bf16.msra.mxu0 0
    %2595 = vmatprep.subr.bf16.mxu0 0
    %2596 = vmatpush2.bf16.msra.mxu0 0
    %2597 = vmatprep.subr.bf16.mxu0 0
    %2598 = vmatpush2.bf16.msra.mxu0 0
    %2599 = vmatprep.mubr.bf16.mxu0 0
    %2600 = vmatmul.mubr.bf16.gmra.mxu0 %v2561
    %v2601 = vpop.f32.mrf.mxu0
    %v2602 = vadd.f32 0.0, %v2601
    %v2603 = vpop.f32.mrf.mxu0
    %v2604 = vpop.f32.mrf.mxu0
    %v2605 = vpop.f32.mrf.mxu0
    %2606 = vdwg.mxu0
    %v2607 = vpack.c.bf16 %v2602, %v2602
    %s2608 = scalar_lea.vmem %s41, 2
    %v2609 = vld [vmem:[%s2608] sm:$0x3]
    %v2611 = vsel %vm857, %v2609, 0
    %2613 = vmatprep.subr.bf16.mxu0 0
    %2614 = vmatpush1.bf16.msra.mxu0 0
    %2615 = vmatprep.subr.bf16.mxu0 0
    %2616 = vmatpush1.bf16.msra.mxu0 0
    %2617 = vmatprep.subr.bf16.mxu0 0
    %2618 = vmatpush1.bf16.msra.mxu0 0
    %2619 = vmatprep.subr.bf16.mxu0 0
    %2620 = vmatpush1.bf16.msra.mxu0 0
    %2621 = vmatprep.subr.bf16.mxu0 0
    %2622 = vmatpush1.bf16.msra.mxu0 0
    %2623 = vmatprep.subr.bf16.mxu0 0
    %2624 = vmatpush1.bf16.msra.mxu0 0
    %2625 = vmatprep.subr.bf16.mxu0 0
    %2626 = vmatpush1.bf16.msra.mxu0 0
    %2627 = vmatprep.subr.bf16.mxu0 0
    %2628 = vmatpush1.bf16.msra.mxu0 %v2565
    %2629 = vmatprep.subr.bf16.mxu0 0
    %2630 = vmatpush2.bf16.msra.mxu0 0
    %2631 = vmatprep.subr.bf16.mxu0 0
    %2632 = vmatpush2.bf16.msra.mxu0 0
    %2633 = vmatprep.subr.bf16.mxu0 0
    %2634 = vmatpush2.bf16.msra.mxu0 0
    %2635 = vmatprep.subr.bf16.mxu0 0
    %2636 = vmatpush2.bf16.msra.mxu0 0
    %2637 = vmatprep.subr.bf16.mxu0 0
    %2638 = vmatpush2.bf16.msra.mxu0 0
    %2639 = vmatprep.subr.bf16.mxu0 0
    %2640 = vmatpush2.bf16.msra.mxu0 0
    %2641 = vmatprep.subr.bf16.mxu0 0
    %2642 = vmatpush2.bf16.msra.mxu0 0
    %2643 = vmatprep.subr.bf16.mxu0 0
    %2644 = vmatpush2.bf16.msra.mxu0 0
    %2645 = vmatprep.mubr.bf16.mxu0 0
    %2646 = vmatmul.mubr.bf16.gmra.mxu0 %v2611
    %v2647 = vpop.f32.mrf.mxu0
    %v2648 = vadd.f32 0.0, %v2647
    %v2649 = vpop.f32.mrf.mxu0
    %v2650 = vpop.f32.mrf.mxu0
    %v2651 = vpop.f32.mrf.mxu0
    %2652 = vdwg.mxu0
    %v2653 = vpack.c.bf16 %v2648, %v2648
    %s2654 = scalar_lea.vmem %s41, 4
    %v2655 = vld [vmem:[%s2654] sm:$0x3]
    %v2657 = vsel %vm857, %v2655, 0
    %2659 = vmatprep.subr.bf16.mxu0 0
    %2660 = vmatpush1.bf16.msra.mxu0 0
    %2661 = vmatprep.subr.bf16.mxu0 0
    %2662 = vmatpush1.bf16.msra.mxu0 0
    %2663 = vmatprep.subr.bf16.mxu0 0
    %2664 = vmatpush1.bf16.msra.mxu0 0
    %2665 = vmatprep.subr.bf16.mxu0 0
    %2666 = vmatpush1.bf16.msra.mxu0 0
    %2667 = vmatprep.subr.bf16.mxu0 0
    %2668 = vmatpush1.bf16.msra.mxu0 0
    %2669 = vmatprep.subr.bf16.mxu0 0
    %2670 = vmatpush1.bf16.msra.mxu0 0
    %2671 = vmatprep.subr.bf16.mxu0 0
    %2672 = vmatpush1.bf16.msra.mxu0 0
    %2673 = vmatprep.subr.bf16.mxu0 0
    %2674 = vmatpush1.bf16.msra.mxu0 %v2565
    %2675 = vmatprep.subr.bf16.mxu0 0
    %2676 = vmatpush2.bf16.msra.mxu0 0
    %2677 = vmatprep.subr.bf16.mxu0 0
    %2678 = vmatpush2.bf16.msra.mxu0 0
    %2679 = vmatprep.subr.bf16.mxu0 0
    %2680 = vmatpush2.bf16.msra.mxu0 0
    %2681 = vmatprep.subr.bf16.mxu0 0
    %2682 = vmatpush2.bf16.msra.mxu0 0
    %2683 = vmatprep.subr.bf16.mxu0 0
    %2684 = vmatpush2.bf16.msra.mxu0 0
    %2685 = vmatprep.subr.bf16.mxu0 0
    %2686 = vmatpush2.bf16.msra.mxu0 0
    %2687 = vmatprep.subr.bf16.mxu0 0
    %2688 = vmatpush2.bf16.msra.mxu0 0
    %2689 = vmatprep.subr.bf16.mxu0 0
    %2690 = vmatpush2.bf16.msra.mxu0 0
    %2691 = vmatprep.mubr.bf16.mxu0 0
    %2692 = vmatmul.mubr.bf16.gmra.mxu0 %v2657
    %v2693 = vpop.f32.mrf.mxu0
    %v2694 = vadd.f32 0.0, %v2693
    %v2695 = vpop.f32.mrf.mxu0
    %v2696 = vpop.f32.mrf.mxu0
    %v2697 = vpop.f32.mrf.mxu0
    %2698 = vdwg.mxu0
    %v2699 = vpack.c.bf16 %v2694, %v2694
    %v2700 = vld [vmem:[%s43] sm:$0xf]
    %v2701 = vld [vmem:[%s43 + $0x4] sm:$0xf]
    %v2702 = vld [vmem:[%s43 + $0x8] sm:$0xf]
    %v2703 = vld [vmem:[%s43 + $0xc] sm:$0xf]
    %v2704 = vld [vmem:[%s43 + $0x10] sm:$0xf]
    %v2705 = vld [vmem:[%s43 + $0x14] sm:$0xf]
    %v2706 = vld [vmem:[%s43 + $0x18] sm:$0xf]
    %v2707 = vld [vmem:[%s43 + $0x1c] sm:$0xf]
    %v2708 = vld [vmem:[%s43 + $0x20] sm:$0xf]
    %v2709 = vld [vmem:[%s43 + $0x24] sm:$0xf]
    %v2710 = vld [vmem:[%s43 + $0x28] sm:$0xf]
    %v2711 = vld [vmem:[%s43 + $0x2c] sm:$0xf]
    %v2712 = vld [vmem:[%s43 + $0x30] sm:$0xf]
    %v2713 = vld [vmem:[%s43 + $0x34] sm:$0xf]
    %v2714 = vld [vmem:[%s43 + $0x38] sm:$0xf]
    %v2715 = vld [vmem:[%s43 + $0x3c] sm:$0xf]
    %v2716 = vld [vmem:[%s43 + $0x40] sm:$0xf]
    %v2717 = vld [vmem:[%s43 + $0x44] sm:$0xf]
    %v2718 = vld [vmem:[%s43 + $0x48] sm:$0xf]
    %v2719 = vld [vmem:[%s43 + $0x4c] sm:$0xf]
    %v2720 = vld [vmem:[%s43 + $0x50] sm:$0xf]
    %v2721 = vld [vmem:[%s43 + $0x54] sm:$0xf]
    %v2722 = vld [vmem:[%s43 + $0x58] sm:$0xf]
    %v2723 = vld [vmem:[%s43 + $0x5c] sm:$0xf]
    %v2724 = vld [vmem:[%s43 + $0x60] sm:$0xf]
    %v2725 = vld [vmem:[%s43 + $0x64] sm:$0xf]
    %v2726 = vld [vmem:[%s43 + $0x68] sm:$0xf]
    %v2727 = vld [vmem:[%s43 + $0x6c] sm:$0xf]
    %v2728 = vld [vmem:[%s43 + $0x70] sm:$0xf]
    %v2729 = vld [vmem:[%s43 + $0x74] sm:$0xf]
    %v2730 = vld [vmem:[%s43 + $0x78] sm:$0xf]
    %v2731 = vld [vmem:[%s43 + $0x7c] sm:$0xf]
    %v2732 = vld [vmem:[%s43 + $0x80] sm:$0xf]
    %v2733 = vld [vmem:[%s43 + $0x84] sm:$0xf]
    %v2734 = vld [vmem:[%s43 + $0x88] sm:$0xf]
    %v2735 = vld [vmem:[%s43 + $0x8c] sm:$0xf]
    %v2736 = vld [vmem:[%s43 + $0x90] sm:$0xf]
    %v2737 = vld [vmem:[%s43 + $0x94] sm:$0xf]
    %v2738 = vld [vmem:[%s43 + $0x98] sm:$0xf]
    %v2739 = vld [vmem:[%s43 + $0x9c] sm:$0xf]
    %v2740 = vld [vmem:[%s43 + $0xa0] sm:$0xf]
    %v2741 = vld [vmem:[%s43 + $0xa4] sm:$0xf]
    %v2742 = vld [vmem:[%s43 + $0xa8] sm:$0xf]
    %v2743 = vld [vmem:[%s43 + $0xac] sm:$0xf]
    %v2744 = vld [vmem:[%s43 + $0xb0] sm:$0xf]
    %v2745 = vld [vmem:[%s43 + $0xb4] sm:$0xf]
    %v2746 = vld [vmem:[%s43 + $0xb8] sm:$0xf]
    %v2747 = vld [vmem:[%s43 + $0xbc] sm:$0xf]
    %v2796 = vunpack.c.l.b16 %v2700
    %v2797 = vunpack.c.l.b16 %v2701
    %v2798 = vunpack.c.l.b16 %v2702
    %v2799 = vunpack.c.l.b16 %v2703
    %v2800 = vunpack.c.l.b16 %v2704
    %v2801 = vunpack.c.l.b16 %v2705
    %v2802 = vunpack.c.l.b16 %v2706
    %v2803 = vunpack.c.l.b16 %v2707
    %v2804 = vunpack.c.l.b16 %v2708
    %v2805 = vunpack.c.l.b16 %v2709
    %v2806 = vunpack.c.l.b16 %v2710
    %v2807 = vunpack.c.l.b16 %v2711
    %v2808 = vunpack.c.l.b16 %v2712
    %v2809 = vunpack.c.l.b16 %v2713
    %v2810 = vunpack.c.l.b16 %v2714
    %v2811 = vunpack.c.l.b16 %v2715
    %v2812 = vunpack.c.l.b16 %v2716
    %v2813 = vunpack.c.l.b16 %v2717
    %v2814 = vunpack.c.l.b16 %v2718
    %v2815 = vunpack.c.l.b16 %v2719
    %v2816 = vunpack.c.l.b16 %v2720
    %v2817 = vunpack.c.l.b16 %v2721
    %v2818 = vunpack.c.l.b16 %v2722
    %v2819 = vunpack.c.l.b16 %v2723
    %v2820 = vunpack.c.l.b16 %v2724
    %v2821 = vunpack.c.l.b16 %v2725
    %v2822 = vunpack.c.l.b16 %v2726
    %v2823 = vunpack.c.l.b16 %v2727
    %v2824 = vunpack.c.l.b16 %v2728
    %v2825 = vunpack.c.l.b16 %v2729
    %v2826 = vunpack.c.l.b16 %v2730
    %v2827 = vunpack.c.l.b16 %v2731
    %v2828 = vunpack.c.l.b16 %v2732
    %v2829 = vunpack.c.l.b16 %v2733
    %v2830 = vunpack.c.l.b16 %v2734
    %v2831 = vunpack.c.l.b16 %v2735
    %v2832 = vunpack.c.l.b16 %v2736
    %v2833 = vunpack.c.l.b16 %v2737
    %v2834 = vunpack.c.l.b16 %v2738
    %v2835 = vunpack.c.l.b16 %v2739
    %v2836 = vunpack.c.l.b16 %v2740
    %v2837 = vunpack.c.l.b16 %v2741
    %v2838 = vunpack.c.l.b16 %v2742
    %v2839 = vunpack.c.l.b16 %v2743
    %v2840 = vunpack.c.l.b16 %v2744
    %v2841 = vunpack.c.l.b16 %v2745
    %v2842 = vunpack.c.l.b16 %v2746
    %v2843 = vunpack.c.l.b16 %v2747
    %v2844 = vpack.c.b16 %v2797, %v2796
    %v2845 = vpack.c.b16 %v2799, %v2798
    %v2846 = vpack.c.b16 %v2801, %v2800
    %v2847 = vpack.c.b16 %v2803, %v2802
    %v2848 = vpack.c.b16 %v2805, %v2804
    %v2849 = vpack.c.b16 %v2807, %v2806
    %v2850 = vpack.c.b16 %v2809, %v2808
    %v2851 = vpack.c.b16 %v2811, %v2810
    %v2852 = vpack.c.b16 %v2813, %v2812
    %v2853 = vpack.c.b16 %v2815, %v2814
    %v2854 = vpack.c.b16 %v2817, %v2816
    %v2855 = vpack.c.b16 %v2819, %v2818
    %v2856 = vpack.c.b16 %v2821, %v2820
    %v2857 = vpack.c.b16 %v2823, %v2822
    %v2858 = vpack.c.b16 %v2825, %v2824
    %v2859 = vpack.c.b16 %v2827, %v2826
    %v2860 = vpack.c.b16 %v2829, %v2828
    %v2861 = vpack.c.b16 %v2831, %v2830
    %v2862 = vpack.c.b16 %v2833, %v2832
    %v2863 = vpack.c.b16 %v2835, %v2834
    %v2864 = vpack.c.b16 %v2837, %v2836
    %v2865 = vpack.c.b16 %v2839, %v2838
    %v2866 = vpack.c.b16 %v2841, %v2840
    %v2867 = vpack.c.b16 %v2843, %v2842
    %2892 = vmatprep.subr.bf16.mxu0 0
    %2893 = vmatpush1.bf16.msra.mxu0 %v2851
    %2894 = vmatprep.subr.bf16.mxu0 0
    %2895 = vmatpush1.bf16.msra.mxu0 %v2850
    %2896 = vmatprep.subr.bf16.mxu0 0
    %2897 = vmatpush1.bf16.msra.mxu0 %v2849
    %2898 = vmatprep.subr.bf16.mxu0 0
    %2899 = vmatpush1.bf16.msra.mxu0 %v2848
    %2900 = vmatprep.subr.bf16.mxu0 0
    %2901 = vmatpush1.bf16.msra.mxu0 %v2847
    %2902 = vmatprep.subr.bf16.mxu0 0
    %2903 = vmatpush1.bf16.msra.mxu0 %v2846
    %2904 = vmatprep.subr.bf16.mxu0 0
    %2905 = vmatpush1.bf16.msra.mxu0 %v2845
    %2906 = vmatprep.subr.bf16.mxu0 0
    %2907 = vmatpush1.bf16.msra.mxu0 %v2844
    %2908 = vmatprep.subr.bf16.mxu0 0
    %2909 = vmatpush2.bf16.msra.mxu0 %v2859
    %2910 = vmatprep.subr.bf16.mxu0 0
    %2911 = vmatpush2.bf16.msra.mxu0 %v2858
    %2912 = vmatprep.subr.bf16.mxu0 0
    %2913 = vmatpush2.bf16.msra.mxu0 %v2857
    %2914 = vmatprep.subr.bf16.mxu0 0
    %2915 = vmatpush2.bf16.msra.mxu0 %v2856
    %2916 = vmatprep.subr.bf16.mxu0 0
    %2917 = vmatpush2.bf16.msra.mxu0 %v2855
    %2918 = vmatprep.subr.bf16.mxu0 0
    %2919 = vmatpush2.bf16.msra.mxu0 %v2854
    %2920 = vmatprep.subr.bf16.mxu0 0
    %2921 = vmatpush2.bf16.msra.mxu0 %v2853
    %2922 = vmatprep.subr.bf16.mxu0 0
    %2923 = vmatpush2.bf16.msra.mxu0 %v2852
    %2924 = vmatprep.mubr.bf16.mxu0 %v2653
    %2925 = vmatmul.mubr.bf16.gmra.mxu0 %v2607
    %v2926 = vpop.f32.mrf.mxu0
    %v2927 = vadd.f32 0.0, %v2926
    %v2928 = vpop.f32.mrf.mxu0
    %v2929 = vpop.f32.mrf.mxu0
    %v2930 = vpop.f32.mrf.mxu0
    %2931 = vdwg.mxu0
    %2932 = vmatprep.subr.bf16.mxu0 0
    %2933 = vmatpush1.bf16.msra.mxu0 %v2867
    %2934 = vmatprep.subr.bf16.mxu0 0
    %2935 = vmatpush1.bf16.msra.mxu0 %v2866
    %2936 = vmatprep.subr.bf16.mxu0 0
    %2937 = vmatpush1.bf16.msra.mxu0 %v2865
    %2938 = vmatprep.subr.bf16.mxu0 0
    %2939 = vmatpush1.bf16.msra.mxu0 %v2864
    %2940 = vmatprep.subr.bf16.mxu0 0
    %2941 = vmatpush1.bf16.msra.mxu0 %v2863
    %2942 = vmatprep.subr.bf16.mxu0 0
    %2943 = vmatpush1.bf16.msra.mxu0 %v2862
    %2944 = vmatprep.subr.bf16.mxu0 0
    %2945 = vmatpush1.bf16.msra.mxu0 %v2861
    %2946 = vmatprep.subr.bf16.mxu0 0
    %2947 = vmatpush1.bf16.msra.mxu0 %v2860
    %2948 = vmatprep.subr.bf16.mxu0 0
    %2949 = vmatpush2.bf16.msra.mxu0 0
    %2950 = vmatprep.subr.bf16.mxu0 0
    %2951 = vmatpush2.bf16.msra.mxu0 0
    %2952 = vmatprep.subr.bf16.mxu0 0
    %2953 = vmatpush2.bf16.msra.mxu0 0
    %2954 = vmatprep.subr.bf16.mxu0 0
    %2955 = vmatpush2.bf16.msra.mxu0 0
    %2956 = vmatprep.subr.bf16.mxu0 0
    %2957 = vmatpush2.bf16.msra.mxu0 0
    %2958 = vmatprep.subr.bf16.mxu0 0
    %2959 = vmatpush2.bf16.msra.mxu0 0
    %2960 = vmatprep.subr.bf16.mxu0 0
    %2961 = vmatpush2.bf16.msra.mxu0 0
    %2962 = vmatprep.subr.bf16.mxu0 0
    %2963 = vmatpush2.bf16.msra.mxu0 0
    %2964 = vmatprep.mubr.bf16.mxu0 0
    %2965 = vmatmul.mubr.bf16.gmra.mxu0 %v2699
    %v2966 = vpop.f32.mrf.mxu0
    %v2967 = vadd.f32 %v2927, %v2966
    %v2968 = vpop.f32.mrf.mxu0
    %v2969 = vpop.f32.mrf.mxu0
    %v2970 = vpop.f32.mrf.mxu0
    %2971 = vdwg.mxu0
    %v2972 = vsel %vm2563, %v2967, 0.0
    %v2973 = vrot.slane %v2972, 4
    %v2974 = vadd.f32 %v2972, %v2973
    %v2975 = vrot.slane %v2974, 2
    %v2976 = vadd.f32 %v2974, %v2975
    %v2977 = vrot.slane %v2976, 1
    %v2978 = vadd.f32 %v2976, %v2977
    %v2979 = vmul.f32 %v2967, %v2967
    %v2980 = vsel %vm2563, %v2979, 0.0
    %v2981 = vrot.slane %v2980, 4
    %v2982 = vadd.f32 %v2980, %v2981
    %v2983 = vrot.slane %v2982, 2
    %v2984 = vadd.f32 %v2982, %v2983
    %v2985 = vrot.slane %v2984, 1
    %v2986 = vadd.f32 %v2984, %v2985
    %v2987 = vld [vmem:[%s45] sm:$0xff]
    %v2988 = vld [vmem:[%s45 + $0x8] sm:$0xff]
    %v2989 = vld [vmem:[%s45 + $0x10] sm:$0xff]
    %v2990 = vld [vmem:[%s45 + $0x18] sm:$0xff]
    %v2991 = vld [vmem:[%s45 + $0x20] sm:$0xff]
    %v2992 = vld [vmem:[%s45 + $0x28] sm:$0xff]
    %v2993 = vld [vmem:[%s45 + $0x30] sm:$0xff]
    %v2994 = vld [vmem:[%s45 + $0x38] sm:$0xff]
    %v2995 = vld [vmem:[%s45 + $0x40] sm:$0xff]
    %v2996 = vld [vmem:[%s45 + $0x48] sm:$0xff]
    %v2997 = vld [vmem:[%s45 + $0x50] sm:$0xff]
    %v2998 = vld [vmem:[%s45 + $0x58] sm:$0xff]
    %v2999 = vld [vmem:[%s45 + $0x60] sm:$0xff]
    %v3000 = vld [vmem:[%s45 + $0x68] sm:$0xff]
    %v3001 = vld [vmem:[%s45 + $0x70] sm:$0xff]
    %v3002 = vld [vmem:[%s45 + $0x78] sm:$0xff]
    %3003 = vmatprep.subr.mxu0 0.0
    %3004 = vmatpush1.msra.mxu0 %v3002
    %3005 = vmatprep.subr.mxu0 0.0
    %3006 = vmatpush1.msra.mxu0 %v3001
    %3007 = vmatprep.subr.mxu0 0.0
    %3008 = vmatpush1.msra.mxu0 %v3000
    %3009 = vmatprep.subr.mxu0 0.0
    %3010 = vmatpush1.msra.mxu0 %v2999
    %3011 = vmatprep.subr.mxu0 0.0
    %3012 = vmatpush1.msra.mxu0 %v2998
    %3013 = vmatprep.subr.mxu0 0.0
    %3014 = vmatpush1.msra.mxu0 %v2997
    %3015 = vmatprep.subr.mxu0 0.0
    %3016 = vmatpush1.msra.mxu0 %v2996
    %3017 = vmatprep.subr.mxu0 0.0
    %3018 = vmatpush1.msra.mxu0 %v2995
    %3019 = vmatprep.subr.mxu0 0.0
    %3020 = vmatpush1.msra.mxu0 %v2994
    %3021 = vmatprep.subr.mxu0 0.0
    %3022 = vmatpush1.msra.mxu0 %v2993
    %3023 = vmatprep.subr.mxu0 0.0
    %3024 = vmatpush1.msra.mxu0 %v2992
    %3025 = vmatprep.subr.mxu0 0.0
    %3026 = vmatpush1.msra.mxu0 %v2991
    %3027 = vmatprep.subr.mxu0 0.0
    %3028 = vmatpush1.msra.mxu0 %v2990
    %3029 = vmatprep.subr.mxu0 0.0
    %3030 = vmatpush1.msra.mxu0 %v2989
    %3031 = vmatprep.subr.mxu0 0.0
    %3032 = vmatpush1.msra.mxu0 %v2988
    %3033 = vmatprep.subr.mxu0 0.0
    %3034 = vmatpush1.msra.mxu0 %v2987
    %3035 = vmatprep.subr.mxu0 0.0
    %3036 = vmatpush2.msra.mxu0 0.0
    %3037 = vmatprep.subr.mxu0 0.0
    %3038 = vmatpush2.msra.mxu0 0.0
    %3039 = vmatprep.subr.mxu0 0.0
    %3040 = vmatpush2.msra.mxu0 0.0
    %3041 = vmatprep.subr.mxu0 0.0
    %3042 = vmatpush2.msra.mxu0 0.0
    %3043 = vmatprep.subr.mxu0 0.0
    %3044 = vmatpush2.msra.mxu0 0.0
    %3045 = vmatprep.subr.mxu0 0.0
    %3046 = vmatpush2.msra.mxu0 0.0
    %3047 = vmatprep.subr.mxu0 0.0
    %3048 = vmatpush2.msra.mxu0 0.0
    %3049 = vmatprep.subr.mxu0 0.0
    %3050 = vmatpush2.msra.mxu0 0.0
    %3051 = vmatprep.subr.mxu0 0.0
    %3052 = vmatpush2.msra.mxu0 0.0
    %3053 = vmatprep.subr.mxu0 0.0
    %3054 = vmatpush2.msra.mxu0 0.0
    %3055 = vmatprep.subr.mxu0 0.0
    %3056 = vmatpush2.msra.mxu0 0.0
    %3057 = vmatprep.subr.mxu0 0.0
    %3058 = vmatpush2.msra.mxu0 0.0
    %3059 = vmatprep.subr.mxu0 0.0
    %3060 = vmatpush2.msra.mxu0 0.0
    %3061 = vmatprep.subr.mxu0 0.0
    %3062 = vmatpush2.msra.mxu0 0.0
    %3063 = vmatprep.subr.mxu0 0.0
    %3064 = vmatpush2.msra.mxu0 0.0
    %3065 = vmatprep.subr.mxu0 0.0
    %3066 = vmatpush2.msra.mxu0 0.0
    %3067 = vmatprep.mubr.f32.mxu0 0.0
    %3068 = vmatmul.mubr.f32.gmra.mxu0 %v2978
    %v3069 = vpop.f32.mrf.mxu0
    %v3070 = vadd.f32 0.0, %v3069
    %v3071 = vpop.f32.mrf.mxu0
    %3072 = vdwg.mxu0
    %3073 = vmatprep.subr.mxu0 0.0
    %3074 = vmatpush1.msra.mxu0 %v3002
    %3075 = vmatprep.subr.mxu0 0.0
    %3076 = vmatpush1.msra.mxu0 %v3001
    %3077 = vmatprep.subr.mxu0 0.0
    %3078 = vmatpush1.msra.mxu0 %v3000
    %3079 = vmatprep.subr.mxu0 0.0
    %3080 = vmatpush1.msra.mxu0 %v2999
    %3081 = vmatprep.subr.mxu0 0.0
    %3082 = vmatpush1.msra.mxu0 %v2998
    %3083 = vmatprep.subr.mxu0 0.0
    %3084 = vmatpush1.msra.mxu0 %v2997
    %3085 = vmatprep.subr.mxu0 0.0
    %3086 = vmatpush1.msra.mxu0 %v2996
    %3087 = vmatprep.subr.mxu0 0.0
    %3088 = vmatpush1.msra.mxu0 %v2995
    %3089 = vmatprep.subr.mxu0 0.0
    %3090 = vmatpush1.msra.mxu0 %v2994
    %3091 = vmatprep.subr.mxu0 0.0
    %3092 = vmatpush1.msra.mxu0 %v2993
    %3093 = vmatprep.subr.mxu0 0.0
    %3094 = vmatpush1.msra.mxu0 %v2992
    %3095 = vmatprep.subr.mxu0 0.0
    %3096 = vmatpush1.msra.mxu0 %v2991
    %3097 = vmatprep.subr.mxu0 0.0
    %3098 = vmatpush1.msra.mxu0 %v2990
    %3099 = vmatprep.subr.mxu0 0.0
    %3100 = vmatpush1.msra.mxu0 %v2989
    %3101 = vmatprep.subr.mxu0 0.0
    %3102 = vmatpush1.msra.mxu0 %v2988
    %3103 = vmatprep.subr.mxu0 0.0
    %3104 = vmatpush1.msra.mxu0 %v2987
    %3105 = vmatprep.subr.mxu0 0.0
    %3106 = vmatpush2.msra.mxu0 0.0
    %3107 = vmatprep.subr.mxu0 0.0
    %3108 = vmatpush2.msra.mxu0 0.0
    %3109 = vmatprep.subr.mxu0 0.0
    %3110 = vmatpush2.msra.mxu0 0.0
    %3111 = vmatprep.subr.mxu0 0.0
    %3112 = vmatpush2.msra.mxu0 0.0
    %3113 = vmatprep.subr.mxu0 0.0
    %3114 = vmatpush2.msra.mxu0 0.0
    %3115 = vmatprep.subr.mxu0 0.0
    %3116 = vmatpush2.msra.mxu0 0.0
    %3117 = vmatprep.subr.mxu0 0.0
    %3118 = vmatpush2.msra.mxu0 0.0
    %3119 = vmatprep.subr.mxu0 0.0
    %3120 = vmatpush2.msra.mxu0 0.0
    %3121 = vmatprep.subr.mxu0 0.0
    %3122 = vmatpush2.msra.mxu0 0.0
    %3123 = vmatprep.subr.mxu0 0.0
    %3124 = vmatpush2.msra.mxu0 0.0
    %3125 = vmatprep.subr.mxu0 0.0
    %3126 = vmatpush2.msra.mxu0 0.0
    %3127 = vmatprep.subr.mxu0 0.0
    %3128 = vmatpush2.msra.mxu0 0.0
    %3129 = vmatprep.subr.mxu0 0.0
    %3130 = vmatpush2.msra.mxu0 0.0
    %3131 = vmatprep.subr.mxu0 0.0
    %3132 = vmatpush2.msra.mxu0 0.0
    %3133 = vmatprep.subr.mxu0 0.0
    %3134 = vmatpush2.msra.mxu0 0.0
    %3135 = vmatprep.subr.mxu0 0.0
    %3136 = vmatpush2.msra.mxu0 0.0
    %3137 = vmatprep.mubr.f32.mxu0 0.0
    %3138 = vmatmul.mubr.f32.gmra.mxu0 %v2986
    %v3139 = vpop.f32.mrf.mxu0
    %v3140 = vadd.f32 0.0, %v3139
    %v3141 = vpop.f32.mrf.mxu0
    %3142 = vdwg.mxu0
    %v3143 = vmul.f32 %v3070, 0.125
    %v3144 = vmul.f32 %v3140, 0.125
    %v3145 = vmul.f32 %v3143, %v3143
    %v3146 = vsub.f32 %v3144, %v3145
    %v3147 = vmax.f32 %v3146, 0.0
    %v3148 = vld [vmem:[%s49] sm:$0x1]
    %v3149 = vadd.f32 %v3147, 1e-05
    %v3150 = vrsqrt.pop %v3149
    %v3151 = vmul.f32 %v3148, %v3150
    %v3152 = vld [vmem:[%s51] sm:$0x1]
    %v3153 = vmul.f32 %v3143, %v3151
    %v3154 = vsub.f32 %v3152, %v3153
    %v3155 = vld [vmem:[%s47] sm:$0xff]
    %v3156 = vld [vmem:[%s47 + $0x8] sm:$0xff]
    %v3157 = vld [vmem:[%s47 + $0x10] sm:$0xff]
    %v3158 = vld [vmem:[%s47 + $0x18] sm:$0xff]
    %v3159 = vld [vmem:[%s47 + $0x20] sm:$0xff]
    %v3160 = vld [vmem:[%s47 + $0x28] sm:$0xff]
    %v3161 = vld [vmem:[%s47 + $0x30] sm:$0xff]
    %v3162 = vld [vmem:[%s47 + $0x38] sm:$0xff]
    %v3164 = vsel %vm174, %v3151, 0
    %3166 = vmatprep.subr.mxu0 0.0
    %3167 = vmatpush1.msra.mxu0 0.0
    %3168 = vmatprep.subr.mxu0 0.0
    %3169 = vmatpush1.msra.mxu0 0.0
    %3170 = vmatprep.subr.mxu0 0.0
    %3171 = vmatpush1.msra.mxu0 0.0
    %3172 = vmatprep.subr.mxu0 0.0
    %3173 = vmatpush1.msra.mxu0 0.0
    %3174 = vmatprep.subr.mxu0 0.0
    %3175 = vmatpush1.msra.mxu0 0.0
    %3176 = vmatprep.subr.mxu0 0.0
    %3177 = vmatpush1.msra.mxu0 0.0
    %3178 = vmatprep.subr.mxu0 0.0
    %3179 = vmatpush1.msra.mxu0 0.0
    %3180 = vmatprep.subr.mxu0 0.0
    %3181 = vmatpush1.msra.mxu0 0.0
    %3182 = vmatprep.subr.mxu0 0.0
    %3183 = vmatpush1.msra.mxu0 %v3162
    %3184 = vmatprep.subr.mxu0 0.0
    %3185 = vmatpush1.msra.mxu0 %v3161
    %3186 = vmatprep.subr.mxu0 0.0
    %3187 = vmatpush1.msra.mxu0 %v3160
    %3188 = vmatprep.subr.mxu0 0.0
    %3189 = vmatpush1.msra.mxu0 %v3159
    %3190 = vmatprep.subr.mxu0 0.0
    %3191 = vmatpush1.msra.mxu0 %v3158
    %3192 = vmatprep.subr.mxu0 0.0
    %3193 = vmatpush1.msra.mxu0 %v3157
    %3194 = vmatprep.subr.mxu0 0.0
    %3195 = vmatpush1.msra.mxu0 %v3156
    %3196 = vmatprep.subr.mxu0 0.0
    %3197 = vmatpush1.msra.mxu0 %v3155
    %3198 = vmatprep.subr.mxu0 0.0
    %3199 = vmatpush2.msra.mxu0 0.0
    %3200 = vmatprep.subr.mxu0 0.0
    %3201 = vmatpush2.msra.mxu0 0.0
    %3202 = vmatprep.subr.mxu0 0.0
    %3203 = vmatpush2.msra.mxu0 0.0
    %3204 = vmatprep.subr.mxu0 0.0
    %3205 = vmatpush2.msra.mxu0 0.0
    %3206 = vmatprep.subr.mxu0 0.0
    %3207 = vmatpush2.msra.mxu0 0.0
    %3208 = vmatprep.subr.mxu0 0.0
    %3209 = vmatpush2.msra.mxu0 0.0
    %3210 = vmatprep.subr.mxu0 0.0
    %3211 = vmatpush2.msra.mxu0 0.0
    %3212 = vmatprep.subr.mxu0 0.0
    %3213 = vmatpush2.msra.mxu0 0.0
    %3214 = vmatprep.subr.mxu0 0.0
    %3215 = vmatpush2.msra.mxu0 0.0
    %3216 = vmatprep.subr.mxu0 0.0
    %3217 = vmatpush2.msra.mxu0 0.0
    %3218 = vmatprep.subr.mxu0 0.0
    %3219 = vmatpush2.msra.mxu0 0.0
    %3220 = vmatprep.subr.mxu0 0.0
    %3221 = vmatpush2.msra.mxu0 0.0
    %3222 = vmatprep.subr.mxu0 0.0
    %3223 = vmatpush2.msra.mxu0 0.0
    %3224 = vmatprep.subr.mxu0 0.0
    %3225 = vmatpush2.msra.mxu0 0.0
    %3226 = vmatprep.subr.mxu0 0.0
    %3227 = vmatpush2.msra.mxu0 0.0
    %3228 = vmatprep.subr.mxu0 0.0
    %3229 = vmatpush2.msra.mxu0 0.0
    %3230 = vmatprep.mubr.f32.mxu0 0.0
    %3231 = vmatmul.mubr.f32.gmra.mxu0 %v3164
    %v3232 = vpop.f32.mrf.mxu0
    %v3233 = vadd.f32 0.0, %v3232
    %v3234 = vpop.f32.mrf.mxu0
    %3235 = vdwg.mxu0
    %v3237 = vsel %vm174, %v3154, 0
    %3239 = vmatprep.subr.mxu0 0.0
    %3240 = vmatpush1.msra.mxu0 0.0
    %3241 = vmatprep.subr.mxu0 0.0
    %3242 = vmatpush1.msra.mxu0 0.0
    %3243 = vmatprep.subr.mxu0 0.0
    %3244 = vmatpush1.msra.mxu0 0.0
    %3245 = vmatprep.subr.mxu0 0.0
    %3246 = vmatpush1.msra.mxu0 0.0
    %3247 = vmatprep.subr.mxu0 0.0
    %3248 = vmatpush1.msra.mxu0 0.0
    %3249 = vmatprep.subr.mxu0 0.0
    %3250 = vmatpush1.msra.mxu0 0.0
    %3251 = vmatprep.subr.mxu0 0.0
    %3252 = vmatpush1.msra.mxu0 0.0
    %3253 = vmatprep.subr.mxu0 0.0
    %3254 = vmatpush1.msra.mxu0 0.0
    %3255 = vmatprep.subr.mxu0 0.0
    %3256 = vmatpush1.msra.mxu0 %v3162
    %3257 = vmatprep.subr.mxu0 0.0
    %3258 = vmatpush1.msra.mxu0 %v3161
    %3259 = vmatprep.subr.mxu0 0.0
    %3260 = vmatpush1.msra.mxu0 %v3160
    %3261 = vmatprep.subr.mxu0 0.0
    %3262 = vmatpush1.msra.mxu0 %v3159
    %3263 = vmatprep.subr.mxu0 0.0
    %3264 = vmatpush1.msra.mxu0 %v3158
    %3265 = vmatprep.subr.mxu0 0.0
    %3266 = vmatpush1.msra.mxu0 %v3157
    %3267 = vmatprep.subr.mxu0 0.0
    %3268 = vmatpush1.msra.mxu0 %v3156
    %3269 = vmatprep.subr.mxu0 0.0
    %3270 = vmatpush1.msra.mxu0 %v3155
    %3271 = vmatprep.subr.mxu0 0.0
    %3272 = vmatpush2.msra.mxu0 0.0
    %3273 = vmatprep.subr.mxu0 0.0
    %3274 = vmatpush2.msra.mxu0 0.0
    %3275 = vmatprep.subr.mxu0 0.0
    %3276 = vmatpush2.msra.mxu0 0.0
    %3277 = vmatprep.subr.mxu0 0.0
    %3278 = vmatpush2.msra.mxu0 0.0
    %3279 = vmatprep.subr.mxu0 0.0
    %3280 = vmatpush2.msra.mxu0 0.0
    %3281 = vmatprep.subr.mxu0 0.0
    %3282 = vmatpush2.msra.mxu0 0.0
    %3283 = vmatprep.subr.mxu0 0.0
    %3284 = vmatpush2.msra.mxu0 0.0
    %3285 = vmatprep.subr.mxu0 0.0
    %3286 = vmatpush2.msra.mxu0 0.0
    %3287 = vmatprep.subr.mxu0 0.0
    %3288 = vmatpush2.msra.mxu0 0.0
    %3289 = vmatprep.subr.mxu0 0.0
    %3290 = vmatpush2.msra.mxu0 0.0
    %3291 = vmatprep.subr.mxu0 0.0
    %3292 = vmatpush2.msra.mxu0 0.0
    %3293 = vmatprep.subr.mxu0 0.0
    %3294 = vmatpush2.msra.mxu0 0.0
    %3295 = vmatprep.subr.mxu0 0.0
    %3296 = vmatpush2.msra.mxu0 0.0
    %3297 = vmatprep.subr.mxu0 0.0
    %3298 = vmatpush2.msra.mxu0 0.0
    %3299 = vmatprep.subr.mxu0 0.0
    %3300 = vmatpush2.msra.mxu0 0.0
    %3301 = vmatprep.subr.mxu0 0.0
    %3302 = vmatpush2.msra.mxu0 0.0
    %3303 = vmatprep.mubr.f32.mxu0 0.0
    %3304 = vmatmul.mubr.f32.gmra.mxu0 %v3237
    %v3305 = vpop.f32.mrf.mxu0
    %v3306 = vadd.f32 0.0, %v3305
    %v3307 = vpop.f32.mrf.mxu0
    %3308 = vdwg.mxu0
    %v3309 = vlaneseq
    %v3310 = vshrl.u32 %v3309, 7
    %v3311 = vsub.s32 0, %v3310
    %v3312 = vrot.slane %v3233, %v3311
    %v3313 = vmul.f32 %v2967, %v3312
    %v3314 = vlaneseq
    %v3315 = vshrl.u32 %v3314, 7
    %v3316 = vsub.s32 0, %v3315
    %v3317 = vrot.slane %v3306, %v3316
    %v3318 = vadd.f32 %v3313, %v3317
    %v3319 = vmax.f32 %v3318, 0.0
    %v3320 = vpack.c.bf16 %v3319, %v3319
    %v3321 = vld [vmem:[%s53] sm:$0x1]
    %vm3322 = vcmask 31744
    %v3324 = vsel %vm3322, %v3321, 0
    %vm3326 = vcmask 1041408
    %v3328 = vsel %vm3326, %v3320, 0
    %3330 = vmatprep.subr.bf16.mxu0 0
    %3331 = vmatpush1.bf16.msra.mxu0 0
    %3332 = vmatprep.subr.bf16.mxu0 0
    %3333 = vmatpush1.bf16.msra.mxu0 0
    %3334 = vmatprep.subr.bf16.mxu0 0
    %3335 = vmatpush1.bf16.msra.mxu0 0
    %3336 = vmatprep.subr.bf16.mxu0 0
    %3337 = vmatpush1.bf16.msra.mxu0 0
    %3338 = vmatprep.subr.bf16.mxu0 0
    %3339 = vmatpush1.bf16.msra.mxu0 0
    %3340 = vmatprep.subr.bf16.mxu0 0
    %3341 = vmatpush1.bf16.msra.mxu0 0
    %3342 = vmatprep.subr.bf16.mxu0 0
    %3343 = vmatpush1.bf16.msra.mxu0 0
    %3344 = vmatprep.subr.bf16.mxu0 0
    %3345 = vmatpush1.bf16.msra.mxu0 %v3328
    %3346 = vmatprep.subr.bf16.mxu0 0
    %3347 = vmatpush2.bf16.msra.mxu0 0
    %3348 = vmatprep.subr.bf16.mxu0 0
    %3349 = vmatpush2.bf16.msra.mxu0 0
    %3350 = vmatprep.subr.bf16.mxu0 0
    %3351 = vmatpush2.bf16.msra.mxu0 0
    %3352 = vmatprep.subr.bf16.mxu0 0
    %3353 = vmatpush2.bf16.msra.mxu0 0
    %3354 = vmatprep.subr.bf16.mxu0 0
    %3355 = vmatpush2.bf16.msra.mxu0 0
    %3356 = vmatprep.subr.bf16.mxu0 0
    %3357 = vmatpush2.bf16.msra.mxu0 0
    %3358 = vmatprep.subr.bf16.mxu0 0
    %3359 = vmatpush2.bf16.msra.mxu0 0
    %3360 = vmatprep.subr.bf16.mxu0 0
    %3361 = vmatpush2.bf16.msra.mxu0 0
    %3362 = vmatprep.mubr.bf16.mxu0 0
    %3363 = vmatmul.mubr.bf16.gmra.mxu0 %v3324
    %v3364 = vpop.f32.mrf.mxu0
    %v3365 = vadd.f32 0.0, %v3364
    %v3366 = vpop.f32.mrf.mxu0
    %v3367 = vpop.f32.mrf.mxu0
    %v3368 = vpop.f32.mrf.mxu0
    %3369 = vdwg.mxu0
    %v3370 = vpack.c.bf16 %v3365, %v3365
    %v3371 = vld [vmem:[%s55] sm:$0xf]
    %v3372 = vld [vmem:[%s55 + $0x4] sm:$0xf]
    %v3373 = vld [vmem:[%s55 + $0x8] sm:$0xf]
    %v3374 = vld [vmem:[%s55 + $0xc] sm:$0xf]
    %v3375 = vld [vmem:[%s55 + $0x10] sm:$0xf]
    %v3376 = vld [vmem:[%s55 + $0x14] sm:$0xf]
    %v3377 = vld [vmem:[%s55 + $0x18] sm:$0xf]
    %v3378 = vld [vmem:[%s55 + $0x1c] sm:$0xf]
    %v3379 = vld [vmem:[%s55 + $0x20] sm:$0xf]
    %v3380 = vld [vmem:[%s55 + $0x24] sm:$0xf]
    %v3381 = vld [vmem:[%s55 + $0x28] sm:$0xf]
    %v3382 = vld [vmem:[%s55 + $0x2c] sm:$0xf]
    %v3383 = vld [vmem:[%s55 + $0x30] sm:$0xf]
    %v3384 = vld [vmem:[%s55 + $0x34] sm:$0xf]
    %v3385 = vld [vmem:[%s55 + $0x38] sm:$0xf]
    %v3386 = vld [vmem:[%s55 + $0x3c] sm:$0xf]
    %s3387 = scalar_lea.vmem %s53, 1
    %v3388 = vld [vmem:[%s3387] sm:$0x1]
    %v3390 = vsel %vm3322, %v3388, 0
    %3392 = vmatprep.subr.bf16.mxu0 0
    %3393 = vmatpush1.bf16.msra.mxu0 0
    %3394 = vmatprep.subr.bf16.mxu0 0
    %3395 = vmatpush1.bf16.msra.mxu0 0
    %3396 = vmatprep.subr.bf16.mxu0 0
    %3397 = vmatpush1.bf16.msra.mxu0 0
    %3398 = vmatprep.subr.bf16.mxu0 0
    %3399 = vmatpush1.bf16.msra.mxu0 0
    %3400 = vmatprep.subr.bf16.mxu0 0
    %3401 = vmatpush1.bf16.msra.mxu0 0
    %3402 = vmatprep.subr.bf16.mxu0 0
    %3403 = vmatpush1.bf16.msra.mxu0 0
    %3404 = vmatprep.subr.bf16.mxu0 0
    %3405 = vmatpush1.bf16.msra.mxu0 0
    %3406 = vmatprep.subr.bf16.mxu0 0
    %3407 = vmatpush1.bf16.msra.mxu0 %v3328
    %3408 = vmatprep.subr.bf16.mxu0 0
    %3409 = vmatpush2.bf16.msra.mxu0 0
    %3410 = vmatprep.subr.bf16.mxu0 0
    %3411 = vmatpush2.bf16.msra.mxu0 0
    %3412 = vmatprep.subr.bf16.mxu0 0
    %3413 = vmatpush2.bf16.msra.mxu0 0
    %3414 = vmatprep.subr.bf16.mxu0 0
    %3415 = vmatpush2.bf16.msra.mxu0 0
    %3416 = vmatprep.subr.bf16.mxu0 0
    %3417 = vmatpush2.bf16.msra.mxu0 0
    %3418 = vmatprep.subr.bf16.mxu0 0
    %3419 = vmatpush2.bf16.msra.mxu0 0
    %3420 = vmatprep.subr.bf16.mxu0 0
    %3421 = vmatpush2.bf16.msra.mxu0 0
    %3422 = vmatprep.subr.bf16.mxu0 0
    %3423 = vmatpush2.bf16.msra.mxu0 0
    %3424 = vmatprep.mubr.bf16.mxu0 0
    %3425 = vmatmul.mubr.bf16.gmra.mxu0 %v3390
    %v3426 = vpop.f32.mrf.mxu0
    %v3427 = vadd.f32 0.0, %v3426
    %v3428 = vpop.f32.mrf.mxu0
    %v3429 = vpop.f32.mrf.mxu0
    %v3430 = vpop.f32.mrf.mxu0
    %3431 = vdwg.mxu0
    %v3432 = vpack.c.bf16 %v3427, %v3427
    %s3433 = scalar_lea.vmem %s55, 64
    %v3434 = vld [vmem:[%s3433] sm:$0xf]
    %v3435 = vld [vmem:[%s3433 + $0x4] sm:$0xf]
    %v3436 = vld [vmem:[%s3433 + $0x8] sm:$0xf]
    %v3437 = vld [vmem:[%s3433 + $0xc] sm:$0xf]
    %v3438 = vld [vmem:[%s3433 + $0x10] sm:$0xf]
    %v3439 = vld [vmem:[%s3433 + $0x14] sm:$0xf]
    %v3440 = vld [vmem:[%s3433 + $0x18] sm:$0xf]
    %v3441 = vld [vmem:[%s3433 + $0x1c] sm:$0xf]
    %v3442 = vld [vmem:[%s3433 + $0x20] sm:$0xf]
    %v3443 = vld [vmem:[%s3433 + $0x24] sm:$0xf]
    %v3444 = vld [vmem:[%s3433 + $0x28] sm:$0xf]
    %v3445 = vld [vmem:[%s3433 + $0x2c] sm:$0xf]
    %v3446 = vld [vmem:[%s3433 + $0x30] sm:$0xf]
    %v3447 = vld [vmem:[%s3433 + $0x34] sm:$0xf]
    %v3448 = vld [vmem:[%s3433 + $0x38] sm:$0xf]
    %v3449 = vld [vmem:[%s3433 + $0x3c] sm:$0xf]
    %v3466 = vunpack.c.l.b16 %v3434
    %v3467 = vunpack.c.l.b16 %v3435
    %v3468 = vunpack.c.l.b16 %v3436
    %v3469 = vunpack.c.l.b16 %v3437
    %v3470 = vunpack.c.l.b16 %v3438
    %v3471 = vunpack.c.l.b16 %v3439
    %v3472 = vunpack.c.l.b16 %v3440
    %v3473 = vunpack.c.l.b16 %v3441
    %v3474 = vunpack.c.l.b16 %v3442
    %v3475 = vunpack.c.l.b16 %v3443
    %v3476 = vunpack.c.l.b16 %v3444
    %v3477 = vunpack.c.l.b16 %v3445
    %v3478 = vunpack.c.l.b16 %v3446
    %v3479 = vunpack.c.l.b16 %v3447
    %v3480 = vunpack.c.l.b16 %v3448
    %v3481 = vunpack.c.l.b16 %v3449
    %v3482 = vpack.c.b16 %v3467, %v3466
    %v3483 = vpack.c.b16 %v3469, %v3468
    %v3484 = vpack.c.b16 %v3471, %v3470
    %v3485 = vpack.c.b16 %v3473, %v3472
    %v3486 = vpack.c.b16 %v3475, %v3474
    %v3487 = vpack.c.b16 %v3477, %v3476
    %v3488 = vpack.c.b16 %v3479, %v3478
    %v3489 = vpack.c.b16 %v3481, %v3480
    %3498 = vmatprep.subr.bf16.mxu0 0
    %3499 = vmatpush1.bf16.msra.mxu0 %v3489
    %3500 = vmatprep.subr.bf16.mxu0 0
    %3501 = vmatpush1.bf16.msra.mxu0 %v3488
    %3502 = vmatprep.subr.bf16.mxu0 0
    %3503 = vmatpush1.bf16.msra.mxu0 %v3487
    %3504 = vmatprep.subr.bf16.mxu0 0
    %3505 = vmatpush1.bf16.msra.mxu0 %v3486
    %3506 = vmatprep.subr.bf16.mxu0 0
    %3507 = vmatpush1.bf16.msra.mxu0 %v3485
    %3508 = vmatprep.subr.bf16.mxu0 0
    %3509 = vmatpush1.bf16.msra.mxu0 %v3484
    %3510 = vmatprep.subr.bf16.mxu0 0
    %3511 = vmatpush1.bf16.msra.mxu0 %v3483
    %3512 = vmatprep.subr.bf16.mxu0 0
    %3513 = vmatpush1.bf16.msra.mxu0 %v3482
    %3514 = vmatprep.subr.bf16.mxu0 0
    %3515 = vmatpush2.bf16.msra.mxu0 0
    %3516 = vmatprep.subr.bf16.mxu0 0
    %3517 = vmatpush2.bf16.msra.mxu0 0
    %3518 = vmatprep.subr.bf16.mxu0 0
    %3519 = vmatpush2.bf16.msra.mxu0 0
    %3520 = vmatprep.subr.bf16.mxu0 0
    %3521 = vmatpush2.bf16.msra.mxu0 0
    %3522 = vmatprep.subr.bf16.mxu0 0
    %3523 = vmatpush2.bf16.msra.mxu0 0
    %3524 = vmatprep.subr.bf16.mxu0 0
    %3525 = vmatpush2.bf16.msra.mxu0 0
    %3526 = vmatprep.subr.bf16.mxu0 0
    %3527 = vmatpush2.bf16.msra.mxu0 0
    %3528 = vmatprep.subr.bf16.mxu0 0
    %3529 = vmatpush2.bf16.msra.mxu0 0
    %3530 = vmatprep.mubr.bf16.mxu0 0
    %3531 = vmatmul.mubr.bf16.gmra.mxu0 %v3432
    %v3532 = vpop.f32.mrf.mxu0
    %v3533 = vadd.f32 0.0, %v3532
    %v3534 = vpop.f32.mrf.mxu0
    %v3535 = vpop.f32.mrf.mxu0
    %v3536 = vpop.f32.mrf.mxu0
    %3537 = vdwg.mxu0
    %v3554 = vunpack.c.l.b16 %v3371
    %v3555 = vunpack.c.l.b16 %v3372
    %v3556 = vunpack.c.l.b16 %v3373
    %v3557 = vunpack.c.l.b16 %v3374
    %v3558 = vunpack.c.l.b16 %v3375
    %v3559 = vunpack.c.l.b16 %v3376
    %v3560 = vunpack.c.l.b16 %v3377
    %v3561 = vunpack.c.l.b16 %v3378
    %v3562 = vunpack.c.l.b16 %v3379
    %v3563 = vunpack.c.l.b16 %v3380
    %v3564 = vunpack.c.l.b16 %v3381
    %v3565 = vunpack.c.l.b16 %v3382
    %v3566 = vunpack.c.l.b16 %v3383
    %v3567 = vunpack.c.l.b16 %v3384
    %v3568 = vunpack.c.l.b16 %v3385
    %v3569 = vunpack.c.l.b16 %v3386
    %v3570 = vpack.c.b16 %v3555, %v3554
    %v3571 = vpack.c.b16 %v3557, %v3556
    %v3572 = vpack.c.b16 %v3559, %v3558
    %v3573 = vpack.c.b16 %v3561, %v3560
    %v3574 = vpack.c.b16 %v3563, %v3562
    %v3575 = vpack.c.b16 %v3565, %v3564
    %v3576 = vpack.c.b16 %v3567, %v3566
    %v3577 = vpack.c.b16 %v3569, %v3568
    %3586 = vmatprep.subr.bf16.mxu0 0
    %3587 = vmatpush1.bf16.msra.mxu0 %v3577
    %3588 = vmatprep.subr.bf16.mxu0 0
    %3589 = vmatpush1.bf16.msra.mxu0 %v3576
    %3590 = vmatprep.subr.bf16.mxu0 0
    %3591 = vmatpush1.bf16.msra.mxu0 %v3575
    %3592 = vmatprep.subr.bf16.mxu0 0
    %3593 = vmatpush1.bf16.msra.mxu0 %v3574
    %3594 = vmatprep.subr.bf16.mxu0 0
    %3595 = vmatpush1.bf16.msra.mxu0 %v3573
    %3596 = vmatprep.subr.bf16.mxu0 0
    %3597 = vmatpush1.bf16.msra.mxu0 %v3572
    %3598 = vmatprep.subr.bf16.mxu0 0
    %3599 = vmatpush1.bf16.msra.mxu0 %v3571
    %3600 = vmatprep.subr.bf16.mxu0 0
    %3601 = vmatpush1.bf16.msra.mxu0 %v3570
    %3602 = vmatprep.subr.bf16.mxu0 0
    %3603 = vmatpush2.bf16.msra.mxu0 0
    %3604 = vmatprep.subr.bf16.mxu0 0
    %3605 = vmatpush2.bf16.msra.mxu0 0
    %3606 = vmatprep.subr.bf16.mxu0 0
    %3607 = vmatpush2.bf16.msra.mxu0 0
    %3608 = vmatprep.subr.bf16.mxu0 0
    %3609 = vmatpush2.bf16.msra.mxu0 0
    %3610 = vmatprep.subr.bf16.mxu0 0
    %3611 = vmatpush2.bf16.msra.mxu0 0
    %3612 = vmatprep.subr.bf16.mxu0 0
    %3613 = vmatpush2.bf16.msra.mxu0 0
    %3614 = vmatprep.subr.bf16.mxu0 0
    %3615 = vmatpush2.bf16.msra.mxu0 0
    %3616 = vmatprep.subr.bf16.mxu0 0
    %3617 = vmatpush2.bf16.msra.mxu0 0
    %3618 = vmatprep.mubr.bf16.mxu0 0
    %3619 = vmatmul.mubr.bf16.gmra.mxu0 %v3370
    %v3620 = vpop.f32.mrf.mxu0
    %v3621 = vadd.f32 %v3533, %v3620
    %v3622 = vpop.f32.mrf.mxu0
    %v3623 = vpop.f32.mrf.mxu0
    %v3624 = vpop.f32.mrf.mxu0
    %3625 = vdwg.mxu0
    %v3626 = vld [vmem:[%s3] sm:$0x3]
    %v3627 = vpack.c.bf16 %v3626, %v3626
    %v3628 = vld [vmem:[%s57] sm:$0xf]
    %v3629 = vld [vmem:[%s57 + $0x4] sm:$0xf]
    %v3630 = vld [vmem:[%s57 + $0x8] sm:$0x3]
    %v3634 = vunpack.c.l.b16 %v3628
    %v3635 = vunpack.c.l.b16 %v3629
    %v3636 = vunpack.c.l.b16 %v3630
    %v3637 = vpack.c.b16 %v3635, %v3634
    %v3638 = vpack.c.b16 %v3636, %v3636
    %vm3640 = vcmask 154624
    %v3642 = vsel %vm3640, %v3627, 0
    %vm3644 = vcmask 1040384
    %v3645 = vsel %vm3644, 4294967295, 65535
    %v3646 = vsel %vm3326, %v3645, 0
    %v3648 = vand.u32 %v3638, %v3646
    %3650 = vmatprep.subr.bf16.mxu0 0
    %3651 = vmatpush1.bf16.msra.mxu0 0
    %3652 = vmatprep.subr.bf16.mxu0 0
    %3653 = vmatpush1.bf16.msra.mxu0 0
    %3654 = vmatprep.subr.bf16.mxu0 0
    %3655 = vmatpush1.bf16.msra.mxu0 0
    %3656 = vmatprep.subr.bf16.mxu0 0
    %3657 = vmatpush1.bf16.msra.mxu0 0
    %3658 = vmatprep.subr.bf16.mxu0 0
    %3659 = vmatpush1.bf16.msra.mxu0 0
    %3660 = vmatprep.subr.bf16.mxu0 0
    %3661 = vmatpush1.bf16.msra.mxu0 0
    %3662 = vmatprep.subr.bf16.mxu0 0
    %3663 = vmatpush1.bf16.msra.mxu0 %v3648
    %3664 = vmatprep.subr.bf16.mxu0 0
    %3665 = vmatpush1.bf16.msra.mxu0 %v3637
    %3666 = vmatprep.subr.bf16.mxu0 0
    %3667 = vmatpush2.bf16.msra.mxu0 0
    %3668 = vmatprep.subr.bf16.mxu0 0
    %3669 = vmatpush2.bf16.msra.mxu0 0
    %3670 = vmatprep.subr.bf16.mxu0 0
    %3671 = vmatpush2.bf16.msra.mxu0 0
    %3672 = vmatprep.subr.bf16.mxu0 0
    %3673 = vmatpush2.bf16.msra.mxu0 0
    %3674 = vmatprep.subr.bf16.mxu0 0
    %3675 = vmatpush2.bf16.msra.mxu0 0
    %3676 = vmatprep.subr.bf16.mxu0 0
    %3677 = vmatpush2.bf16.msra.mxu0 0
    %3678 = vmatprep.subr.bf16.mxu0 0
    %3679 = vmatpush2.bf16.msra.mxu0 0
    %3680 = vmatprep.subr.bf16.mxu0 0
    %3681 = vmatpush2.bf16.msra.mxu0 0
    %3682 = vmatprep.mubr.bf16.mxu0 0
    %3683 = vmatmul.mubr.bf16.gmra.mxu0 %v3642
    %v3684 = vpop.f32.mrf.mxu0
    %v3685 = vadd.f32 0.0, %v3684
    %v3686 = vpop.f32.mrf.mxu0
    %v3687 = vpop.f32.mrf.mxu0
    %v3688 = vpop.f32.mrf.mxu0
    %3689 = vdwg.mxu0
    %v3690 = vadd.f32 %v3621, %v3685
    %v3691 = vld [vmem:[%s59] sm:$0x1]
    %v3693 = vlaneseq
    %v3694 = vshrl.u32 %v3693, 7
    %v3695 = vsub.s32 0, %v3694
    %v3696 = vrot.slane %v3691, %v3695
    %v3698 = vadd.f32 %v3690, %v3696
    %vm3699 = vcmask 82944
    %3700 = vst.msk [vmem:[#allocation2] sm:$0x3] %vm3699, %v3698
    // Predicated region
    $region122: #{forward.1} parent=1 // pred_check
      _
    $region123: #{forward.1} parent=1 // pred_check_branch
      %3702 = sbr.rel (0) target = $region125
    $region124: #{forward.1} parent=1 // pred_region
      %s3704 = ssub.s32 32, 32
      %3705 = vsyncadd [#allocation3], %s3704
      %s3707 = sshll.u32 [#allocation2], 4
      %s3708 = int_to_ptr.vmem [resolvable:$true] %s3707
      %3710 = dma.vmem_to_hbm [thread:$0]  %s3708, 32, %s61, [#allocation3]
    $region125: #{forward.1} parent=1 // pred_fallthru
      _
    // Predicated region
    $region126: #{forward.1} parent=1 // pred_check
      _
    $region127: #{forward.1} parent=1 // pred_check_branch
      %3712 = sbr.rel (0) target = $region129
    $region128: #{forward.1} parent=1 // pred_region
      %3713 = dma.done [#allocation3], 32
    $region129: #{forward.1} parent=1 // pred_fallthru
      _
    %3714 = vsyncpa [#allocation3], 1

</llo_original>
